<compile_context>
chip_gen: v7x
topology: tpu7x:2x2x1
jax: 0.10.0
libtpu: 0.0.40
codegen_flags: <defaults>
</compile_context>

<pallas_src>
import jax
import jax.numpy as jnp
import numpy as np
from jax.experimental import pallas as pl
from jax.experimental.pallas import tpu as pltpu


# ----------------------------- Pallas kernel --------------------------------

def _make_seq2seq_kernel(T_src, T_tgt, Bb, H, Vp):
    """Fused encoder + decoder + fc_out kernel for one batch block of Bb rows."""

    def kernel(x_src_ref, x_tgt_ref,
               enc_wx_ref, enc_wh_ref, enc_b_ref,
               dec_wx_ref, dec_wh_ref, dec_b_ref,
               fc_w_hbm_ref, fc_b_ref,
               logits_ref,
               fc_w_vmem, fc_sem, h_all_ref):
        # ---- (1) Kick off the fc_out weight HBM->VMEM DMA immediately; it is only
        #          needed after the recurrence, so it rides for free under it.
        fc_cp = pltpu.make_async_copy(fc_w_hbm_ref, fc_w_vmem, fc_sem)
        fc_cp.start()

        # ---- (2) Hoisted input projections (time-independent): one bf16 MXU matmul
        #          per LSTM with f32 accumulation; fused (b_ih + b_hh) bias folded in
        #          so the recurrence only does h @ Wh + xg[t].
        xg_src = (jnp.dot(x_src_ref[...], enc_wx_ref[...],
                          preferred_element_type=jnp.float32)
                  + enc_b_ref[...]).reshape(Bb, T_src, 4 * H)
        xg_tgt = (jnp.dot(x_tgt_ref[...], dec_wx_ref[...],
                          preferred_element_type=jnp.float32)
                  + dec_b_ref[...]).reshape(Bb, T_tgt, 4 * H)

        enc_wh = enc_wh_ref[...]   # (H, 4H) bf16, resident in vregs/VMEM
        dec_wh = dec_wh_ref[...]

        def cell(xg_t, h, c, wh):
            # PyTorch gate order: i, f, g, o.  Only the MXU operands are bf16; the
            # gate elementwise math stays f32 (v5e has no bf16 VPU/EUP).
            gates = xg_t + jnp.dot(h.astype(jnp.bfloat16), wh,
                                   preferred_element_type=jnp.float32)
            # Two full-width EUP calls over the whole (Bb, 4H) slab, then lane-slice.
            sig = jax.nn.sigmoid(gates)
            th = jnp.tanh(gates)
            i = sig[:, 0:H]
            f = sig[:, H:2 * H]
            g = th[:, 2 * H:3 * H]
            o = sig[:, 3 * H:4 * H]
            c_new = f * c + i * g
            h_new = o * jnp.tanh(c_new)
            return h_new, c_new

        # ---- (3) Encoder: zero-initialized state, recurrence kept entirely in vregs.
        h = jnp.zeros((Bb, H), jnp.float32)
        c = jnp.zeros((Bb, H), jnp.float32)
        for t in range(T_src):                       # static unroll (T is small)
            h, c = cell(xg_src[:, t, :], h, c, enc_wh)

        # ---- (4) Decoder: stream hidden states into a VMEM scratch slab (no concat).
        for t in range(T_tgt):
            h, c = cell(xg_tgt[:, t, :], h, c, dec_wh)
            h_all_ref[:, t, :] = h

        # ---- (5) fc_out: wait for the weight DMA only now, then one batched matmul
        #          and a single lane-dense (last dim Vp = multiple of 128) store.
        fc_cp.wait()
        lhs = h_all_ref[...].reshape(Bb * T_tgt, H).astype(jnp.bfloat16)
        logits = (jnp.dot(lhs, fc_w_vmem[...], preferred_element_type=jnp.float32)
                  + fc_b_ref[...])
        logits_ref[...] = logits                     # (Bb*T_tgt, Vp), b-major rows

    return kernel


# ------------------------------ Wrapper --------------------------------------

def pack_params(p, vocab_size):
    """One-time param packing: bf16 MXU operands, fc padded to a lane-dense Vp."""
    H = p["enc_wh"].shape[0]
    Vp = ((vocab_size + 127) // 128) * 128
    fc_w = jnp.zeros((H, Vp), jnp.float32).at[:, :vocab_size].set(p["fc_wx"])
    fc_b = jnp.zeros((1, Vp), jnp.float32).at[:, :vocab_size].set(p["fc_b"])
    return {
        "emb": p["emb"],                               # f32; gather stays in JAX glue
        "enc_wx": p["enc_wx"].astype(jnp.bfloat16),
        "enc_wh": p["enc_wh"].astype(jnp.bfloat16),
        "enc_b": p["enc_b"],                           # f32 (VPU add)
        "dec_wx": p["dec_wx"].astype(jnp.bfloat16),
        "dec_wh": p["dec_wh"].astype(jnp.bfloat16),
        "dec_b": p["dec_b"],
        "fc_wx": fc_w.astype(jnp.bfloat16),            # (H, Vp)
        "fc_b": fc_b,                                  # (1, Vp)
        "vocab": vocab_size,
    }


def seq2seq_forward(src, tgt, pk):
    B, T_src = src.shape
    _, T_tgt = tgt.shape
    E = pk["emb"].shape[1]
    H = pk["enc_wh"].shape[0]
    Vp = pk["fc_wx"].shape[1]
    V = pk["vocab"]

    # Embedding gather stays in JAX glue; batch-major layout means NO f32 transpose:
    # row b*T + t of the 2D slab is (batch b, timestep t).
    x_src = jnp.take(pk["emb"], src, axis=0).astype(jnp.bfloat16).reshape(B * T_src, E)
    x_tgt = jnp.take(pk["emb"], tgt, axis=0).astype(jnp.bfloat16).reshape(B * T_tgt, E)

    # v7x megacore: split the batch across the 2 TensorCores (serial loop of 2 on
    # single-TC v5e/v6e — negligible). Fall back to a single block if it would break
    # the (8,128) block constraint.
    nb = 2 if (B % 2 == 0 and ((B // 2) * T_src) % 8 == 0
               and ((B // 2) * T_tgt) % 8 == 0) else 1
    Bb = B // nb

    w_spec = lambda shape: pl.BlockSpec(shape, lambda i: (0, 0))

    logits_flat = pl.pallas_call(
        _make_seq2seq_kernel(T_src, T_tgt, Bb, H, Vp),
        out_shape=jax.ShapeDtypeStruct((B * T_tgt, Vp), jnp.float32),
        grid=(nb,),
        in_specs=[
            pl.BlockSpec((Bb * T_src, E), lambda i: (i, 0)),
            pl.BlockSpec((Bb * T_tgt, E), lambda i: (i, 0)),
            w_spec((E, 4 * H)), w_spec((H, 4 * H)), w_spec((1, 4 * H)),
            w_spec((E, 4 * H)), w_spec((H, 4 * H)), w_spec((1, 4 * H)),
            pl.BlockSpec(memory_space=pl.ANY),     # fc_w: stays in HBM, DMA'd manually
            w_spec((1, Vp)),
        ],
        out_specs=pl.BlockSpec((Bb * T_tgt, Vp), lambda i: (i, 0)),
        scratch_shapes=[
            pltpu.VMEM((H, Vp), jnp.bfloat16),     # fc_w landing buffer
            pltpu.SemaphoreType.DMA(()),           # fc_w DMA completion sem
            pltpu.VMEM((Bb, T_tgt, H), jnp.float32),  # decoder hidden slab
        ],
        compiler_params=pltpu.CompilerParams(dimension_semantics=("parallel",)),
    )(x_src, x_tgt,
      pk["enc_wx"], pk["enc_wh"], pk["enc_b"],
      pk["dec_wx"], pk["dec_wh"], pk["dec_b"],
      pk["fc_wx"], pk["fc_b"])

    # Rows are b-major (b*T_tgt + t): reshape straight to (B, T_tgt, Vp), drop padding.
    return logits_flat.reshape(B, T_tgt, Vp)[:, :, :V]


# ------------------------------ Reference -----------------------------------

def _lstm_ref(x_tbe, wx, wh, b, h0, c0, H):
    def step(carry, x):
        h, c = carry
        gates = x @ wx + h @ wh + b
        i = jax.nn.sigmoid(gates[:, 0:H])
        f = jax.nn.sigmoid(gates[:, H:2 * H])
        g = jnp.tanh(gates[:, 2 * H:3 * H])
        o = jax.nn.sigmoid(gates[:, 3 * H:4 * H])
        c_new = f * c + i * g
        h_new = o * jnp.tanh(c_new)
        return (h_new, c_new), h_new
    (h, c), hs = jax.lax.scan(step, (h0, c0), x_tbe)
    return hs, h, c


def seq2seq_ref(src, tgt, params, H):
    emb = params["emb"]
    x_src = jnp.transpose(jnp.take(emb, src, axis=0), (1, 0, 2))   # (T, B, E)
    x_tgt = jnp.transpose(jnp.take(emb, tgt, axis=0), (1, 0, 2))
    B = src.shape[0]
    z = jnp.zeros((B, H), jnp.float32)
    _, h, c = _lstm_ref(x_src, params["enc_wx"], params["enc_wh"], params["enc_b"], z, z, H)
    hs, _, _ = _lstm_ref(x_tgt, params["dec_wx"], params["dec_wh"], params["dec_b"], h, c, H)
    logits = hs @ params["fc_wx"] + params["fc_b"]                 # (T, B, V)
    return jnp.transpose(logits, (1, 0, 2))


# --------------------------------- Main --------------------------------------

if __name__ == "__main__":
    V, E, H = 64, 32, 32             # vocab, embed_dim, hidden_dim (4H = 128 lanes)
    B, S_src, S_tgt = 8, 8, 8        # B=8 fills the f32 sublanes of h/c/gates
    pad_idx = 0

    key = jax.random.PRNGKey(0)
    ks = jax.random.split(key, 12)
    scale = 1.0 / np.sqrt(H)

    def u(k, shape):
        return jax.random.uniform(k, shape, jnp.float32, -scale, scale)

    emb = jax.random.normal(ks[0], (V, E), jnp.float32)
    # padding_idx row zeroed (nn.Embedding init semantics; forward-only — gradient
    # masking of padding_idx is not represented here).
    emb = emb.at[pad_idx].set(0.0)

    # PyTorch LSTM weights: W_ih (4H, E), W_hh (4H, H), biases (4H,).
    # Pre-transpose to (E, 4H)/(H, 4H) and fold b_ih + b_hh into one (1, 4H) bias.
    enc_wih, enc_whh = u(ks[1], (4 * H, E)), u(ks[2], (4 * H, H))
    enc_bih, enc_bhh = u(ks[3], (4 * H,)), u(ks[4], (4 * H,))
    dec_wih, dec_whh = u(ks[5], (4 * H, E)), u(ks[6], (4 * H, H))
    dec_bih, dec_bhh = u(ks[7], (4 * H,)), u(ks[8], (4 * H,))
    fc_w, fc_b = u(ks[9], (V, H)), u(ks[10], (V,))

    params = {
        "emb": emb,
        "enc_wx": enc_wih.T, "enc_wh": enc_whh.T,
        "enc_b": (enc_bih + enc_bhh).reshape(1, 4 * H),
        "dec_wx": dec_wih.T, "dec_wh": dec_whh.T,
        "dec_b": (dec_bih + dec_bhh).reshape(1, 4 * H),
        "fc_wx": fc_w.T, "fc_b": fc_b.reshape(1, V),
    }
    packed = pack_params(params, V)

    src = jax.random.randint(ks[11], (B, S_src), 0, V, dtype=jnp.int32)
    tgt = jax.random.randint(jax.random.PRNGKey(1), (B, S_tgt), 0, V, dtype=jnp.int32)

    logits = seq2seq_forward(src, tgt, packed)
    jax.block_until_ready(logits)
    assert logits.shape == (B, S_tgt, V), logits.shape

    # Kernel uses bf16 MXU operands with f32 accumulation; tolerance reflects that
    # (the f32 reference itself runs at TPU default matmul precision).
    ref = seq2seq_ref(src, tgt, params, H)
    np.testing.assert_allclose(np.asarray(logits), np.asarray(ref), rtol=2e-2, atol=2.5e-2)

    print("KERNEL_OK")
</pallas_src>

<mosaic_0001>
module attributes {stable_mosaic.version = 11 : i64} {
  func.func @kernel(%arg0: i32, %arg1: memref<32x32xbf16, #tpu.memory_space<vmem>>, %arg2: memref<32x32xbf16, #tpu.memory_space<vmem>>, %arg3: memref<32x128xbf16, #tpu.memory_space<vmem>>, %arg4: memref<32x128xbf16, #tpu.memory_space<vmem>>, %arg5: memref<1x128xf32, #tpu.memory_space<vmem>>, %arg6: memref<32x128xbf16, #tpu.memory_space<vmem>>, %arg7: memref<32x128xbf16, #tpu.memory_space<vmem>>, %arg8: memref<1x128xf32, #tpu.memory_space<vmem>>, %arg9: memref<32x128xbf16, #tpu.memory_space<any>>, %arg10: memref<1x128xf32, #tpu.memory_space<vmem>>, %arg11: memref<32x128xf32, #tpu.memory_space<vmem>>, %arg12: memref<32x128xbf16, #tpu.memory_space<vmem>>, %arg13: memref<!tpu.dma_semaphore, #tpu.memory_space<semaphore_mem>>, %arg14: memref<4x8x32xf32, #tpu.memory_space<vmem>>) attributes {dimension_semantics = [#tpu.dimension_semantics<parallel>], iteration_bounds = array<i64: 2>, scalar_prefetch = 0 : i64, scratch_operands = 3 : i64, tpu.core_type = #tpu.core_type<tc>, window_params = [{transform_indices = @transform_0, window_bounds = array<i64: 32, 32>}, {transform_indices = @transform_1, window_bounds = array<i64: 32, 32>}, {pipeline_mode = #tpu.pipeline_mode<synchronous>, transform_indices = @transform_2, window_bounds = array<i64: 32, 128>}, {pipeline_mode = #tpu.pipeline_mode<synchronous>, transform_indices = @transform_3, window_bounds = array<i64: 32, 128>}, {pipeline_mode = #tpu.pipeline_mode<synchronous>, transform_indices = @transform_4, window_bounds = array<i64: 1, 128>}, {pipeline_mode = #tpu.pipeline_mode<synchronous>, transform_indices = @transform_5, window_bounds = array<i64: 32, 128>}, {pipeline_mode = #tpu.pipeline_mode<synchronous>, transform_indices = @transform_6, window_bounds = array<i64: 32, 128>}, {pipeline_mode = #tpu.pipeline_mode<synchronous>, transform_indices = @transform_7, window_bounds = array<i64: 1, 128>}, {}, {pipeline_mode = #tpu.pipeline_mode<synchronous>, transform_indices = @transform_9, window_bounds = array<i64: 1, 128>}, {transform_indices = @transform_10, window_bounds = array<i64: 32, 128>}]} {
    tpu.enqueue_dma source(%arg9 : memref<32x128xbf16, #tpu.memory_space<any>>) target(%arg12 : memref<32x128xbf16, #tpu.memory_space<vmem>>) target_semaphore(%arg13 : memref<!tpu.dma_semaphore, #tpu.memory_space<semaphore_mem>>)
    %c0 = arith.constant 0 : index
    %c0_0 = arith.constant 0 : index
    %0 = vector.load %arg1[%c0, %c0_0] : memref<32x32xbf16, #tpu.memory_space<vmem>>, vector<32x32xbf16>
    %c0_1 = arith.constant 0 : index
    %c0_2 = arith.constant 0 : index
    %1 = vector.load %arg3[%c0_1, %c0_2] : memref<32x128xbf16, #tpu.memory_space<vmem>>, vector<32x128xbf16>
    %cst = arith.constant dense<0.000000e+00> : vector<32x128xf32>
    %2 = tpu.matmul %0, %1, %cst {dimension_numbers = #tpu.dot_dimension_numbers<[1], [0], [0], [1], [0, 0, 1, 1], [], []>} : vector<32x32xbf16>, vector<32x128xbf16>, vector<32x128xf32> -> vector<32x128xf32>
    %c0_3 = arith.constant 0 : index
    %c0_4 = arith.constant 0 : index
    %3 = vector.load %arg5[%c0_3, %c0_4] : memref<1x128xf32, #tpu.memory_space<vmem>>, vector<1x128xf32>
    %4 = vector.broadcast %3 : vector<1x128xf32> to vector<32x128xf32>
    %5 = arith.addf %2, %4 : vector<32x128xf32>
    %6 = vector.shape_cast %5 : vector<32x128xf32> to vector<4x8x128xf32>
    %c0_5 = arith.constant 0 : index
    %c0_6 = arith.constant 0 : index
    %7 = vector.load %arg2[%c0_5, %c0_6] : memref<32x32xbf16, #tpu.memory_space<vmem>>, vector<32x32xbf16>
    %c0_7 = arith.constant 0 : index
    %c0_8 = arith.constant 0 : index
    %8 = vector.load %arg6[%c0_7, %c0_8] : memref<32x128xbf16, #tpu.memory_space<vmem>>, vector<32x128xbf16>
    %cst_9 = arith.constant dense<0.000000e+00> : vector<32x128xf32>
    %9 = tpu.matmul %7, %8, %cst_9 {dimension_numbers = #tpu.dot_dimension_numbers<[1], [0], [0], [1], [0, 0, 1, 1], [], []>} : vector<32x32xbf16>, vector<32x128xbf16>, vector<32x128xf32> -> vector<32x128xf32>
    %c0_10 = arith.constant 0 : index
    %c0_11 = arith.constant 0 : index
    %10 = vector.load %arg8[%c0_10, %c0_11] : memref<1x128xf32, #tpu.memory_space<vmem>>, vector<1x128xf32>
    %11 = vector.broadcast %10 : vector<1x128xf32> to vector<32x128xf32>
    %12 = arith.addf %9, %11 : vector<32x128xf32>
    %13 = vector.shape_cast %12 : vector<32x128xf32> to vector<4x8x128xf32>
    %c0_12 = arith.constant 0 : index
    %c0_13 = arith.constant 0 : index
    %14 = vector.load %arg4[%c0_12, %c0_13] : memref<32x128xbf16, #tpu.memory_space<vmem>>, vector<32x128xbf16>
    %c0_14 = arith.constant 0 : index
    %c0_15 = arith.constant 0 : index
    %15 = vector.load %arg7[%c0_14, %c0_15] : memref<32x128xbf16, #tpu.memory_space<vmem>>, vector<32x128xbf16>
    %cst_16 = arith.constant 0.000000e+00 : f32
    %16 = vector.broadcast %cst_16 : f32 to vector<4x32xf32>
    %cst_17 = arith.constant 0.000000e+00 : f32
    %17 = vector.broadcast %cst_17 : f32 to vector<4x32xf32>
    %18 = vector.extract_strided_slice %6 {offsets = [0, 0, 0], sizes = [4, 1, 128], strides = [1, 1, 1]} : vector<4x8x128xf32> to vector<4x1x128xf32>
    %19 = vector.shape_cast %18 : vector<4x1x128xf32> to vector<4x128xf32>
    %20 = arith.truncf %16 : vector<4x32xf32> to vector<4x32xbf16>
    %cst_18 = arith.constant dense<0.000000e+00> : vector<4x128xf32>
    %21 = tpu.matmul %20, %14, %cst_18 {dimension_numbers = #tpu.dot_dimension_numbers<[1], [0], [0], [1], [0, 0, 1, 1], [], []>} : vector<4x32xbf16>, vector<32x128xbf16>, vector<4x128xf32> -> vector<4x128xf32>
    %22 = arith.addf %19, %21 : vector<4x128xf32>
    %23 = arith.negf %22 : vector<4x128xf32>
    %24 = math.exp %23 : vector<4x128xf32>
    %cst_19 = arith.constant 1.000000e+00 : f32
    %25 = vector.broadcast %cst_19 : f32 to vector<4x128xf32>
    %26 = arith.addf %25, %24 : vector<4x128xf32>
    %27 = arith.divf %25, %26 : vector<4x128xf32>
    %28 = math.tanh %22 : vector<4x128xf32>
    %29 = vector.extract_strided_slice %27 {offsets = [0, 0], sizes = [4, 32], strides = [1, 1]} : vector<4x128xf32> to vector<4x32xf32>
    %30 = vector.extract_strided_slice %27 {offsets = [0, 32], sizes = [4, 32], strides = [1, 1]} : vector<4x128xf32> to vector<4x32xf32>
    %31 = vector.extract_strided_slice %28 {offsets = [0, 64], sizes = [4, 32], strides = [1, 1]} : vector<4x128xf32> to vector<4x32xf32>
    %32 = vector.extract_strided_slice %27 {offsets = [0, 96], sizes = [4, 32], strides = [1, 1]} : vector<4x128xf32> to vector<4x32xf32>
    %33 = arith.mulf %30, %17 : vector<4x32xf32>
    %34 = arith.mulf %29, %31 : vector<4x32xf32>
    %35 = arith.addf %33, %34 : vector<4x32xf32>
    %36 = math.tanh %35 : vector<4x32xf32>
    %37 = arith.mulf %32, %36 : vector<4x32xf32>
    %38 = vector.extract_strided_slice %6 {offsets = [0, 1, 0], sizes = [4, 1, 128], strides = [1, 1, 1]} : vector<4x8x128xf32> to vector<4x1x128xf32>
    %39 = vector.shape_cast %38 : vector<4x1x128xf32> to vector<4x128xf32>
    %40 = arith.truncf %37 : vector<4x32xf32> to vector<4x32xbf16>
    %cst_20 = arith.constant dense<0.000000e+00> : vector<4x128xf32>
    %41 = tpu.matmul %40, %14, %cst_20 {dimension_numbers = #tpu.dot_dimension_numbers<[1], [0], [0], [1], [0, 0, 1, 1], [], []>} : vector<4x32xbf16>, vector<32x128xbf16>, vector<4x128xf32> -> vector<4x128xf32>
    %42 = arith.addf %39, %41 : vector<4x128xf32>
    %43 = arith.negf %42 : vector<4x128xf32>
    %44 = math.exp %43 : vector<4x128xf32>
    %cst_21 = arith.constant 1.000000e+00 : f32
    %45 = vector.broadcast %cst_21 : f32 to vector<4x128xf32>
    %46 = arith.addf %45, %44 : vector<4x128xf32>
    %47 = arith.divf %45, %46 : vector<4x128xf32>
    %48 = math.tanh %42 : vector<4x128xf32>
    %49 = vector.extract_strided_slice %47 {offsets = [0, 0], sizes = [4, 32], strides = [1, 1]} : vector<4x128xf32> to vector<4x32xf32>
    %50 = vector.extract_strided_slice %47 {offsets = [0, 32], sizes = [4, 32], strides = [1, 1]} : vector<4x128xf32> to vector<4x32xf32>
    %51 = vector.extract_strided_slice %48 {offsets = [0, 64], sizes = [4, 32], strides = [1, 1]} : vector<4x128xf32> to vector<4x32xf32>
    %52 = vector.extract_strided_slice %47 {offsets = [0, 96], sizes = [4, 32], strides = [1, 1]} : vector<4x128xf32> to vector<4x32xf32>
    %53 = arith.mulf %50, %35 : vector<4x32xf32>
    %54 = arith.mulf %49, %51 : vector<4x32xf32>
    %55 = arith.addf %53, %54 : vector<4x32xf32>
    %56 = math.tanh %55 : vector<4x32xf32>
    %57 = arith.mulf %52, %56 : vector<4x32xf32>
    %58 = vector.extract_strided_slice %6 {offsets = [0, 2, 0], sizes = [4, 1, 128], strides = [1, 1, 1]} : vector<4x8x128xf32> to vector<4x1x128xf32>
    %59 = vector.shape_cast %58 : vector<4x1x128xf32> to vector<4x128xf32>
    %60 = arith.truncf %57 : vector<4x32xf32> to vector<4x32xbf16>
    %cst_22 = arith.constant dense<0.000000e+00> : vector<4x128xf32>
    %61 = tpu.matmul %60, %14, %cst_22 {dimension_numbers = #tpu.dot_dimension_numbers<[1], [0], [0], [1], [0, 0, 1, 1], [], []>} : vector<4x32xbf16>, vector<32x128xbf16>, vector<4x128xf32> -> vector<4x128xf32>
    %62 = arith.addf %59, %61 : vector<4x128xf32>
    %63 = arith.negf %62 : vector<4x128xf32>
    %64 = math.exp %63 : vector<4x128xf32>
    %cst_23 = arith.constant 1.000000e+00 : f32
    %65 = vector.broadcast %cst_23 : f32 to vector<4x128xf32>
    %66 = arith.addf %65, %64 : vector<4x128xf32>
    %67 = arith.divf %65, %66 : vector<4x128xf32>
    %68 = math.tanh %62 : vector<4x128xf32>
    %69 = vector.extract_strided_slice %67 {offsets = [0, 0], sizes = [4, 32], strides = [1, 1]} : vector<4x128xf32> to vector<4x32xf32>
    %70 = vector.extract_strided_slice %67 {offsets = [0, 32], sizes = [4, 32], strides = [1, 1]} : vector<4x128xf32> to vector<4x32xf32>
    %71 = vector.extract_strided_slice %68 {offsets = [0, 64], sizes = [4, 32], strides = [1, 1]} : vector<4x128xf32> to vector<4x32xf32>
    %72 = vector.extract_strided_slice %67 {offsets = [0, 96], sizes = [4, 32], strides = [1, 1]} : vector<4x128xf32> to vector<4x32xf32>
    %73 = arith.mulf %70, %55 : vector<4x32xf32>
    %74 = arith.mulf %69, %71 : vector<4x32xf32>
    %75 = arith.addf %73, %74 : vector<4x32xf32>
    %76 = math.tanh %75 : vector<4x32xf32>
    %77 = arith.mulf %72, %76 : vector<4x32xf32>
    %78 = vector.extract_strided_slice %6 {offsets = [0, 3, 0], sizes = [4, 1, 128], strides = [1, 1, 1]} : vector<4x8x128xf32> to vector<4x1x128xf32>
    %79 = vector.shape_cast %78 : vector<4x1x128xf32> to vector<4x128xf32>
    %80 = arith.truncf %77 : vector<4x32xf32> to vector<4x32xbf16>
    %cst_24 = arith.constant dense<0.000000e+00> : vector<4x128xf32>
    %81 = tpu.matmul %80, %14, %cst_24 {dimension_numbers = #tpu.dot_dimension_numbers<[1], [0], [0], [1], [0, 0, 1, 1], [], []>} : vector<4x32xbf16>, vector<32x128xbf16>, vector<4x128xf32> -> vector<4x128xf32>
    %82 = arith.addf %79, %81 : vector<4x128xf32>
    %83 = arith.negf %82 : vector<4x128xf32>
    %84 = math.exp %83 : vector<4x128xf32>
    %cst_25 = arith.constant 1.000000e+00 : f32
    %85 = vector.broadcast %cst_25 : f32 to vector<4x128xf32>
    %86 = arith.addf %85, %84 : vector<4x128xf32>
    %87 = arith.divf %85, %86 : vector<4x128xf32>
    %88 = math.tanh %82 : vector<4x128xf32>
    %89 = vector.extract_strided_slice %87 {offsets = [0, 0], sizes = [4, 32], strides = [1, 1]} : vector<4x128xf32> to vector<4x32xf32>
    %90 = vector.extract_strided_slice %87 {offsets = [0, 32], sizes = [4, 32], strides = [1, 1]} : vector<4x128xf32> to vector<4x32xf32>
    %91 = vector.extract_strided_slice %88 {offsets = [0, 64], sizes = [4, 32], strides = [1, 1]} : vector<4x128xf32> to vector<4x32xf32>
    %92 = vector.extract_strided_slice %87 {offsets = [0, 96], sizes = [4, 32], strides = [1, 1]} : vector<4x128xf32> to vector<4x32xf32>
    %93 = arith.mulf %90, %75 : vector<4x32xf32>
    %94 = arith.mulf %89, %91 : vector<4x32xf32>
    %95 = arith.addf %93, %94 : vector<4x32xf32>
    %96 = math.tanh %95 : vector<4x32xf32>
    %97 = arith.mulf %92, %96 : vector<4x32xf32>
    %98 = vector.extract_strided_slice %6 {offsets = [0, 4, 0], sizes = [4, 1, 128], strides = [1, 1, 1]} : vector<4x8x128xf32> to vector<4x1x128xf32>
    %99 = vector.shape_cast %98 : vector<4x1x128xf32> to vector<4x128xf32>
    %100 = arith.truncf %97 : vector<4x32xf32> to vector<4x32xbf16>
    %cst_26 = arith.constant dense<0.000000e+00> : vector<4x128xf32>
    %101 = tpu.matmul %100, %14, %cst_26 {dimension_numbers = #tpu.dot_dimension_numbers<[1], [0], [0], [1], [0, 0, 1, 1], [], []>} : vector<4x32xbf16>, vector<32x128xbf16>, vector<4x128xf32> -> vector<4x128xf32>
    %102 = arith.addf %99, %101 : vector<4x128xf32>
    %103 = arith.negf %102 : vector<4x128xf32>
    %104 = math.exp %103 : vector<4x128xf32>
    %cst_27 = arith.constant 1.000000e+00 : f32
    %105 = vector.broadcast %cst_27 : f32 to vector<4x128xf32>
    %106 = arith.addf %105, %104 : vector<4x128xf32>
    %107 = arith.divf %105, %106 : vector<4x128xf32>
    %108 = math.tanh %102 : vector<4x128xf32>
    %109 = vector.extract_strided_slice %107 {offsets = [0, 0], sizes = [4, 32], strides = [1, 1]} : vector<4x128xf32> to vector<4x32xf32>
    %110 = vector.extract_strided_slice %107 {offsets = [0, 32], sizes = [4, 32], strides = [1, 1]} : vector<4x128xf32> to vector<4x32xf32>
    %111 = vector.extract_strided_slice %108 {offsets = [0, 64], sizes = [4, 32], strides = [1, 1]} : vector<4x128xf32> to vector<4x32xf32>
    %112 = vector.extract_strided_slice %107 {offsets = [0, 96], sizes = [4, 32], strides = [1, 1]} : vector<4x128xf32> to vector<4x32xf32>
    %113 = arith.mulf %110, %95 : vector<4x32xf32>
    %114 = arith.mulf %109, %111 : vector<4x32xf32>
    %115 = arith.addf %113, %114 : vector<4x32xf32>
    %116 = math.tanh %115 : vector<4x32xf32>
    %117 = arith.mulf %112, %116 : vector<4x32xf32>
    %118 = vector.extract_strided_slice %6 {offsets = [0, 5, 0], sizes = [4, 1, 128], strides = [1, 1, 1]} : vector<4x8x128xf32> to vector<4x1x128xf32>
    %119 = vector.shape_cast %118 : vector<4x1x128xf32> to vector<4x128xf32>
    %120 = arith.truncf %117 : vector<4x32xf32> to vector<4x32xbf16>
    %cst_28 = arith.constant dense<0.000000e+00> : vector<4x128xf32>
    %121 = tpu.matmul %120, %14, %cst_28 {dimension_numbers = #tpu.dot_dimension_numbers<[1], [0], [0], [1], [0, 0, 1, 1], [], []>} : vector<4x32xbf16>, vector<32x128xbf16>, vector<4x128xf32> -> vector<4x128xf32>
    %122 = arith.addf %119, %121 : vector<4x128xf32>
    %123 = arith.negf %122 : vector<4x128xf32>
    %124 = math.exp %123 : vector<4x128xf32>
    %cst_29 = arith.constant 1.000000e+00 : f32
    %125 = vector.broadcast %cst_29 : f32 to vector<4x128xf32>
    %126 = arith.addf %125, %124 : vector<4x128xf32>
    %127 = arith.divf %125, %126 : vector<4x128xf32>
    %128 = math.tanh %122 : vector<4x128xf32>
    %129 = vector.extract_strided_slice %127 {offsets = [0, 0], sizes = [4, 32], strides = [1, 1]} : vector<4x128xf32> to vector<4x32xf32>
    %130 = vector.extract_strided_slice %127 {offsets = [0, 32], sizes = [4, 32], strides = [1, 1]} : vector<4x128xf32> to vector<4x32xf32>
    %131 = vector.extract_strided_slice %128 {offsets = [0, 64], sizes = [4, 32], strides = [1, 1]} : vector<4x128xf32> to vector<4x32xf32>
    %132 = vector.extract_strided_slice %127 {offsets = [0, 96], sizes = [4, 32], strides = [1, 1]} : vector<4x128xf32> to vector<4x32xf32>
    %133 = arith.mulf %130, %115 : vector<4x32xf32>
    %134 = arith.mulf %129, %131 : vector<4x32xf32>
    %135 = arith.addf %133, %134 : vector<4x32xf32>
    %136 = math.tanh %135 : vector<4x32xf32>
    %137 = arith.mulf %132, %136 : vector<4x32xf32>
    %138 = vector.extract_strided_slice %6 {offsets = [0, 6, 0], sizes = [4, 1, 128], strides = [1, 1, 1]} : vector<4x8x128xf32> to vector<4x1x128xf32>
    %139 = vector.shape_cast %138 : vector<4x1x128xf32> to vector<4x128xf32>
    %140 = arith.truncf %137 : vector<4x32xf32> to vector<4x32xbf16>
    %cst_30 = arith.constant dense<0.000000e+00> : vector<4x128xf32>
    %141 = tpu.matmul %140, %14, %cst_30 {dimension_numbers = #tpu.dot_dimension_numbers<[1], [0], [0], [1], [0, 0, 1, 1], [], []>} : vector<4x32xbf16>, vector<32x128xbf16>, vector<4x128xf32> -> vector<4x128xf32>
    %142 = arith.addf %139, %141 : vector<4x128xf32>
    %143 = arith.negf %142 : vector<4x128xf32>
    %144 = math.exp %143 : vector<4x128xf32>
    %cst_31 = arith.constant 1.000000e+00 : f32
    %145 = vector.broadcast %cst_31 : f32 to vector<4x128xf32>
    %146 = arith.addf %145, %144 : vector<4x128xf32>
    %147 = arith.divf %145, %146 : vector<4x128xf32>
    %148 = math.tanh %142 : vector<4x128xf32>
    %149 = vector.extract_strided_slice %147 {offsets = [0, 0], sizes = [4, 32], strides = [1, 1]} : vector<4x128xf32> to vector<4x32xf32>
    %150 = vector.extract_strided_slice %147 {offsets = [0, 32], sizes = [4, 32], strides = [1, 1]} : vector<4x128xf32> to vector<4x32xf32>
    %151 = vector.extract_strided_slice %148 {offsets = [0, 64], sizes = [4, 32], strides = [1, 1]} : vector<4x128xf32> to vector<4x32xf32>
    %152 = vector.extract_strided_slice %147 {offsets = [0, 96], sizes = [4, 32], strides = [1, 1]} : vector<4x128xf32> to vector<4x32xf32>
    %153 = arith.mulf %150, %135 : vector<4x32xf32>
    %154 = arith.mulf %149, %151 : vector<4x32xf32>
    %155 = arith.addf %153, %154 : vector<4x32xf32>
    %156 = math.tanh %155 : vector<4x32xf32>
    %157 = arith.mulf %152, %156 : vector<4x32xf32>
    %158 = vector.extract_strided_slice %6 {offsets = [0, 7, 0], sizes = [4, 1, 128], strides = [1, 1, 1]} : vector<4x8x128xf32> to vector<4x1x128xf32>
    %159 = vector.shape_cast %158 : vector<4x1x128xf32> to vector<4x128xf32>
    %160 = arith.truncf %157 : vector<4x32xf32> to vector<4x32xbf16>
    %cst_32 = arith.constant dense<0.000000e+00> : vector<4x128xf32>
    %161 = tpu.matmul %160, %14, %cst_32 {dimension_numbers = #tpu.dot_dimension_numbers<[1], [0], [0], [1], [0, 0, 1, 1], [], []>} : vector<4x32xbf16>, vector<32x128xbf16>, vector<4x128xf32> -> vector<4x128xf32>
    %162 = arith.addf %159, %161 : vector<4x128xf32>
    %163 = arith.negf %162 : vector<4x128xf32>
    %164 = math.exp %163 : vector<4x128xf32>
    %cst_33 = arith.constant 1.000000e+00 : f32
    %165 = vector.broadcast %cst_33 : f32 to vector<4x128xf32>
    %166 = arith.addf %165, %164 : vector<4x128xf32>
    %167 = arith.divf %165, %166 : vector<4x128xf32>
    %168 = math.tanh %162 : vector<4x128xf32>
    %169 = vector.extract_strided_slice %167 {offsets = [0, 0], sizes = [4, 32], strides = [1, 1]} : vector<4x128xf32> to vector<4x32xf32>
    %170 = vector.extract_strided_slice %167 {offsets = [0, 32], sizes = [4, 32], strides = [1, 1]} : vector<4x128xf32> to vector<4x32xf32>
    %171 = vector.extract_strided_slice %168 {offsets = [0, 64], sizes = [4, 32], strides = [1, 1]} : vector<4x128xf32> to vector<4x32xf32>
    %172 = vector.extract_strided_slice %167 {offsets = [0, 96], sizes = [4, 32], strides = [1, 1]} : vector<4x128xf32> to vector<4x32xf32>
    %173 = arith.mulf %170, %155 : vector<4x32xf32>
    %174 = arith.mulf %169, %171 : vector<4x32xf32>
    %175 = arith.addf %173, %174 : vector<4x32xf32>
    %176 = math.tanh %175 : vector<4x32xf32>
    %177 = arith.mulf %172, %176 : vector<4x32xf32>
    %178 = vector.extract_strided_slice %13 {offsets = [0, 0, 0], sizes = [4, 1, 128], strides = [1, 1, 1]} : vector<4x8x128xf32> to vector<4x1x128xf32>
    %179 = vector.shape_cast %178 : vector<4x1x128xf32> to vector<4x128xf32>
    %180 = arith.truncf %177 : vector<4x32xf32> to vector<4x32xbf16>
    %cst_34 = arith.constant dense<0.000000e+00> : vector<4x128xf32>
    %181 = tpu.matmul %180, %15, %cst_34 {dimension_numbers = #tpu.dot_dimension_numbers<[1], [0], [0], [1], [0, 0, 1, 1], [], []>} : vector<4x32xbf16>, vector<32x128xbf16>, vector<4x128xf32> -> vector<4x128xf32>
    %182 = arith.addf %179, %181 : vector<4x128xf32>
    %183 = arith.negf %182 : vector<4x128xf32>
    %184 = math.exp %183 : vector<4x128xf32>
    %cst_35 = arith.constant 1.000000e+00 : f32
    %185 = vector.broadcast %cst_35 : f32 to vector<4x128xf32>
    %186 = arith.addf %185, %184 : vector<4x128xf32>
    %187 = arith.divf %185, %186 : vector<4x128xf32>
    %188 = math.tanh %182 : vector<4x128xf32>
    %189 = vector.extract_strided_slice %187 {offsets = [0, 0], sizes = [4, 32], strides = [1, 1]} : vector<4x128xf32> to vector<4x32xf32>
    %190 = vector.extract_strided_slice %187 {offsets = [0, 32], sizes = [4, 32], strides = [1, 1]} : vector<4x128xf32> to vector<4x32xf32>
    %191 = vector.extract_strided_slice %188 {offsets = [0, 64], sizes = [4, 32], strides = [1, 1]} : vector<4x128xf32> to vector<4x32xf32>
    %192 = vector.extract_strided_slice %187 {offsets = [0, 96], sizes = [4, 32], strides = [1, 1]} : vector<4x128xf32> to vector<4x32xf32>
    %193 = arith.mulf %190, %175 : vector<4x32xf32>
    %194 = arith.mulf %189, %191 : vector<4x32xf32>
    %195 = arith.addf %193, %194 : vector<4x32xf32>
    %196 = math.tanh %195 : vector<4x32xf32>
    %197 = arith.mulf %192, %196 : vector<4x32xf32>
    %c0_36 = arith.constant 0 : index
    %c0_37 = arith.constant 0 : index
    %c0_38 = arith.constant 0 : index
    %198 = vector.load %arg14[%c0_36, %c0_37, %c0_38] : memref<4x8x32xf32, #tpu.memory_space<vmem>>, vector<4x1x32xf32>
    %199 = vector.shape_cast %198 : vector<4x1x32xf32> to vector<4x32xf32>
    %200 = vector.shape_cast %197 : vector<4x32xf32> to vector<4x1x32xf32>
    tpu.vector_store %arg14[%c0_36, %c0_37, %c0_38], %200 {strides = array<i32>} : memref<4x8x32xf32, #tpu.memory_space<vmem>>, vector<4x1x32xf32>,
    %201 = vector.extract_strided_slice %13 {offsets = [0, 1, 0], sizes = [4, 1, 128], strides = [1, 1, 1]} : vector<4x8x128xf32> to vector<4x1x128xf32>
    %202 = vector.shape_cast %201 : vector<4x1x128xf32> to vector<4x128xf32>
    %203 = arith.truncf %197 : vector<4x32xf32> to vector<4x32xbf16>
    %cst_39 = arith.constant dense<0.000000e+00> : vector<4x128xf32>
    %204 = tpu.matmul %203, %15, %cst_39 {dimension_numbers = #tpu.dot_dimension_numbers<[1], [0], [0], [1], [0, 0, 1, 1], [], []>} : vector<4x32xbf16>, vector<32x128xbf16>, vector<4x128xf32> -> vector<4x128xf32>
    %205 = arith.addf %202, %204 : vector<4x128xf32>
    %206 = arith.negf %205 : vector<4x128xf32>
    %207 = math.exp %206 : vector<4x128xf32>
    %cst_40 = arith.constant 1.000000e+00 : f32
    %208 = vector.broadcast %cst_40 : f32 to vector<4x128xf32>
    %209 = arith.addf %208, %207 : vector<4x128xf32>
    %210 = arith.divf %208, %209 : vector<4x128xf32>
    %211 = math.tanh %205 : vector<4x128xf32>
    %212 = vector.extract_strided_slice %210 {offsets = [0, 0], sizes = [4, 32], strides = [1, 1]} : vector<4x128xf32> to vector<4x32xf32>
    %213 = vector.extract_strided_slice %210 {offsets = [0, 32], sizes = [4, 32], strides = [1, 1]} : vector<4x128xf32> to vector<4x32xf32>
    %214 = vector.extract_strided_slice %211 {offsets = [0, 64], sizes = [4, 32], strides = [1, 1]} : vector<4x128xf32> to vector<4x32xf32>
    %215 = vector.extract_strided_slice %210 {offsets = [0, 96], sizes = [4, 32], strides = [1, 1]} : vector<4x128xf32> to vector<4x32xf32>
    %216 = arith.mulf %213, %195 : vector<4x32xf32>
    %217 = arith.mulf %212, %214 : vector<4x32xf32>
    %218 = arith.addf %216, %217 : vector<4x32xf32>
    %219 = math.tanh %218 : vector<4x32xf32>
    %220 = arith.mulf %215, %219 : vector<4x32xf32>
    %c0_41 = arith.constant 0 : index
    %c1 = arith.constant 1 : index
    %c0_42 = arith.constant 0 : index
    %221 = vector.load %arg14[%c0_41, %c1, %c0_42] : memref<4x8x32xf32, #tpu.memory_space<vmem>>, vector<4x1x32xf32>
    %222 = vector.shape_cast %221 : vector<4x1x32xf32> to vector<4x32xf32>
    %223 = vector.shape_cast %220 : vector<4x32xf32> to vector<4x1x32xf32>
    tpu.vector_store %arg14[%c0_41, %c1, %c0_42], %223 {strides = array<i32>} : memref<4x8x32xf32, #tpu.memory_space<vmem>>, vector<4x1x32xf32>,
    %224 = vector.extract_strided_slice %13 {offsets = [0, 2, 0], sizes = [4, 1, 128], strides = [1, 1, 1]} : vector<4x8x128xf32> to vector<4x1x128xf32>
    %225 = vector.shape_cast %224 : vector<4x1x128xf32> to vector<4x128xf32>
    %226 = arith.truncf %220 : vector<4x32xf32> to vector<4x32xbf16>
    %cst_43 = arith.constant dense<0.000000e+00> : vector<4x128xf32>
    %227 = tpu.matmul %226, %15, %cst_43 {dimension_numbers = #tpu.dot_dimension_numbers<[1], [0], [0], [1], [0, 0, 1, 1], [], []>} : vector<4x32xbf16>, vector<32x128xbf16>, vector<4x128xf32> -> vector<4x128xf32>
    %228 = arith.addf %225, %227 : vector<4x128xf32>
    %229 = arith.negf %228 : vector<4x128xf32>
    %230 = math.exp %229 : vector<4x128xf32>
    %cst_44 = arith.constant 1.000000e+00 : f32
    %231 = vector.broadcast %cst_44 : f32 to vector<4x128xf32>
    %232 = arith.addf %231, %230 : vector<4x128xf32>
    %233 = arith.divf %231, %232 : vector<4x128xf32>
    %234 = math.tanh %228 : vector<4x128xf32>
    %235 = vector.extract_strided_slice %233 {offsets = [0, 0], sizes = [4, 32], strides = [1, 1]} : vector<4x128xf32> to vector<4x32xf32>
    %236 = vector.extract_strided_slice %233 {offsets = [0, 32], sizes = [4, 32], strides = [1, 1]} : vector<4x128xf32> to vector<4x32xf32>
    %237 = vector.extract_strided_slice %234 {offsets = [0, 64], sizes = [4, 32], strides = [1, 1]} : vector<4x128xf32> to vector<4x32xf32>
    %238 = vector.extract_strided_slice %233 {offsets = [0, 96], sizes = [4, 32], strides = [1, 1]} : vector<4x128xf32> to vector<4x32xf32>
    %239 = arith.mulf %236, %218 : vector<4x32xf32>
    %240 = arith.mulf %235, %237 : vector<4x32xf32>
    %241 = arith.addf %239, %240 : vector<4x32xf32>
    %242 = math.tanh %241 : vector<4x32xf32>
    %243 = arith.mulf %238, %242 : vector<4x32xf32>
    %c0_45 = arith.constant 0 : index
    %c2 = arith.constant 2 : index
    %c0_46 = arith.constant 0 : index
    %244 = vector.load %arg14[%c0_45, %c2, %c0_46] : memref<4x8x32xf32, #tpu.memory_space<vmem>>, vector<4x1x32xf32>
    %245 = vector.shape_cast %244 : vector<4x1x32xf32> to vector<4x32xf32>
    %246 = vector.shape_cast %243 : vector<4x32xf32> to vector<4x1x32xf32>
    tpu.vector_store %arg14[%c0_45, %c2, %c0_46], %246 {strides = array<i32>} : memref<4x8x32xf32, #tpu.memory_space<vmem>>, vector<4x1x32xf32>,
    %247 = vector.extract_strided_slice %13 {offsets = [0, 3, 0], sizes = [4, 1, 128], strides = [1, 1, 1]} : vector<4x8x128xf32> to vector<4x1x128xf32>
    %248 = vector.shape_cast %247 : vector<4x1x128xf32> to vector<4x128xf32>
    %249 = arith.truncf %243 : vector<4x32xf32> to vector<4x32xbf16>
    %cst_47 = arith.constant dense<0.000000e+00> : vector<4x128xf32>
    %250 = tpu.matmul %249, %15, %cst_47 {dimension_numbers = #tpu.dot_dimension_numbers<[1], [0], [0], [1], [0, 0, 1, 1], [], []>} : vector<4x32xbf16>, vector<32x128xbf16>, vector<4x128xf32> -> vector<4x128xf32>
    %251 = arith.addf %248, %250 : vector<4x128xf32>
    %252 = arith.negf %251 : vector<4x128xf32>
    %253 = math.exp %252 : vector<4x128xf32>
    %cst_48 = arith.constant 1.000000e+00 : f32
    %254 = vector.broadcast %cst_48 : f32 to vector<4x128xf32>
    %255 = arith.addf %254, %253 : vector<4x128xf32>
    %256 = arith.divf %254, %255 : vector<4x128xf32>
    %257 = math.tanh %251 : vector<4x128xf32>
    %258 = vector.extract_strided_slice %256 {offsets = [0, 0], sizes = [4, 32], strides = [1, 1]} : vector<4x128xf32> to vector<4x32xf32>
    %259 = vector.extract_strided_slice %256 {offsets = [0, 32], sizes = [4, 32], strides = [1, 1]} : vector<4x128xf32> to vector<4x32xf32>
    %260 = vector.extract_strided_slice %257 {offsets = [0, 64], sizes = [4, 32], strides = [1, 1]} : vector<4x128xf32> to vector<4x32xf32>
    %261 = vector.extract_strided_slice %256 {offsets = [0, 96], sizes = [4, 32], strides = [1, 1]} : vector<4x128xf32> to vector<4x32xf32>
    %262 = arith.mulf %259, %241 : vector<4x32xf32>
    %263 = arith.mulf %258, %260 : vector<4x32xf32>
    %264 = arith.addf %262, %263 : vector<4x32xf32>
    %265 = math.tanh %264 : vector<4x32xf32>
    %266 = arith.mulf %261, %265 : vector<4x32xf32>
    %c0_49 = arith.constant 0 : index
    %c3 = arith.constant 3 : index
    %c0_50 = arith.constant 0 : index
    %267 = vector.load %arg14[%c0_49, %c3, %c0_50] : memref<4x8x32xf32, #tpu.memory_space<vmem>>, vector<4x1x32xf32>
    %268 = vector.shape_cast %267 : vector<4x1x32xf32> to vector<4x32xf32>
    %269 = vector.shape_cast %266 : vector<4x32xf32> to vector<4x1x32xf32>
    tpu.vector_store %arg14[%c0_49, %c3, %c0_50], %269 {strides = array<i32>} : memref<4x8x32xf32, #tpu.memory_space<vmem>>, vector<4x1x32xf32>,
    %270 = vector.extract_strided_slice %13 {offsets = [0, 4, 0], sizes = [4, 1, 128], strides = [1, 1, 1]} : vector<4x8x128xf32> to vector<4x1x128xf32>
    %271 = vector.shape_cast %270 : vector<4x1x128xf32> to vector<4x128xf32>
    %272 = arith.truncf %266 : vector<4x32xf32> to vector<4x32xbf16>
    %cst_51 = arith.constant dense<0.000000e+00> : vector<4x128xf32>
    %273 = tpu.matmul %272, %15, %cst_51 {dimension_numbers = #tpu.dot_dimension_numbers<[1], [0], [0], [1], [0, 0, 1, 1], [], []>} : vector<4x32xbf16>, vector<32x128xbf16>, vector<4x128xf32> -> vector<4x128xf32>
    %274 = arith.addf %271, %273 : vector<4x128xf32>
    %275 = arith.negf %274 : vector<4x128xf32>
    %276 = math.exp %275 : vector<4x128xf32>
    %cst_52 = arith.constant 1.000000e+00 : f32
    %277 = vector.broadcast %cst_52 : f32 to vector<4x128xf32>
    %278 = arith.addf %277, %276 : vector<4x128xf32>
    %279 = arith.divf %277, %278 : vector<4x128xf32>
    %280 = math.tanh %274 : vector<4x128xf32>
    %281 = vector.extract_strided_slice %279 {offsets = [0, 0], sizes = [4, 32], strides = [1, 1]} : vector<4x128xf32> to vector<4x32xf32>
    %282 = vector.extract_strided_slice %279 {offsets = [0, 32], sizes = [4, 32], strides = [1, 1]} : vector<4x128xf32> to vector<4x32xf32>
    %283 = vector.extract_strided_slice %280 {offsets = [0, 64], sizes = [4, 32], strides = [1, 1]} : vector<4x128xf32> to vector<4x32xf32>
    %284 = vector.extract_strided_slice %279 {offsets = [0, 96], sizes = [4, 32], strides = [1, 1]} : vector<4x128xf32> to vector<4x32xf32>
    %285 = arith.mulf %282, %264 : vector<4x32xf32>
    %286 = arith.mulf %281, %283 : vector<4x32xf32>
    %287 = arith.addf %285, %286 : vector<4x32xf32>
    %288 = math.tanh %287 : vector<4x32xf32>
    %289 = arith.mulf %284, %288 : vector<4x32xf32>
    %c0_53 = arith.constant 0 : index
    %c4 = arith.constant 4 : index
    %c0_54 = arith.constant 0 : index
    %290 = vector.load %arg14[%c0_53, %c4, %c0_54] : memref<4x8x32xf32, #tpu.memory_space<vmem>>, vector<4x1x32xf32>
    %291 = vector.shape_cast %290 : vector<4x1x32xf32> to vector<4x32xf32>
    %292 = vector.shape_cast %289 : vector<4x32xf32> to vector<4x1x32xf32>
    tpu.vector_store %arg14[%c0_53, %c4, %c0_54], %292 {strides = array<i32>} : memref<4x8x32xf32, #tpu.memory_space<vmem>>, vector<4x1x32xf32>,
    %293 = vector.extract_strided_slice %13 {offsets = [0, 5, 0], sizes = [4, 1, 128], strides = [1, 1, 1]} : vector<4x8x128xf32> to vector<4x1x128xf32>
    %294 = vector.shape_cast %293 : vector<4x1x128xf32> to vector<4x128xf32>
    %295 = arith.truncf %289 : vector<4x32xf32> to vector<4x32xbf16>
    %cst_55 = arith.constant dense<0.000000e+00> : vector<4x128xf32>
    %296 = tpu.matmul %295, %15, %cst_55 {dimension_numbers = #tpu.dot_dimension_numbers<[1], [0], [0], [1], [0, 0, 1, 1], [], []>} : vector<4x32xbf16>, vector<32x128xbf16>, vector<4x128xf32> -> vector<4x128xf32>
    %297 = arith.addf %294, %296 : vector<4x128xf32>
    %298 = arith.negf %297 : vector<4x128xf32>
    %299 = math.exp %298 : vector<4x128xf32>
    %cst_56 = arith.constant 1.000000e+00 : f32
    %300 = vector.broadcast %cst_56 : f32 to vector<4x128xf32>
    %301 = arith.addf %300, %299 : vector<4x128xf32>
    %302 = arith.divf %300, %301 : vector<4x128xf32>
    %303 = math.tanh %297 : vector<4x128xf32>
    %304 = vector.extract_strided_slice %302 {offsets = [0, 0], sizes = [4, 32], strides = [1, 1]} : vector<4x128xf32> to vector<4x32xf32>
    %305 = vector.extract_strided_slice %302 {offsets = [0, 32], sizes = [4, 32], strides = [1, 1]} : vector<4x128xf32> to vector<4x32xf32>
    %306 = vector.extract_strided_slice %303 {offsets = [0, 64], sizes = [4, 32], strides = [1, 1]} : vector<4x128xf32> to vector<4x32xf32>
    %307 = vector.extract_strided_slice %302 {offsets = [0, 96], sizes = [4, 32], strides = [1, 1]} : vector<4x128xf32> to vector<4x32xf32>
    %308 = arith.mulf %305, %287 : vector<4x32xf32>
    %309 = arith.mulf %304, %306 : vector<4x32xf32>
    %310 = arith.addf %308, %309 : vector<4x32xf32>
    %311 = math.tanh %310 : vector<4x32xf32>
    %312 = arith.mulf %307, %311 : vector<4x32xf32>
    %c0_57 = arith.constant 0 : index
    %c5 = arith.constant 5 : index
    %c0_58 = arith.constant 0 : index
    %313 = vector.load %arg14[%c0_57, %c5, %c0_58] : memref<4x8x32xf32, #tpu.memory_space<vmem>>, vector<4x1x32xf32>
    %314 = vector.shape_cast %313 : vector<4x1x32xf32> to vector<4x32xf32>
    %315 = vector.shape_cast %312 : vector<4x32xf32> to vector<4x1x32xf32>
    tpu.vector_store %arg14[%c0_57, %c5, %c0_58], %315 {strides = array<i32>} : memref<4x8x32xf32, #tpu.memory_space<vmem>>, vector<4x1x32xf32>,
    %316 = vector.extract_strided_slice %13 {offsets = [0, 6, 0], sizes = [4, 1, 128], strides = [1, 1, 1]} : vector<4x8x128xf32> to vector<4x1x128xf32>
    %317 = vector.shape_cast %316 : vector<4x1x128xf32> to vector<4x128xf32>
    %318 = arith.truncf %312 : vector<4x32xf32> to vector<4x32xbf16>
    %cst_59 = arith.constant dense<0.000000e+00> : vector<4x128xf32>
    %319 = tpu.matmul %318, %15, %cst_59 {dimension_numbers = #tpu.dot_dimension_numbers<[1], [0], [0], [1], [0, 0, 1, 1], [], []>} : vector<4x32xbf16>, vector<32x128xbf16>, vector<4x128xf32> -> vector<4x128xf32>
    %320 = arith.addf %317, %319 : vector<4x128xf32>
    %321 = arith.negf %320 : vector<4x128xf32>
    %322 = math.exp %321 : vector<4x128xf32>
    %cst_60 = arith.constant 1.000000e+00 : f32
    %323 = vector.broadcast %cst_60 : f32 to vector<4x128xf32>
    %324 = arith.addf %323, %322 : vector<4x128xf32>
    %325 = arith.divf %323, %324 : vector<4x128xf32>
    %326 = math.tanh %320 : vector<4x128xf32>
    %327 = vector.extract_strided_slice %325 {offsets = [0, 0], sizes = [4, 32], strides = [1, 1]} : vector<4x128xf32> to vector<4x32xf32>
    %328 = vector.extract_strided_slice %325 {offsets = [0, 32], sizes = [4, 32], strides = [1, 1]} : vector<4x128xf32> to vector<4x32xf32>
    %329 = vector.extract_strided_slice %326 {offsets = [0, 64], sizes = [4, 32], strides = [1, 1]} : vector<4x128xf32> to vector<4x32xf32>
    %330 = vector.extract_strided_slice %325 {offsets = [0, 96], sizes = [4, 32], strides = [1, 1]} : vector<4x128xf32> to vector<4x32xf32>
    %331 = arith.mulf %328, %310 : vector<4x32xf32>
    %332 = arith.mulf %327, %329 : vector<4x32xf32>
    %333 = arith.addf %331, %332 : vector<4x32xf32>
    %334 = math.tanh %333 : vector<4x32xf32>
    %335 = arith.mulf %330, %334 : vector<4x32xf32>
    %c0_61 = arith.constant 0 : index
    %c6 = arith.constant 6 : index
    %c0_62 = arith.constant 0 : index
    %336 = vector.load %arg14[%c0_61, %c6, %c0_62] : memref<4x8x32xf32, #tpu.memory_space<vmem>>, vector<4x1x32xf32>
    %337 = vector.shape_cast %336 : vector<4x1x32xf32> to vector<4x32xf32>
    %338 = vector.shape_cast %335 : vector<4x32xf32> to vector<4x1x32xf32>
    tpu.vector_store %arg14[%c0_61, %c6, %c0_62], %338 {strides = array<i32>} : memref<4x8x32xf32, #tpu.memory_space<vmem>>, vector<4x1x32xf32>,
    %339 = vector.extract_strided_slice %13 {offsets = [0, 7, 0], sizes = [4, 1, 128], strides = [1, 1, 1]} : vector<4x8x128xf32> to vector<4x1x128xf32>
    %340 = vector.shape_cast %339 : vector<4x1x128xf32> to vector<4x128xf32>
    %341 = arith.truncf %335 : vector<4x32xf32> to vector<4x32xbf16>
    %cst_63 = arith.constant dense<0.000000e+00> : vector<4x128xf32>
    %342 = tpu.matmul %341, %15, %cst_63 {dimension_numbers = #tpu.dot_dimension_numbers<[1], [0], [0], [1], [0, 0, 1, 1], [], []>} : vector<4x32xbf16>, vector<32x128xbf16>, vector<4x128xf32> -> vector<4x128xf32>
    %343 = arith.addf %340, %342 : vector<4x128xf32>
    %344 = arith.negf %343 : vector<4x128xf32>
    %345 = math.exp %344 : vector<4x128xf32>
    %cst_64 = arith.constant 1.000000e+00 : f32
    %346 = vector.broadcast %cst_64 : f32 to vector<4x128xf32>
    %347 = arith.addf %346, %345 : vector<4x128xf32>
    %348 = arith.divf %346, %347 : vector<4x128xf32>
    %349 = math.tanh %343 : vector<4x128xf32>
    %350 = vector.extract_strided_slice %348 {offsets = [0, 0], sizes = [4, 32], strides = [1, 1]} : vector<4x128xf32> to vector<4x32xf32>
    %351 = vector.extract_strided_slice %348 {offsets = [0, 32], sizes = [4, 32], strides = [1, 1]} : vector<4x128xf32> to vector<4x32xf32>
    %352 = vector.extract_strided_slice %349 {offsets = [0, 64], sizes = [4, 32], strides = [1, 1]} : vector<4x128xf32> to vector<4x32xf32>
    %353 = vector.extract_strided_slice %348 {offsets = [0, 96], sizes = [4, 32], strides = [1, 1]} : vector<4x128xf32> to vector<4x32xf32>
    %354 = arith.mulf %351, %333 : vector<4x32xf32>
    %355 = arith.mulf %350, %352 : vector<4x32xf32>
    %356 = arith.addf %354, %355 : vector<4x32xf32>
    %357 = math.tanh %356 : vector<4x32xf32>
    %358 = arith.mulf %353, %357 : vector<4x32xf32>
    %c0_65 = arith.constant 0 : index
    %c7 = arith.constant 7 : index
    %c0_66 = arith.constant 0 : index
    %359 = vector.load %arg14[%c0_65, %c7, %c0_66] : memref<4x8x32xf32, #tpu.memory_space<vmem>>, vector<4x1x32xf32>
    %360 = vector.shape_cast %359 : vector<4x1x32xf32> to vector<4x32xf32>
    %361 = vector.shape_cast %358 : vector<4x32xf32> to vector<4x1x32xf32>
    tpu.vector_store %arg14[%c0_65, %c7, %c0_66], %361 {strides = array<i32>} : memref<4x8x32xf32, #tpu.memory_space<vmem>>, vector<4x1x32xf32>,
    tpu.wait_dma2 semaphore(%arg13 : memref<!tpu.dma_semaphore, #tpu.memory_space<semaphore_mem>>) src(%arg9 : memref<32x128xbf16, #tpu.memory_space<any>>) dst(%arg12 : memref<32x128xbf16, #tpu.memory_space<vmem>>)
    %c0_67 = arith.constant 0 : index
    %c0_68 = arith.constant 0 : index
    %c0_69 = arith.constant 0 : index
    %362 = vector.load %arg14[%c0_67, %c0_68, %c0_69] : memref<4x8x32xf32, #tpu.memory_space<vmem>>, vector<4x8x32xf32>
    %363 = vector.shape_cast %362 : vector<4x8x32xf32> to vector<32x32xf32>
    %364 = arith.truncf %363 : vector<32x32xf32> to vector<32x32xbf16>
    %c0_70 = arith.constant 0 : index
    %c0_71 = arith.constant 0 : index
    %365 = vector.load %arg12[%c0_70, %c0_71] : memref<32x128xbf16, #tpu.memory_space<vmem>>, vector<32x128xbf16>
    %cst_72 = arith.constant dense<0.000000e+00> : vector<32x128xf32>
    %366 = tpu.matmul %364, %365, %cst_72 {dimension_numbers = #tpu.dot_dimension_numbers<[1], [0], [0], [1], [0, 0, 1, 1], [], []>} : vector<32x32xbf16>, vector<32x128xbf16>, vector<32x128xf32> -> vector<32x128xf32>
    %c0_73 = arith.constant 0 : index
    %c0_74 = arith.constant 0 : index
    %367 = vector.load %arg10[%c0_73, %c0_74] : memref<1x128xf32, #tpu.memory_space<vmem>>, vector<1x128xf32>
    %368 = vector.broadcast %367 : vector<1x128xf32> to vector<32x128xf32>
    %369 = arith.addf %366, %368 : vector<32x128xf32>
    %c0_75 = arith.constant 0 : index
    %c0_76 = arith.constant 0 : index
    %370 = vector.load %arg11[%c0_75, %c0_76] : memref<32x128xf32, #tpu.memory_space<vmem>>, vector<32x128xf32>
    tpu.vector_store %arg11[%c0_75, %c0_76], %369 {strides = array<i32>} : memref<32x128xf32, #tpu.memory_space<vmem>>, vector<32x128xf32>,
    return
  }
  func.func @transform_0(%arg0: i32) -> (i32, i32) {
    %c0_i32 = arith.constant 0 : i32
    %c0_i32_0 = arith.constant 0 : i32
    return %arg0, %c0_i32 : i32, i32
  }
  func.func @transform_1(%arg0: i32) -> (i32, i32) {
    %c0_i32 = arith.constant 0 : i32
    %c0_i32_0 = arith.constant 0 : i32
    return %arg0, %c0_i32 : i32, i32
  }
  func.func @transform_2(%arg0: i32) -> (i32, i32) {
    %c0_i32 = arith.constant 0 : i32
    %c0_i32_0 = arith.constant 0 : i32
    %c0_i32_1 = arith.constant 0 : i32
    return %c0_i32, %c0_i32_0 : i32, i32
  }
  func.func @transform_3(%arg0: i32) -> (i32, i32) {
    %c0_i32 = arith.constant 0 : i32
    %c0_i32_0 = arith.constant 0 : i32
    %c0_i32_1 = arith.constant 0 : i32
    return %c0_i32, %c0_i32_0 : i32, i32
  }
  func.func @transform_4(%arg0: i32) -> (i32, i32) {
    %c0_i32 = arith.constant 0 : i32
    %c0_i32_0 = arith.constant 0 : i32
    %c0_i32_1 = arith.constant 0 : i32
    return %c0_i32, %c0_i32_0 : i32, i32
  }
  func.func @transform_5(%arg0: i32) -> (i32, i32) {
    %c0_i32 = arith.constant 0 : i32
    %c0_i32_0 = arith.constant 0 : i32
    %c0_i32_1 = arith.constant 0 : i32
    return %c0_i32, %c0_i32_0 : i32, i32
  }
  func.func @transform_6(%arg0: i32) -> (i32, i32) {
    %c0_i32 = arith.constant 0 : i32
    %c0_i32_0 = arith.constant 0 : i32
    %c0_i32_1 = arith.constant 0 : i32
    return %c0_i32, %c0_i32_0 : i32, i32
  }
  func.func @transform_7(%arg0: i32) -> (i32, i32) {
    %c0_i32 = arith.constant 0 : i32
    %c0_i32_0 = arith.constant 0 : i32
    %c0_i32_1 = arith.constant 0 : i32
    return %c0_i32, %c0_i32_0 : i32, i32
  }
  func.func @transform_9(%arg0: i32) -> (i32, i32) {
    %c0_i32 = arith.constant 0 : i32
    %c0_i32_0 = arith.constant 0 : i32
    %c0_i32_1 = arith.constant 0 : i32
    return %c0_i32, %c0_i32_0 : i32, i32
  }
  func.func @transform_10(%arg0: i32) -> (i32, i32) {
    %c0_i32 = arith.constant 0 : i32
    %c0_i32_0 = arith.constant 0 : i32
    return %arg0, %c0_i32 : i32, i32
  }
}

</mosaic_0001>

<llo_original>
// kernel: tpu_custom_call.1
$region0: #{tpu_custom_call.1}
  #allocation0 [shape = 'u32[]', space=smem, size = 0x4, offset = 0x4, fixed_abs, tag = 'smem constant byte address 0x4 - core index']
  #allocation1 [shape = 'u32[144,128]{1,0:T(1,128)}', space=vmem, size = 0x12000, scoped, tag = 'internal scratch']
  #allocation2 [shape = 'bf16[32,128]{1,0:T(16,128)(2,1)}', space=vmem, size = 0x2000, scoped, tag = 'scratch operand']
  #allocation3 [shape = 's32[1]{0}', space=sflag, size = 0x4, scoped, tag = 'scratch operand']
  #allocation4 [shape = 'f32[4,8,32]{2,1,0:T(8,128)}', space=vmem, size = 0x4000, scoped, tag = 'scratch operand']
  #allocation7 [shape = 's32[]', space=sflag, size = 0x4, offset = 0, fixed_abs, tag = 'sflag constant byte address 0x0 - dummy sync flag']
  %s0 = inlined_call_operand.vmem [shape: bf16[64,32], index: 0, kind: input, shape index: {}]
  %s1 = inlined_call_operand.vmem [shape: bf16[64,32], index: 1, kind: input, shape index: {}]
  %s2 = inlined_call_operand.vmem [shape: bf16[32,128], index: 2, kind: input, shape index: {}]
  %s3 = inlined_call_operand.vmem [shape: bf16[32,128], index: 3, kind: input, shape index: {}]
  %s4 = inlined_call_operand.vmem [shape: f32[1,128], index: 4, kind: input, shape index: {}]
  %s5 = inlined_call_operand.vmem [shape: bf16[32,128], index: 5, kind: input, shape index: {}]
  %s6 = inlined_call_operand.vmem [shape: bf16[32,128], index: 6, kind: input, shape index: {}]
  %s7 = inlined_call_operand.vmem [shape: f32[1,128], index: 7, kind: input, shape index: {}]
  %s8 = inlined_call_operand.vmem [shape: bf16[32,128], index: 8, kind: input, shape index: {}]
  %s9 = inlined_call_operand.vmem [shape: f32[1,128], index: 9, kind: input, shape index: {}]
  %s10 = inlined_call_operand.hbm [shape: f32[64,128], index: 10, kind: output, shape index: {}]
  %s11 = sld [smem:[#allocation0]]
  $region103: #{tpu_custom_call.1} parent=0
    _
  %s13 = ssub.s32 1, %s11
  %s14 = scalar_select 0, %s13, %s11
  $region1: #{tpu_custom_call.1} parent=0
    #allocation5 [shape = 'u8[32768]{0}', space=vmem, size = 0x8000, scoped, tag = 'output window, operand 0']
    #allocation6 [shape = 's32[2]{0}', space=sflag, size = 0x8, scoped, tag = 'scoped memory for tpu_custom_call.1']
    %15 = vsyncpa [#allocation6], 0
    %s16 = scalar_lea.sflag [#allocation6], 1
    %17 = vsyncpa %s16, 0
    loop: start=0, step=1, limit=4
    $region2: #{tpu_custom_call.1} parent=1 // loop_pre_header
      _
    $region3: #{tpu_custom_call.1} parent=1 // loop_header
      %s19 = sphi 0, %s23
      %p20 = scmp.ge.s32.totalorder %s19, 4
      %s29 = sphi 0, %s31
      %s32 = sphi 0, %s29
      %s33 = sphi 0, %s32
      %s49 = sphi 0, %s33
      %s55 = sphi 0, %s57
      %s58 = sphi 0, %s55
      %s59 = sphi 0, %s58
      %s75 = sphi 0, %s59
      %s79 = sphi 0, %s79
      %s81 = sphi 0, %s79
      %s82 = sphi 0, %s81
      %s96 = sphi 0, %s82
      %s100 = sphi 0, %s100
      %s102 = sphi 0, %s100
      %s103 = sphi 0, %s102
      %s117 = sphi 0, %s103
      %s121 = sphi 0, %s121
      %s123 = sphi 0, %s121
      %s124 = sphi 0, %s123
      %s138 = sphi 0, %s124
      %s142 = sphi 0, %s142
      %s144 = sphi 0, %s142
      %s145 = sphi 0, %s144
      %s159 = sphi 0, %s145
      %s163 = sphi 0, %s163
      %s165 = sphi 0, %s163
      %s166 = sphi 0, %s165
      %s180 = sphi 0, %s166
      %s184 = sphi 0, %s184
      %s186 = sphi 0, %s184
      %s187 = sphi 0, %s186
      %s201 = sphi 0, %s187
      %s205 = sphi 0, %s205
      %s207 = sphi 0, %s205
      %s208 = sphi 0, %s207
      %s222 = sphi 0, %s208
      %s228 = sphi 0, %s230
      %s231 = sphi 0, %s228
      %s232 = sphi 0, %s231
      %s248 = sphi 0, %s232
    $region4: #{tpu_custom_call.1} parent=1 // loop_header_branch
      %22 = sbr.rel (%p20) target = $region8
    $region5: #{tpu_custom_call.1} parent=1 // loop_body
      %s24 = ssub.s32 %s19, 1
      %s25 = ssub.s32 %s19, 2
      %s26 = sadd.s32 %s19, 1
      %s27 = ssub.s32 %s19, %s26
      %p28 = scmp.eq.s32.totalorder %s27, 0
      %s30 = sadd.s32 %s29, 1
      %s31 = scalar_select %p28, %s29, %s30
      %p34 = pneg %p28
      %p35 = scmp.eq.s32.totalorder %s19, 1
      %p36 = por %p34, %p35
      %p37 = scmp.ne.s32.totalorder %s29, %s32
      %p38 = scmp.eq.s32.totalorder %s19, 0
      %p39 = por %p37, %p38
      %p40 = scmp.ne.s32.totalorder %s29, %s32
      %p41 = scmp.eq.s32.totalorder %s24, 1
      %p42 = por %p40, %p41
      %p43 = scmp.ne.s32.totalorder %s32, %s33
      %p44 = scmp.eq.s32.totalorder %s24, 0
      %p45 = por %p43, %p44
      %p46 = scmp.ne.s32.totalorder %s32, %s33
      %p47 = scmp.eq.s32.totalorder %s25, 1
      %p48 = por %p46, %p47
      %p50 = scmp.ne.s32.totalorder %s33, %s49
      %p51 = scmp.eq.s32.totalorder %s25, 0
      %p52 = por %p50, %p51
      %s53 = ssub.s32 %s19, %s26
      %p54 = scmp.eq.s32.totalorder %s53, 0
      %s56 = sadd.s32 %s55, 1
      %s57 = scalar_select %p54, %s55, %s56
      %p60 = pneg %p54
      %p61 = scmp.eq.s32.totalorder %s19, 1
      %p62 = por %p60, %p61
      %p63 = scmp.ne.s32.totalorder %s55, %s58
      %p64 = scmp.eq.s32.totalorder %s19, 0
      %p65 = por %p63, %p64
      %p66 = scmp.ne.s32.totalorder %s55, %s58
      %p67 = scmp.eq.s32.totalorder %s24, 1
      %p68 = por %p66, %p67
      %p69 = scmp.ne.s32.totalorder %s58, %s59
      %p70 = scmp.eq.s32.totalorder %s24, 0
      %p71 = por %p69, %p70
      %p72 = scmp.ne.s32.totalorder %s58, %s59
      %p73 = scmp.eq.s32.totalorder %s25, 1
      %p74 = por %p72, %p73
      %p76 = scmp.ne.s32.totalorder %s59, %s75
      %p77 = scmp.eq.s32.totalorder %s25, 0
      %p78 = por %p76, %p77
      %s80 = sadd.s32 %s79, 1
      %p83 = scmp.eq.s32.totalorder %s19, 1
      %p84 = scmp.ne.s32.totalorder %s79, %s81
      %p85 = scmp.eq.s32.totalorder %s19, 0
      %p86 = por %p84, %p85
      %p87 = scmp.ne.s32.totalorder %s79, %s81
      %p88 = scmp.eq.s32.totalorder %s24, 1
      %p89 = por %p87, %p88
      %p90 = scmp.ne.s32.totalorder %s81, %s82
      %p91 = scmp.eq.s32.totalorder %s24, 0
      %p92 = por %p90, %p91
      %p93 = scmp.ne.s32.totalorder %s81, %s82
      %p94 = scmp.eq.s32.totalorder %s25, 1
      %p95 = por %p93, %p94
      %p97 = scmp.ne.s32.totalorder %s82, %s96
      %p98 = scmp.eq.s32.totalorder %s25, 0
      %p99 = por %p97, %p98
      %s101 = sadd.s32 %s100, 1
      %p104 = scmp.eq.s32.totalorder %s19, 1
      %p105 = scmp.ne.s32.totalorder %s100, %s102
      %p106 = scmp.eq.s32.totalorder %s19, 0
      %p107 = por %p105, %p106
      %p108 = scmp.ne.s32.totalorder %s100, %s102
      %p109 = scmp.eq.s32.totalorder %s24, 1
      %p110 = por %p108, %p109
      %p111 = scmp.ne.s32.totalorder %s102, %s103
      %p112 = scmp.eq.s32.totalorder %s24, 0
      %p113 = por %p111, %p112
      %p114 = scmp.ne.s32.totalorder %s102, %s103
      %p115 = scmp.eq.s32.totalorder %s25, 1
      %p116 = por %p114, %p115
      %p118 = scmp.ne.s32.totalorder %s103, %s117
      %p119 = scmp.eq.s32.totalorder %s25, 0
      %p120 = por %p118, %p119
      %s122 = sadd.s32 %s121, 1
      %p125 = scmp.eq.s32.totalorder %s19, 1
      %p126 = scmp.ne.s32.totalorder %s121, %s123
      %p127 = scmp.eq.s32.totalorder %s19, 0
      %p128 = por %p126, %p127
      %p129 = scmp.ne.s32.totalorder %s121, %s123
      %p130 = scmp.eq.s32.totalorder %s24, 1
      %p131 = por %p129, %p130
      %p132 = scmp.ne.s32.totalorder %s123, %s124
      %p133 = scmp.eq.s32.totalorder %s24, 0
      %p134 = por %p132, %p133
      %p135 = scmp.ne.s32.totalorder %s123, %s124
      %p136 = scmp.eq.s32.totalorder %s25, 1
      %p137 = por %p135, %p136
      %p139 = scmp.ne.s32.totalorder %s124, %s138
      %p140 = scmp.eq.s32.totalorder %s25, 0
      %p141 = por %p139, %p140
      %s143 = sadd.s32 %s142, 1
      %p146 = scmp.eq.s32.totalorder %s19, 1
      %p147 = scmp.ne.s32.totalorder %s142, %s144
      %p148 = scmp.eq.s32.totalorder %s19, 0
      %p149 = por %p147, %p148
      %p150 = scmp.ne.s32.totalorder %s142, %s144
      %p151 = scmp.eq.s32.totalorder %s24, 1
      %p152 = por %p150, %p151
      %p153 = scmp.ne.s32.totalorder %s144, %s145
      %p154 = scmp.eq.s32.totalorder %s24, 0
      %p155 = por %p153, %p154
      %p156 = scmp.ne.s32.totalorder %s144, %s145
      %p157 = scmp.eq.s32.totalorder %s25, 1
      %p158 = por %p156, %p157
      %p160 = scmp.ne.s32.totalorder %s145, %s159
      %p161 = scmp.eq.s32.totalorder %s25, 0
      %p162 = por %p160, %p161
      %s164 = sadd.s32 %s163, 1
      %p167 = scmp.eq.s32.totalorder %s19, 1
      %p168 = scmp.ne.s32.totalorder %s163, %s165
      %p169 = scmp.eq.s32.totalorder %s19, 0
      %p170 = por %p168, %p169
      %p171 = scmp.ne.s32.totalorder %s163, %s165
      %p172 = scmp.eq.s32.totalorder %s24, 1
      %p173 = por %p171, %p172
      %p174 = scmp.ne.s32.totalorder %s165, %s166
      %p175 = scmp.eq.s32.totalorder %s24, 0
      %p176 = por %p174, %p175
      %p177 = scmp.ne.s32.totalorder %s165, %s166
      %p178 = scmp.eq.s32.totalorder %s25, 1
      %p179 = por %p177, %p178
      %p181 = scmp.ne.s32.totalorder %s166, %s180
      %p182 = scmp.eq.s32.totalorder %s25, 0
      %p183 = por %p181, %p182
      %s185 = sadd.s32 %s184, 1
      %p188 = scmp.eq.s32.totalorder %s19, 1
      %p189 = scmp.ne.s32.totalorder %s184, %s186
      %p190 = scmp.eq.s32.totalorder %s19, 0
      %p191 = por %p189, %p190
      %p192 = scmp.ne.s32.totalorder %s184, %s186
      %p193 = scmp.eq.s32.totalorder %s24, 1
      %p194 = por %p192, %p193
      %p195 = scmp.ne.s32.totalorder %s186, %s187
      %p196 = scmp.eq.s32.totalorder %s24, 0
      %p197 = por %p195, %p196
      %p198 = scmp.ne.s32.totalorder %s186, %s187
      %p199 = scmp.eq.s32.totalorder %s25, 1
      %p200 = por %p198, %p199
      %p202 = scmp.ne.s32.totalorder %s187, %s201
      %p203 = scmp.eq.s32.totalorder %s25, 0
      %p204 = por %p202, %p203
      %s206 = sadd.s32 %s205, 1
      %p209 = scmp.eq.s32.totalorder %s19, 1
      %p210 = scmp.ne.s32.totalorder %s205, %s207
      %p211 = scmp.eq.s32.totalorder %s19, 0
      %p212 = por %p210, %p211
      %p213 = scmp.ne.s32.totalorder %s205, %s207
      %p214 = scmp.eq.s32.totalorder %s24, 1
      %p215 = por %p213, %p214
      %p216 = scmp.ne.s32.totalorder %s207, %s208
      %p217 = scmp.eq.s32.totalorder %s24, 0
      %p218 = por %p216, %p217
      %p219 = scmp.ne.s32.totalorder %s207, %s208
      %p220 = scmp.eq.s32.totalorder %s25, 1
      %p221 = por %p219, %p220
      %p223 = scmp.ne.s32.totalorder %s208, %s222
      %p224 = scmp.eq.s32.totalorder %s25, 0
      %p225 = por %p223, %p224
      %s226 = ssub.s32 %s19, %s26
      %p227 = scmp.eq.s32.totalorder %s226, 0
      %s229 = sadd.s32 %s228, 1
      %s230 = scalar_select %p227, %s228, %s229
      %p233 = pneg %p227
      %p234 = scmp.eq.s32.totalorder %s19, 1
      %p235 = por %p233, %p234
      %p236 = scmp.ne.s32.totalorder %s228, %s231
      %p237 = scmp.eq.s32.totalorder %s19, 0
      %p238 = por %p236, %p237
      %p239 = scmp.ne.s32.totalorder %s228, %s231
      %p240 = scmp.eq.s32.totalorder %s24, 1
      %p241 = por %p239, %p240
      %p242 = scmp.ne.s32.totalorder %s231, %s232
      %p243 = scmp.eq.s32.totalorder %s24, 0
      %p244 = por %p242, %p243
      %p245 = scmp.ne.s32.totalorder %s231, %s232
      %p246 = scmp.eq.s32.totalorder %s25, 1
      %p247 = por %p245, %p246
      %p249 = scmp.ne.s32.totalorder %s232, %s248
      %p250 = scmp.eq.s32.totalorder %s25, 0
      %p251 = por %p249, %p250
      %p252 = scmp.le.s32.totalorder 1, %s19
      %p253 = scmp.lt.s32.totalorder %s19, 3
      %p254 = pnand %p252, %p253
      %p255 = pneg %p254
      // Predicated region
      $region9: #{tpu_custom_call.1} parent=5 // pred_check
        _
      $region10: #{tpu_custom_call.1} parent=5 // pred_check_branch
        %257 = sbr.rel (%p254) target = $region12
      $region11: #{tpu_custom_call.1} parent=5 // pred_region
        %s258 = ssub.s32 %s19, 1
        // Predicated region
        $region13: #{tpu_custom_call.1} parent=11 // pred_check
          %p259 = pneg %p92
        $region14: #{tpu_custom_call.1} parent=11 // pred_check_branch
          %261 = sbr.rel (%p259) target = $region16
        $region15: #{tpu_custom_call.1} parent=11 // pred_region
          _
        $region16: #{tpu_custom_call.1} parent=11 // pred_fallthru
          _
        // Predicated region
        $region17: #{tpu_custom_call.1} parent=11 // pred_check
          %p262 = pneg %p113
        $region18: #{tpu_custom_call.1} parent=11 // pred_check_branch
          %264 = sbr.rel (%p262) target = $region20
        $region19: #{tpu_custom_call.1} parent=11 // pred_region
          _
        $region20: #{tpu_custom_call.1} parent=11 // pred_fallthru
          _
        // Predicated region
        $region21: #{tpu_custom_call.1} parent=11 // pred_check
          %p265 = pneg %p134
        $region22: #{tpu_custom_call.1} parent=11 // pred_check_branch
          %267 = sbr.rel (%p265) target = $region24
        $region23: #{tpu_custom_call.1} parent=11 // pred_region
          _
        $region24: #{tpu_custom_call.1} parent=11 // pred_fallthru
          _
        // Predicated region
        $region25: #{tpu_custom_call.1} parent=11 // pred_check
          %p268 = pneg %p155
        $region26: #{tpu_custom_call.1} parent=11 // pred_check_branch
          %270 = sbr.rel (%p268) target = $region28
        $region27: #{tpu_custom_call.1} parent=11 // pred_region
          _
        $region28: #{tpu_custom_call.1} parent=11 // pred_fallthru
          _
        // Predicated region
        $region29: #{tpu_custom_call.1} parent=11 // pred_check
          %p271 = pneg %p176
        $region30: #{tpu_custom_call.1} parent=11 // pred_check_branch
          %273 = sbr.rel (%p271) target = $region32
        $region31: #{tpu_custom_call.1} parent=11 // pred_region
          _
        $region32: #{tpu_custom_call.1} parent=11 // pred_fallthru
          _
        // Predicated region
        $region33: #{tpu_custom_call.1} parent=11 // pred_check
          %p274 = pneg %p197
        $region34: #{tpu_custom_call.1} parent=11 // pred_check_branch
          %276 = sbr.rel (%p274) target = $region36
        $region35: #{tpu_custom_call.1} parent=11 // pred_region
          _
        $region36: #{tpu_custom_call.1} parent=11 // pred_fallthru
          _
        // Predicated region
        $region37: #{tpu_custom_call.1} parent=11 // pred_check
          %p277 = pneg %p218
        $region38: #{tpu_custom_call.1} parent=11 // pred_check_branch
          %279 = sbr.rel (%p277) target = $region40
        $region39: #{tpu_custom_call.1} parent=11 // pred_region
          _
        $region40: #{tpu_custom_call.1} parent=11 // pred_fallthru
          _
      $region12: #{tpu_custom_call.1} parent=5 // pred_fallthru
        _
      %p280 = scmp.lt.s32.totalorder %s19, 2
      // Predicated region
      $region41: #{tpu_custom_call.1} parent=5 // pred_check
        %p281 = pneg %p280
      $region42: #{tpu_custom_call.1} parent=5 // pred_check_branch
        %283 = sbr.rel (%p281) target = $region44
      $region43: #{tpu_custom_call.1} parent=5 // pred_region
        // Predicated region
        $region45: #{tpu_custom_call.1} parent=43 // pred_check
          %p284 = pneg %p39
        $region46: #{tpu_custom_call.1} parent=43 // pred_check_branch
          %286 = sbr.rel (%p284) target = $region48
        $region47: #{tpu_custom_call.1} parent=43 // pred_region
          %s287 = smul.u32 4, %s19
          %p288 = scmp.lt.s32.totalorder %s287, 7
          %s289 = scalar_select %p288, %s287, 7
          %s290 = smul.addr %s289, 4
          %s291 = scalar_lea.vmem %s0, %s290
          %s292 = smul.u32 4, %s19
        $region48: #{tpu_custom_call.1} parent=43 // pred_fallthru
          _
        // Predicated region
        $region49: #{tpu_custom_call.1} parent=43 // pred_check
          %p293 = pneg %p65
        $region50: #{tpu_custom_call.1} parent=43 // pred_check_branch
          %295 = sbr.rel (%p293) target = $region52
        $region51: #{tpu_custom_call.1} parent=43 // pred_region
          %s296 = smul.u32 4, %s19
          %p297 = scmp.lt.s32.totalorder %s296, 7
          %s298 = scalar_select %p297, %s296, 7
          %s299 = smul.addr %s298, 4
          %s300 = scalar_lea.vmem %s1, %s299
          %s301 = smul.u32 4, %s19
        $region52: #{tpu_custom_call.1} parent=43 // pred_fallthru
          _
      $region44: #{tpu_custom_call.1} parent=5 // pred_fallthru
        _
      %p302 = scmp.le.s32.totalorder 1, %s19
      %p303 = scmp.lt.s32.totalorder %s19, 3
      %p304 = pnand %p302, %p303
      %p305 = pneg %p304
      // Predicated region
      $region53: #{tpu_custom_call.1} parent=5 // pred_check
        _
      $region54: #{tpu_custom_call.1} parent=5 // pred_check_branch
        %307 = sbr.rel (%p304) target = $region56
      $region55: #{tpu_custom_call.1} parent=5 // pred_region
        %s308 = ssub.s32 %s19, 1
        %s309 = smul.u32 4, %s24
        %p310 = scmp.lt.s32.totalorder %s309, 7
        %s311 = scalar_select %p310, %s309, 7
        %s312 = smul.addr %s311, 4
        %s313 = scalar_lea.vmem %s0, %s312
        %p314 = pneg %p45
        %p315 = pneg %p42
        %s316 = smul.u32 4, %s24
        %p317 = scmp.lt.s32.totalorder %s316, 7
        %s318 = scalar_select %p317, %s316, 7
        %s319 = smul.addr %s318, 4
        %s320 = scalar_lea.vmem %s1, %s319
        %p321 = pneg %p71
        %p322 = pneg %p68
        %p323 = pneg %p92
        %p324 = pneg %p89
        %p325 = pneg %p113
        %p326 = pneg %p110
        %p327 = pneg %p134
        %p328 = pneg %p131
        %p329 = pneg %p155
        %p330 = pneg %p152
        %p331 = pneg %p176
        %p332 = pneg %p173
        %p333 = pneg %p197
        %p334 = pneg %p194
        %p335 = pneg %p218
        %p336 = pneg %p215
        %p337 = pneg %p244
        %p338 = pneg %p241
        %s339 = sand.u32 %s231, 1
        %s340 = scalar_lea.sflag [#allocation6], %s339
        %s341 = sand.u32 %s231, 1
        %s342 = smul.addr %s341, 32
        %s343 = scalar_lea.vmem [#allocation5], %s342
        %s344 = smul.u32 4, %s24
        %p345 = scmp.lt.s32.totalorder %s344, 7
        %s346 = scalar_select %p345, %s344, 7
        %s347 = smul.addr %s346, 4
        %s348 = scalar_lea.vmem %s0, %s347
        %s349 = smul.u32 4, %s24
        %s350 = smul.u32 4, %s24
        %p351 = scmp.lt.s32.totalorder %s350, 7
        %s352 = scalar_select %p351, %s350, 7
        %s353 = smul.addr %s352, 4
        %s354 = scalar_lea.vmem %s1, %s353
        %s355 = smul.u32 4, %s24
        %s356 = smul.u32 4, %s24
        %p359 = scmp.lt.u32.totalorder 16, 8
        %p360 = pneg %p359
        // Predicated region
        $region57: #{tpu_custom_call.1} parent=55 // pred_check
          _
        $region58: #{tpu_custom_call.1} parent=55 // pred_check_branch
          %362 = sbr.rel (%p359) target = $region60
        $region59: #{tpu_custom_call.1} parent=55 // pred_region
          %s377 = sand.u32 16, 7
          %p378 = scmp.eq.s32.totalorder %s377, 0
          // Predicated region
          $region72: #{tpu_custom_call.1} parent=59 // pred_check
            %p379 = pneg %p378
          $region73: #{tpu_custom_call.1} parent=59 // pred_check_branch
            %381 = sbr.rel (%p379) target = $region75
          $region74: #{tpu_custom_call.1} parent=59 // pred_region
            loop: start=0, step=1, limit=1
            $region76: #{tpu_custom_call.1} parent=74 // loop_pre_header
              _
            $region77: #{tpu_custom_call.1} parent=74 // loop_header
              %s383 = sphi 0, %s387
              %p384 = scmp.ge.s32.totalorder %s383, 1
              %s388 = sphi %s8, %s8
              %s389 = sphi [#allocation2], [#allocation2]
            $region78: #{tpu_custom_call.1} parent=74 // loop_header_branch
              %386 = sbr.rel (%p384) target = $region82
            $region79: #{tpu_custom_call.1} parent=74 // loop_body
              %v390 = vld [vmem:[%s388] sm:$0xff]
              %391 = vst [vmem:[%s389] sm:$0xff] %v390
              %v392 = vld [vmem:[%s388 + $0x8] sm:$0xff]
              %393 = vst [vmem:[%s389 + $0x8] sm:$0xff] %v392
            $region80: #{tpu_custom_call.1} parent=74 // loop_footer
              %s387 = sadd.s32 1, %s383
            $region81: #{tpu_custom_call.1} parent=74 // loop_footer_branch
              %382 = sbr.rel target = $region77
            $region82: #{tpu_custom_call.1} parent=74 // loop_exit
              _
          $region75: #{tpu_custom_call.1} parent=59 // pred_fallthru
            _
          %p394 = pneg %p378
          // Predicated region
          $region83: #{tpu_custom_call.1} parent=59 // pred_check
            _
          $region84: #{tpu_custom_call.1} parent=59 // pred_check_branch
            %396 = sbr.rel (%p378) target = $region86
          $region85: #{tpu_custom_call.1} parent=59 // pred_region
            %s397 = sand.u32 16, 7
          $region86: #{tpu_custom_call.1} parent=59 // pred_fallthru
            _
        $region60: #{tpu_custom_call.1} parent=55 // pred_fallthru
          _
        // Predicated region
        $region61: #{tpu_custom_call.1} parent=55 // pred_check
          %p363 = pneg %p359
        $region62: #{tpu_custom_call.1} parent=55 // pred_check_branch
          %365 = sbr.rel (%p363) target = $region64
        $region63: #{tpu_custom_call.1} parent=55 // pred_region
          %s366 = sshllo.u32 0, 16
          loop: start=0, step=1, limit=1
          $region65: #{tpu_custom_call.1} parent=63 // loop_pre_header
            _
          $region66: #{tpu_custom_call.1} parent=63 // loop_header
            %s368 = sphi 0, %s372
            %p369 = scmp.ge.s32.totalorder %s368, 1
            %s373 = sphi %s8, %s8
            %s374 = sphi [#allocation2], [#allocation2]
          $region67: #{tpu_custom_call.1} parent=63 // loop_header_branch
            %371 = sbr.rel (%p369) target = $region71
          $region68: #{tpu_custom_call.1} parent=63 // loop_body
            %v375 = vld [vmem:[%s373] sm:%s366]
            %376 = vst [vmem:[%s374] sm:%s366] %v375
          $region69: #{tpu_custom_call.1} parent=63 // loop_footer
            %s372 = sadd.s32 1, %s368
          $region70: #{tpu_custom_call.1} parent=63 // loop_footer_branch
            %367 = sbr.rel target = $region66
          $region71: #{tpu_custom_call.1} parent=63 // loop_exit
            _
        $region64: #{tpu_custom_call.1} parent=55 // pred_fallthru
          _
        // Predicated region
        $region87: #{tpu_custom_call.1} parent=55 // pred_check
          _
        $region88: #{tpu_custom_call.1} parent=55 // pred_check_branch
          %400 = sbr.rel (0) target = $region90
        $region89: #{tpu_custom_call.1} parent=55 // pred_region
          %401 = vsyncadd [#allocation3], 256
        $region90: #{tpu_custom_call.1} parent=55 // pred_fallthru
          _
        %v402 = vld [vmem:[%s348] sm:$0xf]
        %v403 = vld [vmem:[%s348 + $0x4] sm:$0xf]
        %v404 = vld [vmem:[%s348 + $0x8] sm:$0xf]
        %v405 = vld [vmem:[%s348 + $0xc] sm:$0xf]
        %v406 = vld [vmem:[%s2] sm:$0xf]
        %v407 = vld [vmem:[%s2 + $0x4] sm:$0xf]
        %v408 = vld [vmem:[%s2 + $0x8] sm:$0xf]
        %v409 = vld [vmem:[%s2 + $0xc] sm:$0xf]
        %v410 = vld [vmem:[%s4] sm:$0x1]
        %v412 = vlaneseq
        %v413 = vshrl.u32 %v412, 7
        %v414 = vsub.s32 0, %v413
        %v415 = vrot.slane %v410, %v414
        %v421 = vunpack.c.l.b16 %v402
        %v422 = vunpack.c.l.b16 %v403
        %v423 = vunpack.c.l.b16 %v404
        %v424 = vunpack.c.l.b16 %v405
        %v425 = vpack.c.b16 %v422, %v421
        %v426 = vpack.c.b16 %v424, %v423
        %v431 = vunpack.c.l.b16 %v406
        %v432 = vunpack.c.l.b16 %v407
        %v433 = vunpack.c.l.b16 %v408
        %v434 = vunpack.c.l.b16 %v409
        %v435 = vpack.c.b16 %v432, %v431
        %v436 = vpack.c.b16 %v434, %v433
        %vm439 = vcmask 261120
        %v441 = vsel %vm439, %v425, 0
        %v444 = vsel %vm439, %v426, 0
        %446 = vmatprep.subr.bf16.mxu0 0
        %447 = vmatpush1.bf16.msra.mxu0 %v435
        %448 = vmatprep.subr.bf16.mxu0 0
        %449 = vmatpush1.bf16.msra.mxu0 %v436
        %450 = vmatprep.subr.bf16.mxu0 0
        %451 = vmatpush1.bf16.msra.mxu0 0
        %452 = vmatprep.subr.bf16.mxu0 0
        %453 = vmatpush1.bf16.msra.mxu0 0
        %454 = vmatprep.subr.bf16.mxu0 0
        %455 = vmatpush1.bf16.msra.mxu0 0
        %456 = vmatprep.subr.bf16.mxu0 0
        %457 = vmatpush1.bf16.msra.mxu0 0
        %458 = vmatprep.subr.bf16.mxu0 0
        %459 = vmatpush1.bf16.msra.mxu0 0
        %460 = vmatprep.subr.bf16.mxu0 0
        %461 = vmatpush1.bf16.msra.mxu0 0
        %462 = vmatprep.subr.bf16.mxu0 0
        %463 = vmatpush1.bf16.msra.mxu0 0
        %464 = vmatprep.subr.bf16.mxu0 0
        %465 = vmatpush1.bf16.msra.mxu0 0
        %466 = vmatprep.subr.bf16.mxu0 0
        %467 = vmatpush1.bf16.msra.mxu0 0
        %468 = vmatprep.subr.bf16.mxu0 0
        %469 = vmatpush1.bf16.msra.mxu0 0
        %470 = vmatprep.subr.bf16.mxu0 0
        %471 = vmatpush1.bf16.msra.mxu0 0
        %472 = vmatprep.subr.bf16.mxu0 0
        %473 = vmatpush1.bf16.msra.mxu0 0
        %474 = vmatprep.subr.bf16.mxu0 0
        %475 = vmatpush1.bf16.msra.mxu0 0
        %476 = vmatprep.subr.bf16.mxu0 0
        %477 = vmatpush1.bf16.msra.mxu0 0
        %478 = vmatprep.mubr.bf16.mxu0 0
        %479 = vmatmul.mubr.bf16.gmra.mrb[0].mxu0 %v441
        %v480 = vpop.f32.mrb[0].mxu0
        %v481 = vadd.f32 %v415, %v480
        %v482 = vpop.f32.mrb[0].mxu0
        %v483 = vpop.f32.mrb[0].mxu0
        %v484 = vadd.f32 %v415, %v483
        %v485 = vpop.f32.mrb[0].mxu0
        %486 = vmatprep.mubr.bf16.mxu0 0
        %487 = vmatmul.mubr.bf16.gmra.mrb[0].mxu0 %v444
        %v488 = vpop.f32.mrb[0].mxu0
        %v489 = vadd.f32 %v415, %v488
        %v490 = vpop.f32.mrb[0].mxu0
        %v491 = vpop.f32.mrb[0].mxu0
        %v492 = vadd.f32 %v415, %v491
        %v493 = vpop.f32.mrb[0].mxu0
        %494 = vdwg.mxu0
        %v495 = vld [vmem:[%s354] sm:$0xf]
        %v496 = vld [vmem:[%s354 + $0x4] sm:$0xf]
        %v497 = vld [vmem:[%s354 + $0x8] sm:$0xf]
        %v498 = vld [vmem:[%s354 + $0xc] sm:$0xf]
        %v499 = vld [vmem:[%s5] sm:$0xf]
        %v500 = vld [vmem:[%s5 + $0x4] sm:$0xf]
        %v501 = vld [vmem:[%s5 + $0x8] sm:$0xf]
        %v502 = vld [vmem:[%s5 + $0xc] sm:$0xf]
        %v503 = vld [vmem:[%s7] sm:$0x1]
        %v505 = vlaneseq
        %v506 = vshrl.u32 %v505, 7
        %v507 = vsub.s32 0, %v506
        %v508 = vrot.slane %v503, %v507
        %v514 = vunpack.c.l.b16 %v495
        %v515 = vunpack.c.l.b16 %v496
        %v516 = vunpack.c.l.b16 %v497
        %v517 = vunpack.c.l.b16 %v498
        %v518 = vpack.c.b16 %v515, %v514
        %v519 = vpack.c.b16 %v517, %v516
        %v524 = vunpack.c.l.b16 %v499
        %v525 = vunpack.c.l.b16 %v500
        %v526 = vunpack.c.l.b16 %v501
        %v527 = vunpack.c.l.b16 %v502
        %v528 = vpack.c.b16 %v525, %v524
        %v529 = vpack.c.b16 %v527, %v526
        %v533 = vsel %vm439, %v518, 0
        %v536 = vsel %vm439, %v519, 0
        %538 = vmatprep.subr.bf16.mxu0 0
        %539 = vmatpush1.bf16.msra.mxu0 %v528
        %540 = vmatprep.subr.bf16.mxu0 0
        %541 = vmatpush1.bf16.msra.mxu0 %v529
        %542 = vmatprep.subr.bf16.mxu0 0
        %543 = vmatpush1.bf16.msra.mxu0 0
        %544 = vmatprep.subr.bf16.mxu0 0
        %545 = vmatpush1.bf16.msra.mxu0 0
        %546 = vmatprep.subr.bf16.mxu0 0
        %547 = vmatpush1.bf16.msra.mxu0 0
        %548 = vmatprep.subr.bf16.mxu0 0
        %549 = vmatpush1.bf16.msra.mxu0 0
        %550 = vmatprep.subr.bf16.mxu0 0
        %551 = vmatpush1.bf16.msra.mxu0 0
        %552 = vmatprep.subr.bf16.mxu0 0
        %553 = vmatpush1.bf16.msra.mxu0 0
        %554 = vmatprep.subr.bf16.mxu0 0
        %555 = vmatpush1.bf16.msra.mxu0 0
        %556 = vmatprep.subr.bf16.mxu0 0
        %557 = vmatpush1.bf16.msra.mxu0 0
        %558 = vmatprep.subr.bf16.mxu0 0
        %559 = vmatpush1.bf16.msra.mxu0 0
        %560 = vmatprep.subr.bf16.mxu0 0
        %561 = vmatpush1.bf16.msra.mxu0 0
        %562 = vmatprep.subr.bf16.mxu0 0
        %563 = vmatpush1.bf16.msra.mxu0 0
        %564 = vmatprep.subr.bf16.mxu0 0
        %565 = vmatpush1.bf16.msra.mxu0 0
        %566 = vmatprep.subr.bf16.mxu0 0
        %567 = vmatpush1.bf16.msra.mxu0 0
        %568 = vmatprep.subr.bf16.mxu0 0
        %569 = vmatpush1.bf16.msra.mxu0 0
        %570 = vmatprep.mubr.bf16.mxu0 0
        %571 = vmatmul.mubr.bf16.gmra.mrb[0].mxu0 %v533
        %v572 = vpop.f32.mrb[0].mxu0
        %v573 = vadd.f32 %v508, %v572
        %v574 = vpop.f32.mrb[0].mxu0
        %v575 = vpop.f32.mrb[0].mxu0
        %v576 = vadd.f32 %v508, %v575
        %v577 = vpop.f32.mrb[0].mxu0
        %578 = vmatprep.mubr.bf16.mxu0 0
        %579 = vmatmul.mubr.bf16.gmra.mrb[0].mxu0 %v536
        %v580 = vpop.f32.mrb[0].mxu0
        %v581 = vadd.f32 %v508, %v580
        %v582 = vpop.f32.mrb[0].mxu0
        %v583 = vpop.f32.mrb[0].mxu0
        %v584 = vadd.f32 %v508, %v583
        %v585 = vpop.f32.mrb[0].mxu0
        %586 = vdwg.mxu0
        %v587 = vld [vmem:[%s3] sm:$0xf]
        %v588 = vld [vmem:[%s3 + $0x4] sm:$0xf]
        %v589 = vld [vmem:[%s3 + $0x8] sm:$0xf]
        %v590 = vld [vmem:[%s3 + $0xc] sm:$0xf]
        %v591 = vld [vmem:[%s6] sm:$0xf]
        %v592 = vld [vmem:[%s6 + $0x4] sm:$0xf]
        %v593 = vld [vmem:[%s6 + $0x8] sm:$0xf]
        %v594 = vld [vmem:[%s6 + $0xc] sm:$0xf]
        %v599 = vunpack.c.l.b16 %v587
        %v600 = vunpack.c.l.b16 %v588
        %v601 = vunpack.c.l.b16 %v589
        %v602 = vunpack.c.l.b16 %v590
        %v603 = vpack.c.b16 %v600, %v599
        %v604 = vpack.c.b16 %v602, %v601
        %v608 = vsel %vm439, 0, 0
        %610 = vmatprep.subr.bf16.mxu0 0
        %611 = vmatpush1.bf16.msra.mxu0 %v603
        %612 = vmatprep.subr.bf16.mxu0 0
        %613 = vmatpush1.bf16.msra.mxu0 %v604
        %614 = vmatprep.subr.bf16.mxu0 0
        %615 = vmatpush1.bf16.msra.mxu0 0
        %616 = vmatprep.subr.bf16.mxu0 0
        %617 = vmatpush1.bf16.msra.mxu0 0
        %618 = vmatprep.subr.bf16.mxu0 0
        %619 = vmatpush1.bf16.msra.mxu0 0
        %620 = vmatprep.subr.bf16.mxu0 0
        %621 = vmatpush1.bf16.msra.mxu0 0
        %622 = vmatprep.subr.bf16.mxu0 0
        %623 = vmatpush1.bf16.msra.mxu0 0
        %624 = vmatprep.subr.bf16.mxu0 0
        %625 = vmatpush1.bf16.msra.mxu0 0
        %626 = vmatprep.subr.bf16.mxu0 0
        %627 = vmatpush1.bf16.msra.mxu0 0
        %628 = vmatprep.subr.bf16.mxu0 0
        %629 = vmatpush1.bf16.msra.mxu0 0
        %630 = vmatprep.subr.bf16.mxu0 0
        %631 = vmatpush1.bf16.msra.mxu0 0
        %632 = vmatprep.subr.bf16.mxu0 0
        %633 = vmatpush1.bf16.msra.mxu0 0
        %634 = vmatprep.subr.bf16.mxu0 0
        %635 = vmatpush1.bf16.msra.mxu0 0
        %636 = vmatprep.subr.bf16.mxu0 0
        %637 = vmatpush1.bf16.msra.mxu0 0
        %638 = vmatprep.subr.bf16.mxu0 0
        %639 = vmatpush1.bf16.msra.mxu0 0
        %640 = vmatprep.subr.bf16.mxu0 0
        %641 = vmatpush1.bf16.msra.mxu0 0
        %642 = vmatprep.mubr.bf16.mxu0 0
        %643 = vmatmul.mubr.bf16.gmra.mrb[0].mxu0 %v608
        %v644 = vpop.f32.mrb[0].mxu0
        %v645 = vadd.f32 0.0, %v644
        %v646 = vpop.f32.mrb[0].mxu0
        %v647 = vpop.f32.mrb[0].mxu0
        %v648 = vpop.f32.mrb[0].mxu0
        %649 = vdwg.mxu0
        %v651 = vrot.slane %v645, 1
        %v652 = vrot.slane %v645, 2
        %v653 = vrot.slane %v645, 3
        %v658 = vadd.f32 %v481, %v645
        %v659 = vadd.f32 %v484, %v651
        %v660 = vadd.f32 %v489, %v652
        %v661 = vadd.f32 %v492, %v653
        %v662 = vxor.u32 %v658, 2147483648
        %v663 = vxor.u32 %v659, 2147483648
        %v664 = vxor.u32 %v660, 2147483648
        %v665 = vxor.u32 %v661, 2147483648
        %v666 = vmul.f32 %v662, 1.442695
        %v667 = vpow.pop %v666
        %v668 = vmul.f32 %v663, 1.442695
        %v669 = vpow.pop %v668
        %v670 = vmul.f32 %v664, 1.442695
        %v671 = vpow.pop %v670
        %v672 = vmul.f32 %v665, 1.442695
        %v673 = vpow.pop %v672
        %v674 = vadd.f32 %v667, 1.0
        %v675 = vadd.f32 %v669, 1.0
        %v676 = vadd.f32 %v671, 1.0
        %v677 = vadd.f32 %v673, 1.0
        %v678 = vrcp.pop %v674
        %v679 = vmul.f32 1.0, %v678
        %v680 = vrcp.pop %v675
        %v681 = vmul.f32 1.0, %v680
        %v682 = vrcp.pop %v676
        %v683 = vmul.f32 1.0, %v682
        %v684 = vrcp.pop %v677
        %v685 = vmul.f32 1.0, %v684
        %v686 = vtanh.pop %v658
        %v687 = vtanh.pop %v659
        %v688 = vtanh.pop %v660
        %v689 = vtanh.pop %v661
        %v690 = vmul.f32 %v679, 0.0
        %v691 = vmul.f32 %v681, 0.0
        %v692 = vmul.f32 %v683, 0.0
        %v693 = vmul.f32 %v685, 0.0
        %698 = vrot.lane.b32.xlu0 %v686, 64
        %v699 = vpop.permute.xlu0 %698
        %700 = vrot.lane.b32.xlu0 %v687, 64
        %v701 = vpop.permute.xlu0 %700
        %702 = vrot.lane.b32.xlu0 %v688, 64
        %v703 = vpop.permute.xlu0 %702
        %704 = vrot.lane.b32.xlu0 %v689, 64
        %v705 = vpop.permute.xlu0 %704
        %v710 = vmul.f32 %v679, %v699
        %v711 = vmul.f32 %v681, %v701
        %v712 = vmul.f32 %v683, %v703
        %v713 = vmul.f32 %v685, %v705
        %718 = vrot.lane.b32.xlu0 %v710, 32
        %v719 = vpop.permute.xlu0 %718
        %720 = vrot.lane.b32.xlu0 %v711, 32
        %v721 = vpop.permute.xlu0 %720
        %722 = vrot.lane.b32.xlu0 %v712, 32
        %v723 = vpop.permute.xlu0 %722
        %724 = vrot.lane.b32.xlu0 %v713, 32
        %v725 = vpop.permute.xlu0 %724
        %v730 = vadd.f32 %v690, %v719
        %v731 = vadd.f32 %v691, %v721
        %v732 = vadd.f32 %v692, %v723
        %v733 = vadd.f32 %v693, %v725
        %v734 = vtanh.pop %v730
        %v735 = vtanh.pop %v731
        %v736 = vtanh.pop %v732
        %v737 = vtanh.pop %v733
        %742 = vrot.lane.b32.xlu0 %v734, 64
        %v743 = vpop.permute.xlu0 %742
        %744 = vrot.lane.b32.xlu0 %v735, 64
        %v745 = vpop.permute.xlu0 %744
        %746 = vrot.lane.b32.xlu0 %v736, 64
        %v747 = vpop.permute.xlu0 %746
        %748 = vrot.lane.b32.xlu0 %v737, 64
        %v749 = vpop.permute.xlu0 %748
        %v754 = vmul.f32 %v679, %v743
        %v755 = vmul.f32 %v681, %v745
        %v756 = vmul.f32 %v683, %v747
        %v757 = vmul.f32 %v685, %v749
        %v758 = vpack.c.bf16 %v754, %v754
        %v759 = vpack.c.bf16 %v755, %v755
        %v760 = vpack.c.bf16 %v756, %v756
        %v761 = vpack.c.bf16 %v757, %v757
        %v766 = vunpack.c.l.b16 %v758
        %v767 = vunpack.c.l.b16 %v759
        %v768 = vunpack.c.l.b16 %v760
        %v769 = vunpack.c.l.b16 %v761
        %v770 = vrot.slane %v767, 7
        %vm771 = vcmask 1041409
        %v772 = vsel %vm771, %v770, %v766
        %v773 = vrot.slane %v768, 6
        %vm774 = vcmask 1042434
        %v775 = vsel %vm774, %v773, %v772
        %v776 = vrot.slane %v769, 5
        %vm777 = vcmask 1043459
        %v778 = vsel %vm777, %v776, %v775
        %v779 = vpack.c.b16 %v778, %v778
        %780 = vrot.lane.b32.xlu0 %v779, 32
        %v781 = vpop.permute.xlu0 %780
        %v783 = vsel %vm439, %v781, 0
        %785 = vmatprep.subr.bf16.mxu0 0
        %786 = vmatpush1.bf16.msra.mxu0 %v603
        %787 = vmatprep.subr.bf16.mxu0 0
        %788 = vmatpush1.bf16.msra.mxu0 %v604
        %789 = vmatprep.subr.bf16.mxu0 0
        %790 = vmatpush1.bf16.msra.mxu0 0
        %791 = vmatprep.subr.bf16.mxu0 0
        %792 = vmatpush1.bf16.msra.mxu0 0
        %793 = vmatprep.subr.bf16.mxu0 0
        %794 = vmatpush1.bf16.msra.mxu0 0
        %795 = vmatprep.subr.bf16.mxu0 0
        %796 = vmatpush1.bf16.msra.mxu0 0
        %797 = vmatprep.subr.bf16.mxu0 0
        %798 = vmatpush1.bf16.msra.mxu0 0
        %799 = vmatprep.subr.bf16.mxu0 0
        %800 = vmatpush1.bf16.msra.mxu0 0
        %801 = vmatprep.subr.bf16.mxu0 0
        %802 = vmatpush1.bf16.msra.mxu0 0
        %803 = vmatprep.subr.bf16.mxu0 0
        %804 = vmatpush1.bf16.msra.mxu0 0
        %805 = vmatprep.subr.bf16.mxu0 0
        %806 = vmatpush1.bf16.msra.mxu0 0
        %807 = vmatprep.subr.bf16.mxu0 0
        %808 = vmatpush1.bf16.msra.mxu0 0
        %809 = vmatprep.subr.bf16.mxu0 0
        %810 = vmatpush1.bf16.msra.mxu0 0
        %811 = vmatprep.subr.bf16.mxu0 0
        %812 = vmatpush1.bf16.msra.mxu0 0
        %813 = vmatprep.subr.bf16.mxu0 0
        %814 = vmatpush1.bf16.msra.mxu0 0
        %815 = vmatprep.subr.bf16.mxu0 0
        %816 = vmatpush1.bf16.msra.mxu0 0
        %817 = vmatprep.mubr.bf16.mxu0 0
        %818 = vmatmul.mubr.bf16.gmra.mrb[0].mxu0 %v783
        %v819 = vpop.f32.mrb[0].mxu0
        %v820 = vadd.f32 0.0, %v819
        %v821 = vpop.f32.mrb[0].mxu0
        %v822 = vpop.f32.mrb[0].mxu0
        %v823 = vpop.f32.mrb[0].mxu0
        %824 = vdwg.mxu0
        %v826 = vrot.slane %v820, 7
        %v827 = vrot.slane %v820, 1
        %v828 = vrot.slane %v820, 2
        %v833 = vadd.f32 %v481, %v826
        %v834 = vadd.f32 %v484, %v820
        %v835 = vadd.f32 %v489, %v827
        %v836 = vadd.f32 %v492, %v828
        %v837 = vxor.u32 %v833, 2147483648
        %v838 = vxor.u32 %v834, 2147483648
        %v839 = vxor.u32 %v835, 2147483648
        %v840 = vxor.u32 %v836, 2147483648
        %v841 = vmul.f32 %v837, 1.442695
        %v842 = vpow.pop %v841
        %v843 = vmul.f32 %v838, 1.442695
        %v844 = vpow.pop %v843
        %v845 = vmul.f32 %v839, 1.442695
        %v846 = vpow.pop %v845
        %v847 = vmul.f32 %v840, 1.442695
        %v848 = vpow.pop %v847
        %v849 = vadd.f32 %v842, 1.0
        %v850 = vadd.f32 %v844, 1.0
        %v851 = vadd.f32 %v846, 1.0
        %v852 = vadd.f32 %v848, 1.0
        %v853 = vrcp.pop %v849
        %v854 = vmul.f32 1.0, %v853
        %v855 = vrcp.pop %v850
        %v856 = vmul.f32 1.0, %v855
        %v857 = vrcp.pop %v851
        %v858 = vmul.f32 1.0, %v857
        %v859 = vrcp.pop %v852
        %v860 = vmul.f32 1.0, %v859
        %v861 = vtanh.pop %v833
        %v862 = vtanh.pop %v834
        %v863 = vtanh.pop %v835
        %v864 = vtanh.pop %v836
        %v869 = vrot.slane %v730, 7
        %v870 = vrot.slane %v731, 7
        %v871 = vrot.slane %v732, 7
        %v872 = vrot.slane %v733, 7
        %v877 = vmul.f32 %v854, %v869
        %v878 = vmul.f32 %v856, %v870
        %v879 = vmul.f32 %v858, %v871
        %v880 = vmul.f32 %v860, %v872
        %885 = vrot.lane.b32.xlu0 %v861, 64
        %v886 = vpop.permute.xlu0 %885
        %887 = vrot.lane.b32.xlu0 %v862, 64
        %v888 = vpop.permute.xlu0 %887
        %889 = vrot.lane.b32.xlu0 %v863, 64
        %v890 = vpop.permute.xlu0 %889
        %891 = vrot.lane.b32.xlu0 %v864, 64
        %v892 = vpop.permute.xlu0 %891
        %v897 = vmul.f32 %v854, %v886
        %v898 = vmul.f32 %v856, %v888
        %v899 = vmul.f32 %v858, %v890
        %v900 = vmul.f32 %v860, %v892
        %905 = vrot.lane.b32.xlu0 %v897, 32
        %v906 = vpop.permute.xlu0 %905
        %907 = vrot.lane.b32.xlu0 %v898, 32
        %v908 = vpop.permute.xlu0 %907
        %909 = vrot.lane.b32.xlu0 %v899, 32
        %v910 = vpop.permute.xlu0 %909
        %911 = vrot.lane.b32.xlu0 %v900, 32
        %v912 = vpop.permute.xlu0 %911
        %v917 = vadd.f32 %v877, %v906
        %v918 = vadd.f32 %v878, %v908
        %v919 = vadd.f32 %v879, %v910
        %v920 = vadd.f32 %v880, %v912
        %v921 = vtanh.pop %v917
        %v922 = vtanh.pop %v918
        %v923 = vtanh.pop %v919
        %v924 = vtanh.pop %v920
        %929 = vrot.lane.b32.xlu0 %v921, 64
        %v930 = vpop.permute.xlu0 %929
        %931 = vrot.lane.b32.xlu0 %v922, 64
        %v932 = vpop.permute.xlu0 %931
        %933 = vrot.lane.b32.xlu0 %v923, 64
        %v934 = vpop.permute.xlu0 %933
        %935 = vrot.lane.b32.xlu0 %v924, 64
        %v936 = vpop.permute.xlu0 %935
        %v941 = vmul.f32 %v854, %v930
        %v942 = vmul.f32 %v856, %v932
        %v943 = vmul.f32 %v858, %v934
        %v944 = vmul.f32 %v860, %v936
        %v945 = vpack.c.bf16 %v941, %v941
        %v946 = vpack.c.bf16 %v942, %v942
        %v947 = vpack.c.bf16 %v943, %v943
        %v948 = vpack.c.bf16 %v944, %v944
        %v953 = vunpack.c.l.b16 %v945
        %v954 = vunpack.c.l.b16 %v946
        %v955 = vunpack.c.l.b16 %v947
        %v956 = vunpack.c.l.b16 %v948
        %v957 = vrot.slane %v953, 1
        %v958 = vsel %vm771, %v954, %v957
        %v959 = vrot.slane %v955, 7
        %v960 = vsel %vm774, %v959, %v958
        %v961 = vrot.slane %v956, 6
        %v962 = vsel %vm777, %v961, %v960
        %v963 = vpack.c.b16 %v962, %v962
        %964 = vrot.lane.b32.xlu0 %v963, 32
        %v965 = vpop.permute.xlu0 %964
        %v967 = vsel %vm439, %v965, 0
        %969 = vmatprep.subr.bf16.mxu0 0
        %970 = vmatpush1.bf16.msra.mxu0 %v603
        %971 = vmatprep.subr.bf16.mxu0 0
        %972 = vmatpush1.bf16.msra.mxu0 %v604
        %973 = vmatprep.subr.bf16.mxu0 0
        %974 = vmatpush1.bf16.msra.mxu0 0
        %975 = vmatprep.subr.bf16.mxu0 0
        %976 = vmatpush1.bf16.msra.mxu0 0
        %977 = vmatprep.subr.bf16.mxu0 0
        %978 = vmatpush1.bf16.msra.mxu0 0
        %979 = vmatprep.subr.bf16.mxu0 0
        %980 = vmatpush1.bf16.msra.mxu0 0
        %981 = vmatprep.subr.bf16.mxu0 0
        %982 = vmatpush1.bf16.msra.mxu0 0
        %983 = vmatprep.subr.bf16.mxu0 0
        %984 = vmatpush1.bf16.msra.mxu0 0
        %985 = vmatprep.subr.bf16.mxu0 0
        %986 = vmatpush1.bf16.msra.mxu0 0
        %987 = vmatprep.subr.bf16.mxu0 0
        %988 = vmatpush1.bf16.msra.mxu0 0
        %989 = vmatprep.subr.bf16.mxu0 0
        %990 = vmatpush1.bf16.msra.mxu0 0
        %991 = vmatprep.subr.bf16.mxu0 0
        %992 = vmatpush1.bf16.msra.mxu0 0
        %993 = vmatprep.subr.bf16.mxu0 0
        %994 = vmatpush1.bf16.msra.mxu0 0
        %995 = vmatprep.subr.bf16.mxu0 0
        %996 = vmatpush1.bf16.msra.mxu0 0
        %997 = vmatprep.subr.bf16.mxu0 0
        %998 = vmatpush1.bf16.msra.mxu0 0
        %999 = vmatprep.subr.bf16.mxu0 0
        %1000 = vmatpush1.bf16.msra.mxu0 0
        %1001 = vmatprep.mubr.bf16.mxu0 0
        %1002 = vmatmul.mubr.bf16.gmra.mrb[0].mxu0 %v967
        %v1003 = vpop.f32.mrb[0].mxu0
        %v1004 = vadd.f32 0.0, %v1003
        %v1005 = vpop.f32.mrb[0].mxu0
        %v1006 = vpop.f32.mrb[0].mxu0
        %v1007 = vpop.f32.mrb[0].mxu0
        %1008 = vdwg.mxu0
        %v1010 = vrot.slane %v1004, 6
        %v1011 = vrot.slane %v1004, 7
        %v1012 = vrot.slane %v1004, 1
        %v1017 = vadd.f32 %v481, %v1010
        %v1018 = vadd.f32 %v484, %v1011
        %v1019 = vadd.f32 %v489, %v1004
        %v1020 = vadd.f32 %v492, %v1012
        %v1021 = vxor.u32 %v1017, 2147483648
        %v1022 = vxor.u32 %v1018, 2147483648
        %v1023 = vxor.u32 %v1019, 2147483648
        %v1024 = vxor.u32 %v1020, 2147483648
        %v1025 = vmul.f32 %v1021, 1.442695
        %v1026 = vpow.pop %v1025
        %v1027 = vmul.f32 %v1022, 1.442695
        %v1028 = vpow.pop %v1027
        %v1029 = vmul.f32 %v1023, 1.442695
        %v1030 = vpow.pop %v1029
        %v1031 = vmul.f32 %v1024, 1.442695
        %v1032 = vpow.pop %v1031
        %v1033 = vadd.f32 %v1026, 1.0
        %v1034 = vadd.f32 %v1028, 1.0
        %v1035 = vadd.f32 %v1030, 1.0
        %v1036 = vadd.f32 %v1032, 1.0
        %v1037 = vrcp.pop %v1033
        %v1038 = vmul.f32 1.0, %v1037
        %v1039 = vrcp.pop %v1034
        %v1040 = vmul.f32 1.0, %v1039
        %v1041 = vrcp.pop %v1035
        %v1042 = vmul.f32 1.0, %v1041
        %v1043 = vrcp.pop %v1036
        %v1044 = vmul.f32 1.0, %v1043
        %v1045 = vtanh.pop %v1017
        %v1046 = vtanh.pop %v1018
        %v1047 = vtanh.pop %v1019
        %v1048 = vtanh.pop %v1020
        %v1053 = vrot.slane %v917, 7
        %v1054 = vrot.slane %v918, 7
        %v1055 = vrot.slane %v919, 7
        %v1056 = vrot.slane %v920, 7
        %v1061 = vmul.f32 %v1038, %v1053
        %v1062 = vmul.f32 %v1040, %v1054
        %v1063 = vmul.f32 %v1042, %v1055
        %v1064 = vmul.f32 %v1044, %v1056
        %1069 = vrot.lane.b32.xlu0 %v1045, 64
        %v1070 = vpop.permute.xlu0 %1069
        %1071 = vrot.lane.b32.xlu0 %v1046, 64
        %v1072 = vpop.permute.xlu0 %1071
        %1073 = vrot.lane.b32.xlu0 %v1047, 64
        %v1074 = vpop.permute.xlu0 %1073
        %1075 = vrot.lane.b32.xlu0 %v1048, 64
        %v1076 = vpop.permute.xlu0 %1075
        %v1081 = vmul.f32 %v1038, %v1070
        %v1082 = vmul.f32 %v1040, %v1072
        %v1083 = vmul.f32 %v1042, %v1074
        %v1084 = vmul.f32 %v1044, %v1076
        %1089 = vrot.lane.b32.xlu0 %v1081, 32
        %v1090 = vpop.permute.xlu0 %1089
        %1091 = vrot.lane.b32.xlu0 %v1082, 32
        %v1092 = vpop.permute.xlu0 %1091
        %1093 = vrot.lane.b32.xlu0 %v1083, 32
        %v1094 = vpop.permute.xlu0 %1093
        %1095 = vrot.lane.b32.xlu0 %v1084, 32
        %v1096 = vpop.permute.xlu0 %1095
        %v1101 = vadd.f32 %v1061, %v1090
        %v1102 = vadd.f32 %v1062, %v1092
        %v1103 = vadd.f32 %v1063, %v1094
        %v1104 = vadd.f32 %v1064, %v1096
        %v1105 = vtanh.pop %v1101
        %v1106 = vtanh.pop %v1102
        %v1107 = vtanh.pop %v1103
        %v1108 = vtanh.pop %v1104
        %1113 = vrot.lane.b32.xlu0 %v1105, 64
        %v1114 = vpop.permute.xlu0 %1113
        %1115 = vrot.lane.b32.xlu0 %v1106, 64
        %v1116 = vpop.permute.xlu0 %1115
        %1117 = vrot.lane.b32.xlu0 %v1107, 64
        %v1118 = vpop.permute.xlu0 %1117
        %1119 = vrot.lane.b32.xlu0 %v1108, 64
        %v1120 = vpop.permute.xlu0 %1119
        %v1125 = vmul.f32 %v1038, %v1114
        %v1126 = vmul.f32 %v1040, %v1116
        %v1127 = vmul.f32 %v1042, %v1118
        %v1128 = vmul.f32 %v1044, %v1120
        %v1129 = vpack.c.bf16 %v1125, %v1125
        %v1130 = vpack.c.bf16 %v1126, %v1126
        %v1131 = vpack.c.bf16 %v1127, %v1127
        %v1132 = vpack.c.bf16 %v1128, %v1128
        %v1137 = vunpack.c.l.b16 %v1129
        %v1138 = vunpack.c.l.b16 %v1130
        %v1139 = vunpack.c.l.b16 %v1131
        %v1140 = vunpack.c.l.b16 %v1132
        %v1141 = vrot.slane %v1137, 2
        %v1142 = vrot.slane %v1138, 1
        %v1143 = vsel %vm771, %v1142, %v1141
        %v1144 = vsel %vm774, %v1139, %v1143
        %v1145 = vrot.slane %v1140, 7
        %v1146 = vsel %vm777, %v1145, %v1144
        %v1147 = vpack.c.b16 %v1146, %v1146
        %1148 = vrot.lane.b32.xlu0 %v1147, 32
        %v1149 = vpop.permute.xlu0 %1148
        %v1151 = vsel %vm439, %v1149, 0
        %1153 = vmatprep.subr.bf16.mxu0 0
        %1154 = vmatpush1.bf16.msra.mxu0 %v603
        %1155 = vmatprep.subr.bf16.mxu0 0
        %1156 = vmatpush1.bf16.msra.mxu0 %v604
        %1157 = vmatprep.subr.bf16.mxu0 0
        %1158 = vmatpush1.bf16.msra.mxu0 0
        %1159 = vmatprep.subr.bf16.mxu0 0
        %1160 = vmatpush1.bf16.msra.mxu0 0
        %1161 = vmatprep.subr.bf16.mxu0 0
        %1162 = vmatpush1.bf16.msra.mxu0 0
        %1163 = vmatprep.subr.bf16.mxu0 0
        %1164 = vmatpush1.bf16.msra.mxu0 0
        %1165 = vmatprep.subr.bf16.mxu0 0
        %1166 = vmatpush1.bf16.msra.mxu0 0
        %1167 = vmatprep.subr.bf16.mxu0 0
        %1168 = vmatpush1.bf16.msra.mxu0 0
        %1169 = vmatprep.subr.bf16.mxu0 0
        %1170 = vmatpush1.bf16.msra.mxu0 0
        %1171 = vmatprep.subr.bf16.mxu0 0
        %1172 = vmatpush1.bf16.msra.mxu0 0
        %1173 = vmatprep.subr.bf16.mxu0 0
        %1174 = vmatpush1.bf16.msra.mxu0 0
        %1175 = vmatprep.subr.bf16.mxu0 0
        %1176 = vmatpush1.bf16.msra.mxu0 0
        %1177 = vmatprep.subr.bf16.mxu0 0
        %1178 = vmatpush1.bf16.msra.mxu0 0
        %1179 = vmatprep.subr.bf16.mxu0 0
        %1180 = vmatpush1.bf16.msra.mxu0 0
        %1181 = vmatprep.subr.bf16.mxu0 0
        %1182 = vmatpush1.bf16.msra.mxu0 0
        %1183 = vmatprep.subr.bf16.mxu0 0
        %1184 = vmatpush1.bf16.msra.mxu0 0
        %1185 = vmatprep.mubr.bf16.mxu0 0
        %1186 = vmatmul.mubr.bf16.gmra.mrb[0].mxu0 %v1151
        %v1187 = vpop.f32.mrb[0].mxu0
        %v1188 = vadd.f32 0.0, %v1187
        %v1189 = vpop.f32.mrb[0].mxu0
        %v1190 = vpop.f32.mrb[0].mxu0
        %v1191 = vpop.f32.mrb[0].mxu0
        %1192 = vdwg.mxu0
        %v1194 = vrot.slane %v1188, 5
        %v1195 = vrot.slane %v1188, 6
        %v1196 = vrot.slane %v1188, 7
        %v1201 = vadd.f32 %v481, %v1194
        %v1202 = vadd.f32 %v484, %v1195
        %v1203 = vadd.f32 %v489, %v1196
        %v1204 = vadd.f32 %v492, %v1188
        %v1205 = vxor.u32 %v1201, 2147483648
        %v1206 = vxor.u32 %v1202, 2147483648
        %v1207 = vxor.u32 %v1203, 2147483648
        %v1208 = vxor.u32 %v1204, 2147483648
        %v1209 = vmul.f32 %v1205, 1.442695
        %v1210 = vpow.pop %v1209
        %v1211 = vmul.f32 %v1206, 1.442695
        %v1212 = vpow.pop %v1211
        %v1213 = vmul.f32 %v1207, 1.442695
        %v1214 = vpow.pop %v1213
        %v1215 = vmul.f32 %v1208, 1.442695
        %v1216 = vpow.pop %v1215
        %v1217 = vadd.f32 %v1210, 1.0
        %v1218 = vadd.f32 %v1212, 1.0
        %v1219 = vadd.f32 %v1214, 1.0
        %v1220 = vadd.f32 %v1216, 1.0
        %v1221 = vrcp.pop %v1217
        %v1222 = vmul.f32 1.0, %v1221
        %v1223 = vrcp.pop %v1218
        %v1224 = vmul.f32 1.0, %v1223
        %v1225 = vrcp.pop %v1219
        %v1226 = vmul.f32 1.0, %v1225
        %v1227 = vrcp.pop %v1220
        %v1228 = vmul.f32 1.0, %v1227
        %v1229 = vtanh.pop %v1201
        %v1230 = vtanh.pop %v1202
        %v1231 = vtanh.pop %v1203
        %v1232 = vtanh.pop %v1204
        %v1237 = vrot.slane %v1101, 7
        %v1238 = vrot.slane %v1102, 7
        %v1239 = vrot.slane %v1103, 7
        %v1240 = vrot.slane %v1104, 7
        %v1245 = vmul.f32 %v1222, %v1237
        %v1246 = vmul.f32 %v1224, %v1238
        %v1247 = vmul.f32 %v1226, %v1239
        %v1248 = vmul.f32 %v1228, %v1240
        %1253 = vrot.lane.b32.xlu0 %v1229, 64
        %v1254 = vpop.permute.xlu0 %1253
        %1255 = vrot.lane.b32.xlu0 %v1230, 64
        %v1256 = vpop.permute.xlu0 %1255
        %1257 = vrot.lane.b32.xlu0 %v1231, 64
        %v1258 = vpop.permute.xlu0 %1257
        %1259 = vrot.lane.b32.xlu0 %v1232, 64
        %v1260 = vpop.permute.xlu0 %1259
        %v1265 = vmul.f32 %v1222, %v1254
        %v1266 = vmul.f32 %v1224, %v1256
        %v1267 = vmul.f32 %v1226, %v1258
        %v1268 = vmul.f32 %v1228, %v1260
        %1273 = vrot.lane.b32.xlu0 %v1265, 32
        %v1274 = vpop.permute.xlu0 %1273
        %1275 = vrot.lane.b32.xlu0 %v1266, 32
        %v1276 = vpop.permute.xlu0 %1275
        %1277 = vrot.lane.b32.xlu0 %v1267, 32
        %v1278 = vpop.permute.xlu0 %1277
        %1279 = vrot.lane.b32.xlu0 %v1268, 32
        %v1280 = vpop.permute.xlu0 %1279
        %v1285 = vadd.f32 %v1245, %v1274
        %v1286 = vadd.f32 %v1246, %v1276
        %v1287 = vadd.f32 %v1247, %v1278
        %v1288 = vadd.f32 %v1248, %v1280
        %v1289 = vtanh.pop %v1285
        %v1290 = vtanh.pop %v1286
        %v1291 = vtanh.pop %v1287
        %v1292 = vtanh.pop %v1288
        %1297 = vrot.lane.b32.xlu0 %v1289, 64
        %v1298 = vpop.permute.xlu0 %1297
        %1299 = vrot.lane.b32.xlu0 %v1290, 64
        %v1300 = vpop.permute.xlu0 %1299
        %1301 = vrot.lane.b32.xlu0 %v1291, 64
        %v1302 = vpop.permute.xlu0 %1301
        %1303 = vrot.lane.b32.xlu0 %v1292, 64
        %v1304 = vpop.permute.xlu0 %1303
        %v1309 = vmul.f32 %v1222, %v1298
        %v1310 = vmul.f32 %v1224, %v1300
        %v1311 = vmul.f32 %v1226, %v1302
        %v1312 = vmul.f32 %v1228, %v1304
        %v1313 = vpack.c.bf16 %v1309, %v1309
        %v1314 = vpack.c.bf16 %v1310, %v1310
        %v1315 = vpack.c.bf16 %v1311, %v1311
        %v1316 = vpack.c.bf16 %v1312, %v1312
        %v1321 = vunpack.c.l.b16 %v1313
        %v1322 = vunpack.c.l.b16 %v1314
        %v1323 = vunpack.c.l.b16 %v1315
        %v1324 = vunpack.c.l.b16 %v1316
        %v1325 = vrot.slane %v1321, 3
        %v1326 = vrot.slane %v1322, 2
        %v1327 = vsel %vm771, %v1326, %v1325
        %v1328 = vrot.slane %v1323, 1
        %v1329 = vsel %vm774, %v1328, %v1327
        %v1330 = vsel %vm777, %v1324, %v1329
        %v1331 = vpack.c.b16 %v1330, %v1330
        %1332 = vrot.lane.b32.xlu0 %v1331, 32
        %v1333 = vpop.permute.xlu0 %1332
        %v1335 = vsel %vm439, %v1333, 0
        %1337 = vmatprep.subr.bf16.mxu0 0
        %1338 = vmatpush1.bf16.msra.mxu0 %v603
        %1339 = vmatprep.subr.bf16.mxu0 0
        %1340 = vmatpush1.bf16.msra.mxu0 %v604
        %1341 = vmatprep.subr.bf16.mxu0 0
        %1342 = vmatpush1.bf16.msra.mxu0 0
        %1343 = vmatprep.subr.bf16.mxu0 0
        %1344 = vmatpush1.bf16.msra.mxu0 0
        %1345 = vmatprep.subr.bf16.mxu0 0
        %1346 = vmatpush1.bf16.msra.mxu0 0
        %1347 = vmatprep.subr.bf16.mxu0 0
        %1348 = vmatpush1.bf16.msra.mxu0 0
        %1349 = vmatprep.subr.bf16.mxu0 0
        %1350 = vmatpush1.bf16.msra.mxu0 0
        %1351 = vmatprep.subr.bf16.mxu0 0
        %1352 = vmatpush1.bf16.msra.mxu0 0
        %1353 = vmatprep.subr.bf16.mxu0 0
        %1354 = vmatpush1.bf16.msra.mxu0 0
        %1355 = vmatprep.subr.bf16.mxu0 0
        %1356 = vmatpush1.bf16.msra.mxu0 0
        %1357 = vmatprep.subr.bf16.mxu0 0
        %1358 = vmatpush1.bf16.msra.mxu0 0
        %1359 = vmatprep.subr.bf16.mxu0 0
        %1360 = vmatpush1.bf16.msra.mxu0 0
        %1361 = vmatprep.subr.bf16.mxu0 0
        %1362 = vmatpush1.bf16.msra.mxu0 0
        %1363 = vmatprep.subr.bf16.mxu0 0
        %1364 = vmatpush1.bf16.msra.mxu0 0
        %1365 = vmatprep.subr.bf16.mxu0 0
        %1366 = vmatpush1.bf16.msra.mxu0 0
        %1367 = vmatprep.subr.bf16.mxu0 0
        %1368 = vmatpush1.bf16.msra.mxu0 0
        %1369 = vmatprep.mubr.bf16.mxu0 0
        %1370 = vmatmul.mubr.bf16.gmra.mrb[0].mxu0 %v1335
        %v1371 = vpop.f32.mrb[0].mxu0
        %v1372 = vadd.f32 0.0, %v1371
        %v1373 = vpop.f32.mrb[0].mxu0
        %v1374 = vpop.f32.mrb[0].mxu0
        %v1375 = vpop.f32.mrb[0].mxu0
        %1376 = vdwg.mxu0
        %v1378 = vrot.slane %v1372, 4
        %v1379 = vrot.slane %v1372, 5
        %v1380 = vrot.slane %v1372, 6
        %v1381 = vrot.slane %v1372, 7
        %v1386 = vadd.f32 %v481, %v1378
        %v1387 = vadd.f32 %v484, %v1379
        %v1388 = vadd.f32 %v489, %v1380
        %v1389 = vadd.f32 %v492, %v1381
        %v1390 = vxor.u32 %v1386, 2147483648
        %v1391 = vxor.u32 %v1387, 2147483648
        %v1392 = vxor.u32 %v1388, 2147483648
        %v1393 = vxor.u32 %v1389, 2147483648
        %v1394 = vmul.f32 %v1390, 1.442695
        %v1395 = vpow.pop %v1394
        %v1396 = vmul.f32 %v1391, 1.442695
        %v1397 = vpow.pop %v1396
        %v1398 = vmul.f32 %v1392, 1.442695
        %v1399 = vpow.pop %v1398
        %v1400 = vmul.f32 %v1393, 1.442695
        %v1401 = vpow.pop %v1400
        %v1402 = vadd.f32 %v1395, 1.0
        %v1403 = vadd.f32 %v1397, 1.0
        %v1404 = vadd.f32 %v1399, 1.0
        %v1405 = vadd.f32 %v1401, 1.0
        %v1406 = vrcp.pop %v1402
        %v1407 = vmul.f32 1.0, %v1406
        %v1408 = vrcp.pop %v1403
        %v1409 = vmul.f32 1.0, %v1408
        %v1410 = vrcp.pop %v1404
        %v1411 = vmul.f32 1.0, %v1410
        %v1412 = vrcp.pop %v1405
        %v1413 = vmul.f32 1.0, %v1412
        %v1414 = vtanh.pop %v1386
        %v1415 = vtanh.pop %v1387
        %v1416 = vtanh.pop %v1388
        %v1417 = vtanh.pop %v1389
        %v1422 = vrot.slane %v1285, 7
        %v1423 = vrot.slane %v1286, 7
        %v1424 = vrot.slane %v1287, 7
        %v1425 = vrot.slane %v1288, 7
        %v1430 = vmul.f32 %v1407, %v1422
        %v1431 = vmul.f32 %v1409, %v1423
        %v1432 = vmul.f32 %v1411, %v1424
        %v1433 = vmul.f32 %v1413, %v1425
        %1438 = vrot.lane.b32.xlu0 %v1414, 64
        %v1439 = vpop.permute.xlu0 %1438
        %1440 = vrot.lane.b32.xlu0 %v1415, 64
        %v1441 = vpop.permute.xlu0 %1440
        %1442 = vrot.lane.b32.xlu0 %v1416, 64
        %v1443 = vpop.permute.xlu0 %1442
        %1444 = vrot.lane.b32.xlu0 %v1417, 64
        %v1445 = vpop.permute.xlu0 %1444
        %v1450 = vmul.f32 %v1407, %v1439
        %v1451 = vmul.f32 %v1409, %v1441
        %v1452 = vmul.f32 %v1411, %v1443
        %v1453 = vmul.f32 %v1413, %v1445
        %1458 = vrot.lane.b32.xlu0 %v1450, 32
        %v1459 = vpop.permute.xlu0 %1458
        %1460 = vrot.lane.b32.xlu0 %v1451, 32
        %v1461 = vpop.permute.xlu0 %1460
        %1462 = vrot.lane.b32.xlu0 %v1452, 32
        %v1463 = vpop.permute.xlu0 %1462
        %1464 = vrot.lane.b32.xlu0 %v1453, 32
        %v1465 = vpop.permute.xlu0 %1464
        %v1470 = vadd.f32 %v1430, %v1459
        %v1471 = vadd.f32 %v1431, %v1461
        %v1472 = vadd.f32 %v1432, %v1463
        %v1473 = vadd.f32 %v1433, %v1465
        %v1474 = vtanh.pop %v1470
        %v1475 = vtanh.pop %v1471
        %v1476 = vtanh.pop %v1472
        %v1477 = vtanh.pop %v1473
        %1482 = vrot.lane.b32.xlu0 %v1474, 64
        %v1483 = vpop.permute.xlu0 %1482
        %1484 = vrot.lane.b32.xlu0 %v1475, 64
        %v1485 = vpop.permute.xlu0 %1484
        %1486 = vrot.lane.b32.xlu0 %v1476, 64
        %v1487 = vpop.permute.xlu0 %1486
        %1488 = vrot.lane.b32.xlu0 %v1477, 64
        %v1489 = vpop.permute.xlu0 %1488
        %v1494 = vmul.f32 %v1407, %v1483
        %v1495 = vmul.f32 %v1409, %v1485
        %v1496 = vmul.f32 %v1411, %v1487
        %v1497 = vmul.f32 %v1413, %v1489
        %v1498 = vpack.c.bf16 %v1494, %v1494
        %v1499 = vpack.c.bf16 %v1495, %v1495
        %v1500 = vpack.c.bf16 %v1496, %v1496
        %v1501 = vpack.c.bf16 %v1497, %v1497
        %v1506 = vunpack.c.l.b16 %v1498
        %v1507 = vunpack.c.l.b16 %v1499
        %v1508 = vunpack.c.l.b16 %v1500
        %v1509 = vunpack.c.l.b16 %v1501
        %v1510 = vrot.slane %v1506, 4
        %v1511 = vrot.slane %v1507, 3
        %v1512 = vsel %vm771, %v1511, %v1510
        %v1513 = vrot.slane %v1508, 2
        %v1514 = vsel %vm774, %v1513, %v1512
        %v1515 = vrot.slane %v1509, 1
        %v1516 = vsel %vm777, %v1515, %v1514
        %v1517 = vpack.c.b16 %v1516, %v1516
        %1518 = vrot.lane.b32.xlu0 %v1517, 32
        %v1519 = vpop.permute.xlu0 %1518
        %v1521 = vsel %vm439, %v1519, 0
        %1523 = vmatprep.subr.bf16.mxu0 0
        %1524 = vmatpush1.bf16.msra.mxu0 %v603
        %1525 = vmatprep.subr.bf16.mxu0 0
        %1526 = vmatpush1.bf16.msra.mxu0 %v604
        %1527 = vmatprep.subr.bf16.mxu0 0
        %1528 = vmatpush1.bf16.msra.mxu0 0
        %1529 = vmatprep.subr.bf16.mxu0 0
        %1530 = vmatpush1.bf16.msra.mxu0 0
        %1531 = vmatprep.subr.bf16.mxu0 0
        %1532 = vmatpush1.bf16.msra.mxu0 0
        %1533 = vmatprep.subr.bf16.mxu0 0
        %1534 = vmatpush1.bf16.msra.mxu0 0
        %1535 = vmatprep.subr.bf16.mxu0 0
        %1536 = vmatpush1.bf16.msra.mxu0 0
        %1537 = vmatprep.subr.bf16.mxu0 0
        %1538 = vmatpush1.bf16.msra.mxu0 0
        %1539 = vmatprep.subr.bf16.mxu0 0
        %1540 = vmatpush1.bf16.msra.mxu0 0
        %1541 = vmatprep.subr.bf16.mxu0 0
        %1542 = vmatpush1.bf16.msra.mxu0 0
        %1543 = vmatprep.subr.bf16.mxu0 0
        %1544 = vmatpush1.bf16.msra.mxu0 0
        %1545 = vmatprep.subr.bf16.mxu0 0
        %1546 = vmatpush1.bf16.msra.mxu0 0
        %1547 = vmatprep.subr.bf16.mxu0 0
        %1548 = vmatpush1.bf16.msra.mxu0 0
        %1549 = vmatprep.subr.bf16.mxu0 0
        %1550 = vmatpush1.bf16.msra.mxu0 0
        %1551 = vmatprep.subr.bf16.mxu0 0
        %1552 = vmatpush1.bf16.msra.mxu0 0
        %1553 = vmatprep.subr.bf16.mxu0 0
        %1554 = vmatpush1.bf16.msra.mxu0 0
        %1555 = vmatprep.mubr.bf16.mxu0 0
        %1556 = vmatmul.mubr.bf16.gmra.mrb[0].mxu0 %v1521
        %v1557 = vpop.f32.mrb[0].mxu0
        %v1558 = vadd.f32 0.0, %v1557
        %v1559 = vpop.f32.mrb[0].mxu0
        %v1560 = vpop.f32.mrb[0].mxu0
        %v1561 = vpop.f32.mrb[0].mxu0
        %1562 = vdwg.mxu0
        %v1564 = vrot.slane %v1558, 3
        %v1565 = vrot.slane %v1558, 4
        %v1566 = vrot.slane %v1558, 5
        %v1567 = vrot.slane %v1558, 6
        %v1572 = vadd.f32 %v481, %v1564
        %v1573 = vadd.f32 %v484, %v1565
        %v1574 = vadd.f32 %v489, %v1566
        %v1575 = vadd.f32 %v492, %v1567
        %v1576 = vxor.u32 %v1572, 2147483648
        %v1577 = vxor.u32 %v1573, 2147483648
        %v1578 = vxor.u32 %v1574, 2147483648
        %v1579 = vxor.u32 %v1575, 2147483648
        %v1580 = vmul.f32 %v1576, 1.442695
        %v1581 = vpow.pop %v1580
        %v1582 = vmul.f32 %v1577, 1.442695
        %v1583 = vpow.pop %v1582
        %v1584 = vmul.f32 %v1578, 1.442695
        %v1585 = vpow.pop %v1584
        %v1586 = vmul.f32 %v1579, 1.442695
        %v1587 = vpow.pop %v1586
        %v1588 = vadd.f32 %v1581, 1.0
        %v1589 = vadd.f32 %v1583, 1.0
        %v1590 = vadd.f32 %v1585, 1.0
        %v1591 = vadd.f32 %v1587, 1.0
        %v1592 = vrcp.pop %v1588
        %v1593 = vmul.f32 1.0, %v1592
        %v1594 = vrcp.pop %v1589
        %v1595 = vmul.f32 1.0, %v1594
        %v1596 = vrcp.pop %v1590
        %v1597 = vmul.f32 1.0, %v1596
        %v1598 = vrcp.pop %v1591
        %v1599 = vmul.f32 1.0, %v1598
        %v1600 = vtanh.pop %v1572
        %v1601 = vtanh.pop %v1573
        %v1602 = vtanh.pop %v1574
        %v1603 = vtanh.pop %v1575
        %v1608 = vrot.slane %v1470, 7
        %v1609 = vrot.slane %v1471, 7
        %v1610 = vrot.slane %v1472, 7
        %v1611 = vrot.slane %v1473, 7
        %v1616 = vmul.f32 %v1593, %v1608
        %v1617 = vmul.f32 %v1595, %v1609
        %v1618 = vmul.f32 %v1597, %v1610
        %v1619 = vmul.f32 %v1599, %v1611
        %1624 = vrot.lane.b32.xlu0 %v1600, 64
        %v1625 = vpop.permute.xlu0 %1624
        %1626 = vrot.lane.b32.xlu0 %v1601, 64
        %v1627 = vpop.permute.xlu0 %1626
        %1628 = vrot.lane.b32.xlu0 %v1602, 64
        %v1629 = vpop.permute.xlu0 %1628
        %1630 = vrot.lane.b32.xlu0 %v1603, 64
        %v1631 = vpop.permute.xlu0 %1630
        %v1636 = vmul.f32 %v1593, %v1625
        %v1637 = vmul.f32 %v1595, %v1627
        %v1638 = vmul.f32 %v1597, %v1629
        %v1639 = vmul.f32 %v1599, %v1631
        %1644 = vrot.lane.b32.xlu0 %v1636, 32
        %v1645 = vpop.permute.xlu0 %1644
        %1646 = vrot.lane.b32.xlu0 %v1637, 32
        %v1647 = vpop.permute.xlu0 %1646
        %1648 = vrot.lane.b32.xlu0 %v1638, 32
        %v1649 = vpop.permute.xlu0 %1648
        %1650 = vrot.lane.b32.xlu0 %v1639, 32
        %v1651 = vpop.permute.xlu0 %1650
        %v1656 = vadd.f32 %v1616, %v1645
        %v1657 = vadd.f32 %v1617, %v1647
        %v1658 = vadd.f32 %v1618, %v1649
        %v1659 = vadd.f32 %v1619, %v1651
        %v1660 = vtanh.pop %v1656
        %v1661 = vtanh.pop %v1657
        %v1662 = vtanh.pop %v1658
        %v1663 = vtanh.pop %v1659
        %1668 = vrot.lane.b32.xlu0 %v1660, 64
        %v1669 = vpop.permute.xlu0 %1668
        %1670 = vrot.lane.b32.xlu0 %v1661, 64
        %v1671 = vpop.permute.xlu0 %1670
        %1672 = vrot.lane.b32.xlu0 %v1662, 64
        %v1673 = vpop.permute.xlu0 %1672
        %1674 = vrot.lane.b32.xlu0 %v1663, 64
        %v1675 = vpop.permute.xlu0 %1674
        %v1680 = vmul.f32 %v1593, %v1669
        %v1681 = vmul.f32 %v1595, %v1671
        %v1682 = vmul.f32 %v1597, %v1673
        %v1683 = vmul.f32 %v1599, %v1675
        %v1684 = vpack.c.bf16 %v1680, %v1680
        %v1685 = vpack.c.bf16 %v1681, %v1681
        %v1686 = vpack.c.bf16 %v1682, %v1682
        %v1687 = vpack.c.bf16 %v1683, %v1683
        %v1692 = vunpack.c.l.b16 %v1684
        %v1693 = vunpack.c.l.b16 %v1685
        %v1694 = vunpack.c.l.b16 %v1686
        %v1695 = vunpack.c.l.b16 %v1687
        %v1696 = vrot.slane %v1692, 5
        %v1697 = vrot.slane %v1693, 4
        %v1698 = vsel %vm771, %v1697, %v1696
        %v1699 = vrot.slane %v1694, 3
        %v1700 = vsel %vm774, %v1699, %v1698
        %v1701 = vrot.slane %v1695, 2
        %v1702 = vsel %vm777, %v1701, %v1700
        %v1703 = vpack.c.b16 %v1702, %v1702
        %1704 = vrot.lane.b32.xlu0 %v1703, 32
        %v1705 = vpop.permute.xlu0 %1704
        %v1707 = vsel %vm439, %v1705, 0
        %1709 = vmatprep.subr.bf16.mxu0 0
        %1710 = vmatpush1.bf16.msra.mxu0 %v603
        %1711 = vmatprep.subr.bf16.mxu0 0
        %1712 = vmatpush1.bf16.msra.mxu0 %v604
        %1713 = vmatprep.subr.bf16.mxu0 0
        %1714 = vmatpush1.bf16.msra.mxu0 0
        %1715 = vmatprep.subr.bf16.mxu0 0
        %1716 = vmatpush1.bf16.msra.mxu0 0
        %1717 = vmatprep.subr.bf16.mxu0 0
        %1718 = vmatpush1.bf16.msra.mxu0 0
        %1719 = vmatprep.subr.bf16.mxu0 0
        %1720 = vmatpush1.bf16.msra.mxu0 0
        %1721 = vmatprep.subr.bf16.mxu0 0
        %1722 = vmatpush1.bf16.msra.mxu0 0
        %1723 = vmatprep.subr.bf16.mxu0 0
        %1724 = vmatpush1.bf16.msra.mxu0 0
        %1725 = vmatprep.subr.bf16.mxu0 0
        %1726 = vmatpush1.bf16.msra.mxu0 0
        %1727 = vmatprep.subr.bf16.mxu0 0
        %1728 = vmatpush1.bf16.msra.mxu0 0
        %1729 = vmatprep.subr.bf16.mxu0 0
        %1730 = vmatpush1.bf16.msra.mxu0 0
        %1731 = vmatprep.subr.bf16.mxu0 0
        %1732 = vmatpush1.bf16.msra.mxu0 0
        %1733 = vmatprep.subr.bf16.mxu0 0
        %1734 = vmatpush1.bf16.msra.mxu0 0
        %1735 = vmatprep.subr.bf16.mxu0 0
        %1736 = vmatpush1.bf16.msra.mxu0 0
        %1737 = vmatprep.subr.bf16.mxu0 0
        %1738 = vmatpush1.bf16.msra.mxu0 0
        %1739 = vmatprep.subr.bf16.mxu0 0
        %1740 = vmatpush1.bf16.msra.mxu0 0
        %1741 = vmatprep.mubr.bf16.mxu0 0
        %1742 = vmatmul.mubr.bf16.gmra.mrb[0].mxu0 %v1707
        %v1743 = vpop.f32.mrb[0].mxu0
        %v1744 = vadd.f32 0.0, %v1743
        %v1745 = vpop.f32.mrb[0].mxu0
        %v1746 = vpop.f32.mrb[0].mxu0
        %v1747 = vpop.f32.mrb[0].mxu0
        %1748 = vdwg.mxu0
        %v1750 = vrot.slane %v1744, 2
        %v1751 = vrot.slane %v1744, 3
        %v1752 = vrot.slane %v1744, 4
        %v1753 = vrot.slane %v1744, 5
        %v1758 = vadd.f32 %v481, %v1750
        %v1759 = vadd.f32 %v484, %v1751
        %v1760 = vadd.f32 %v489, %v1752
        %v1761 = vadd.f32 %v492, %v1753
        %v1762 = vxor.u32 %v1758, 2147483648
        %v1763 = vxor.u32 %v1759, 2147483648
        %v1764 = vxor.u32 %v1760, 2147483648
        %v1765 = vxor.u32 %v1761, 2147483648
        %v1766 = vmul.f32 %v1762, 1.442695
        %v1767 = vpow.pop %v1766
        %v1768 = vmul.f32 %v1763, 1.442695
        %v1769 = vpow.pop %v1768
        %v1770 = vmul.f32 %v1764, 1.442695
        %v1771 = vpow.pop %v1770
        %v1772 = vmul.f32 %v1765, 1.442695
        %v1773 = vpow.pop %v1772
        %v1774 = vadd.f32 %v1767, 1.0
        %v1775 = vadd.f32 %v1769, 1.0
        %v1776 = vadd.f32 %v1771, 1.0
        %v1777 = vadd.f32 %v1773, 1.0
        %v1778 = vrcp.pop %v1774
        %v1779 = vmul.f32 1.0, %v1778
        %v1780 = vrcp.pop %v1775
        %v1781 = vmul.f32 1.0, %v1780
        %v1782 = vrcp.pop %v1776
        %v1783 = vmul.f32 1.0, %v1782
        %v1784 = vrcp.pop %v1777
        %v1785 = vmul.f32 1.0, %v1784
        %v1786 = vtanh.pop %v1758
        %v1787 = vtanh.pop %v1759
        %v1788 = vtanh.pop %v1760
        %v1789 = vtanh.pop %v1761
        %v1794 = vrot.slane %v1656, 7
        %v1795 = vrot.slane %v1657, 7
        %v1796 = vrot.slane %v1658, 7
        %v1797 = vrot.slane %v1659, 7
        %v1802 = vmul.f32 %v1779, %v1794
        %v1803 = vmul.f32 %v1781, %v1795
        %v1804 = vmul.f32 %v1783, %v1796
        %v1805 = vmul.f32 %v1785, %v1797
        %1810 = vrot.lane.b32.xlu0 %v1786, 64
        %v1811 = vpop.permute.xlu0 %1810
        %1812 = vrot.lane.b32.xlu0 %v1787, 64
        %v1813 = vpop.permute.xlu0 %1812
        %1814 = vrot.lane.b32.xlu0 %v1788, 64
        %v1815 = vpop.permute.xlu0 %1814
        %1816 = vrot.lane.b32.xlu0 %v1789, 64
        %v1817 = vpop.permute.xlu0 %1816
        %v1822 = vmul.f32 %v1779, %v1811
        %v1823 = vmul.f32 %v1781, %v1813
        %v1824 = vmul.f32 %v1783, %v1815
        %v1825 = vmul.f32 %v1785, %v1817
        %1830 = vrot.lane.b32.xlu0 %v1822, 32
        %v1831 = vpop.permute.xlu0 %1830
        %1832 = vrot.lane.b32.xlu0 %v1823, 32
        %v1833 = vpop.permute.xlu0 %1832
        %1834 = vrot.lane.b32.xlu0 %v1824, 32
        %v1835 = vpop.permute.xlu0 %1834
        %1836 = vrot.lane.b32.xlu0 %v1825, 32
        %v1837 = vpop.permute.xlu0 %1836
        %v1842 = vadd.f32 %v1802, %v1831
        %v1843 = vadd.f32 %v1803, %v1833
        %v1844 = vadd.f32 %v1804, %v1835
        %v1845 = vadd.f32 %v1805, %v1837
        %v1846 = vtanh.pop %v1842
        %v1847 = vtanh.pop %v1843
        %v1848 = vtanh.pop %v1844
        %v1849 = vtanh.pop %v1845
        %1854 = vrot.lane.b32.xlu0 %v1846, 64
        %v1855 = vpop.permute.xlu0 %1854
        %1856 = vrot.lane.b32.xlu0 %v1847, 64
        %v1857 = vpop.permute.xlu0 %1856
        %1858 = vrot.lane.b32.xlu0 %v1848, 64
        %v1859 = vpop.permute.xlu0 %1858
        %1860 = vrot.lane.b32.xlu0 %v1849, 64
        %v1861 = vpop.permute.xlu0 %1860
        %v1866 = vmul.f32 %v1779, %v1855
        %v1867 = vmul.f32 %v1781, %v1857
        %v1868 = vmul.f32 %v1783, %v1859
        %v1869 = vmul.f32 %v1785, %v1861
        %v1870 = vpack.c.bf16 %v1866, %v1866
        %v1871 = vpack.c.bf16 %v1867, %v1867
        %v1872 = vpack.c.bf16 %v1868, %v1868
        %v1873 = vpack.c.bf16 %v1869, %v1869
        %v1878 = vunpack.c.l.b16 %v1870
        %v1879 = vunpack.c.l.b16 %v1871
        %v1880 = vunpack.c.l.b16 %v1872
        %v1881 = vunpack.c.l.b16 %v1873
        %v1882 = vrot.slane %v1878, 6
        %v1883 = vrot.slane %v1879, 5
        %v1884 = vsel %vm771, %v1883, %v1882
        %v1885 = vrot.slane %v1880, 4
        %v1886 = vsel %vm774, %v1885, %v1884
        %v1887 = vrot.slane %v1881, 3
        %v1888 = vsel %vm777, %v1887, %v1886
        %v1889 = vpack.c.b16 %v1888, %v1888
        %1890 = vrot.lane.b32.xlu0 %v1889, 32
        %v1891 = vpop.permute.xlu0 %1890
        %v1893 = vsel %vm439, %v1891, 0
        %1895 = vmatprep.subr.bf16.mxu0 0
        %1896 = vmatpush1.bf16.msra.mxu0 %v603
        %1897 = vmatprep.subr.bf16.mxu0 0
        %1898 = vmatpush1.bf16.msra.mxu0 %v604
        %1899 = vmatprep.subr.bf16.mxu0 0
        %1900 = vmatpush1.bf16.msra.mxu0 0
        %1901 = vmatprep.subr.bf16.mxu0 0
        %1902 = vmatpush1.bf16.msra.mxu0 0
        %1903 = vmatprep.subr.bf16.mxu0 0
        %1904 = vmatpush1.bf16.msra.mxu0 0
        %1905 = vmatprep.subr.bf16.mxu0 0
        %1906 = vmatpush1.bf16.msra.mxu0 0
        %1907 = vmatprep.subr.bf16.mxu0 0
        %1908 = vmatpush1.bf16.msra.mxu0 0
        %1909 = vmatprep.subr.bf16.mxu0 0
        %1910 = vmatpush1.bf16.msra.mxu0 0
        %1911 = vmatprep.subr.bf16.mxu0 0
        %1912 = vmatpush1.bf16.msra.mxu0 0
        %1913 = vmatprep.subr.bf16.mxu0 0
        %1914 = vmatpush1.bf16.msra.mxu0 0
        %1915 = vmatprep.subr.bf16.mxu0 0
        %1916 = vmatpush1.bf16.msra.mxu0 0
        %1917 = vmatprep.subr.bf16.mxu0 0
        %1918 = vmatpush1.bf16.msra.mxu0 0
        %1919 = vmatprep.subr.bf16.mxu0 0
        %1920 = vmatpush1.bf16.msra.mxu0 0
        %1921 = vmatprep.subr.bf16.mxu0 0
        %1922 = vmatpush1.bf16.msra.mxu0 0
        %1923 = vmatprep.subr.bf16.mxu0 0
        %1924 = vmatpush1.bf16.msra.mxu0 0
        %1925 = vmatprep.subr.bf16.mxu0 0
        %1926 = vmatpush1.bf16.msra.mxu0 0
        %1927 = vmatprep.mubr.bf16.mxu0 0
        %1928 = vmatmul.mubr.bf16.gmra.mrb[0].mxu0 %v1893
        %v1929 = vpop.f32.mrb[0].mxu0
        %v1930 = vadd.f32 0.0, %v1929
        %v1931 = vpop.f32.mrb[0].mxu0
        %v1932 = vpop.f32.mrb[0].mxu0
        %v1933 = vpop.f32.mrb[0].mxu0
        %1934 = vdwg.mxu0
        %v1936 = vrot.slane %v1930, 1
        %v1937 = vrot.slane %v1930, 2
        %v1938 = vrot.slane %v1930, 3
        %v1939 = vrot.slane %v1930, 4
        %v1944 = vadd.f32 %v481, %v1936
        %v1945 = vadd.f32 %v484, %v1937
        %v1946 = vadd.f32 %v489, %v1938
        %v1947 = vadd.f32 %v492, %v1939
        %v1948 = vxor.u32 %v1944, 2147483648
        %v1949 = vxor.u32 %v1945, 2147483648
        %v1950 = vxor.u32 %v1946, 2147483648
        %v1951 = vxor.u32 %v1947, 2147483648
        %v1952 = vmul.f32 %v1948, 1.442695
        %v1953 = vpow.pop %v1952
        %v1954 = vmul.f32 %v1949, 1.442695
        %v1955 = vpow.pop %v1954
        %v1956 = vmul.f32 %v1950, 1.442695
        %v1957 = vpow.pop %v1956
        %v1958 = vmul.f32 %v1951, 1.442695
        %v1959 = vpow.pop %v1958
        %v1960 = vadd.f32 %v1953, 1.0
        %v1961 = vadd.f32 %v1955, 1.0
        %v1962 = vadd.f32 %v1957, 1.0
        %v1963 = vadd.f32 %v1959, 1.0
        %v1964 = vrcp.pop %v1960
        %v1965 = vmul.f32 1.0, %v1964
        %v1966 = vrcp.pop %v1961
        %v1967 = vmul.f32 1.0, %v1966
        %v1968 = vrcp.pop %v1962
        %v1969 = vmul.f32 1.0, %v1968
        %v1970 = vrcp.pop %v1963
        %v1971 = vmul.f32 1.0, %v1970
        %v1972 = vtanh.pop %v1944
        %v1973 = vtanh.pop %v1945
        %v1974 = vtanh.pop %v1946
        %v1975 = vtanh.pop %v1947
        %v1980 = vrot.slane %v1842, 7
        %v1981 = vrot.slane %v1843, 7
        %v1982 = vrot.slane %v1844, 7
        %v1983 = vrot.slane %v1845, 7
        %v1988 = vmul.f32 %v1965, %v1980
        %v1989 = vmul.f32 %v1967, %v1981
        %v1990 = vmul.f32 %v1969, %v1982
        %v1991 = vmul.f32 %v1971, %v1983
        %1996 = vrot.lane.b32.xlu0 %v1972, 64
        %v1997 = vpop.permute.xlu0 %1996
        %1998 = vrot.lane.b32.xlu0 %v1973, 64
        %v1999 = vpop.permute.xlu0 %1998
        %2000 = vrot.lane.b32.xlu0 %v1974, 64
        %v2001 = vpop.permute.xlu0 %2000
        %2002 = vrot.lane.b32.xlu0 %v1975, 64
        %v2003 = vpop.permute.xlu0 %2002
        %v2008 = vmul.f32 %v1965, %v1997
        %v2009 = vmul.f32 %v1967, %v1999
        %v2010 = vmul.f32 %v1969, %v2001
        %v2011 = vmul.f32 %v1971, %v2003
        %2016 = vrot.lane.b32.xlu0 %v2008, 32
        %v2017 = vpop.permute.xlu0 %2016
        %2018 = vrot.lane.b32.xlu0 %v2009, 32
        %v2019 = vpop.permute.xlu0 %2018
        %2020 = vrot.lane.b32.xlu0 %v2010, 32
        %v2021 = vpop.permute.xlu0 %2020
        %2022 = vrot.lane.b32.xlu0 %v2011, 32
        %v2023 = vpop.permute.xlu0 %2022
        %v2028 = vadd.f32 %v1988, %v2017
        %v2029 = vadd.f32 %v1989, %v2019
        %v2030 = vadd.f32 %v1990, %v2021
        %v2031 = vadd.f32 %v1991, %v2023
        %v2032 = vtanh.pop %v2028
        %v2033 = vtanh.pop %v2029
        %v2034 = vtanh.pop %v2030
        %v2035 = vtanh.pop %v2031
        %2040 = vrot.lane.b32.xlu0 %v2032, 64
        %v2041 = vpop.permute.xlu0 %2040
        %2042 = vrot.lane.b32.xlu0 %v2033, 64
        %v2043 = vpop.permute.xlu0 %2042
        %2044 = vrot.lane.b32.xlu0 %v2034, 64
        %v2045 = vpop.permute.xlu0 %2044
        %2046 = vrot.lane.b32.xlu0 %v2035, 64
        %v2047 = vpop.permute.xlu0 %2046
        %v2052 = vmul.f32 %v1965, %v2041
        %v2053 = vmul.f32 %v1967, %v2043
        %v2054 = vmul.f32 %v1969, %v2045
        %v2055 = vmul.f32 %v1971, %v2047
        %v2056 = vpack.c.bf16 %v2052, %v2052
        %v2057 = vpack.c.bf16 %v2053, %v2053
        %v2058 = vpack.c.bf16 %v2054, %v2054
        %v2059 = vpack.c.bf16 %v2055, %v2055
        %v2064 = vunpack.c.l.b16 %v2056
        %v2065 = vunpack.c.l.b16 %v2057
        %v2066 = vunpack.c.l.b16 %v2058
        %v2067 = vunpack.c.l.b16 %v2059
        %v2068 = vrot.slane %v2064, 7
        %v2069 = vrot.slane %v2065, 6
        %v2070 = vsel %vm771, %v2069, %v2068
        %v2071 = vrot.slane %v2066, 5
        %v2072 = vsel %vm774, %v2071, %v2070
        %v2073 = vrot.slane %v2067, 4
        %v2074 = vsel %vm777, %v2073, %v2072
        %v2075 = vpack.c.b16 %v2074, %v2074
        %2076 = vrot.lane.b32.xlu0 %v2075, 32
        %v2077 = vpop.permute.xlu0 %2076
        %v2082 = vunpack.c.l.b16 %v591
        %v2083 = vunpack.c.l.b16 %v592
        %v2084 = vunpack.c.l.b16 %v593
        %v2085 = vunpack.c.l.b16 %v594
        %v2086 = vpack.c.b16 %v2083, %v2082
        %v2087 = vpack.c.b16 %v2085, %v2084
        %v2091 = vsel %vm439, %v2077, 0
        %2093 = vmatprep.subr.bf16.mxu0 0
        %2094 = vmatpush1.bf16.msra.mxu0 %v2086
        %2095 = vmatprep.subr.bf16.mxu0 0
        %2096 = vmatpush1.bf16.msra.mxu0 %v2087
        %2097 = vmatprep.subr.bf16.mxu0 0
        %2098 = vmatpush1.bf16.msra.mxu0 0
        %2099 = vmatprep.subr.bf16.mxu0 0
        %2100 = vmatpush1.bf16.msra.mxu0 0
        %2101 = vmatprep.subr.bf16.mxu0 0
        %2102 = vmatpush1.bf16.msra.mxu0 0
        %2103 = vmatprep.subr.bf16.mxu0 0
        %2104 = vmatpush1.bf16.msra.mxu0 0
        %2105 = vmatprep.subr.bf16.mxu0 0
        %2106 = vmatpush1.bf16.msra.mxu0 0
        %2107 = vmatprep.subr.bf16.mxu0 0
        %2108 = vmatpush1.bf16.msra.mxu0 0
        %2109 = vmatprep.subr.bf16.mxu0 0
        %2110 = vmatpush1.bf16.msra.mxu0 0
        %2111 = vmatprep.subr.bf16.mxu0 0
        %2112 = vmatpush1.bf16.msra.mxu0 0
        %2113 = vmatprep.subr.bf16.mxu0 0
        %2114 = vmatpush1.bf16.msra.mxu0 0
        %2115 = vmatprep.subr.bf16.mxu0 0
        %2116 = vmatpush1.bf16.msra.mxu0 0
        %2117 = vmatprep.subr.bf16.mxu0 0
        %2118 = vmatpush1.bf16.msra.mxu0 0
        %2119 = vmatprep.subr.bf16.mxu0 0
        %2120 = vmatpush1.bf16.msra.mxu0 0
        %2121 = vmatprep.subr.bf16.mxu0 0
        %2122 = vmatpush1.bf16.msra.mxu0 0
        %2123 = vmatprep.subr.bf16.mxu0 0
        %2124 = vmatpush1.bf16.msra.mxu0 0
        %2125 = vmatprep.mubr.bf16.mxu0 0
        %2126 = vmatmul.mubr.bf16.gmra.mrb[0].mxu0 %v2091
        %v2127 = vpop.f32.mrb[0].mxu0
        %v2128 = vadd.f32 0.0, %v2127
        %v2129 = vpop.f32.mrb[0].mxu0
        %v2130 = vpop.f32.mrb[0].mxu0
        %v2131 = vpop.f32.mrb[0].mxu0
        %2132 = vdwg.mxu0
        %v2134 = vrot.slane %v2128, 1
        %v2135 = vrot.slane %v2128, 2
        %v2136 = vrot.slane %v2128, 3
        %v2141 = vadd.f32 %v573, %v2128
        %v2142 = vadd.f32 %v576, %v2134
        %v2143 = vadd.f32 %v581, %v2135
        %v2144 = vadd.f32 %v584, %v2136
        %v2145 = vxor.u32 %v2141, 2147483648
        %v2146 = vxor.u32 %v2142, 2147483648
        %v2147 = vxor.u32 %v2143, 2147483648
        %v2148 = vxor.u32 %v2144, 2147483648
        %v2149 = vmul.f32 %v2145, 1.442695
        %v2150 = vpow.pop %v2149
        %v2151 = vmul.f32 %v2146, 1.442695
        %v2152 = vpow.pop %v2151
        %v2153 = vmul.f32 %v2147, 1.442695
        %v2154 = vpow.pop %v2153
        %v2155 = vmul.f32 %v2148, 1.442695
        %v2156 = vpow.pop %v2155
        %v2157 = vadd.f32 %v2150, 1.0
        %v2158 = vadd.f32 %v2152, 1.0
        %v2159 = vadd.f32 %v2154, 1.0
        %v2160 = vadd.f32 %v2156, 1.0
        %v2161 = vrcp.pop %v2157
        %v2162 = vmul.f32 1.0, %v2161
        %v2163 = vrcp.pop %v2158
        %v2164 = vmul.f32 1.0, %v2163
        %v2165 = vrcp.pop %v2159
        %v2166 = vmul.f32 1.0, %v2165
        %v2167 = vrcp.pop %v2160
        %v2168 = vmul.f32 1.0, %v2167
        %v2169 = vtanh.pop %v2141
        %v2170 = vtanh.pop %v2142
        %v2171 = vtanh.pop %v2143
        %v2172 = vtanh.pop %v2144
        %v2177 = vrot.slane %v2028, 7
        %v2178 = vrot.slane %v2029, 7
        %v2179 = vrot.slane %v2030, 7
        %v2180 = vrot.slane %v2031, 7
        %v2185 = vmul.f32 %v2162, %v2177
        %v2186 = vmul.f32 %v2164, %v2178
        %v2187 = vmul.f32 %v2166, %v2179
        %v2188 = vmul.f32 %v2168, %v2180
        %2193 = vrot.lane.b32.xlu0 %v2169, 64
        %v2194 = vpop.permute.xlu0 %2193
        %2195 = vrot.lane.b32.xlu0 %v2170, 64
        %v2196 = vpop.permute.xlu0 %2195
        %2197 = vrot.lane.b32.xlu0 %v2171, 64
        %v2198 = vpop.permute.xlu0 %2197
        %2199 = vrot.lane.b32.xlu0 %v2172, 64
        %v2200 = vpop.permute.xlu0 %2199
        %v2205 = vmul.f32 %v2162, %v2194
        %v2206 = vmul.f32 %v2164, %v2196
        %v2207 = vmul.f32 %v2166, %v2198
        %v2208 = vmul.f32 %v2168, %v2200
        %2213 = vrot.lane.b32.xlu0 %v2205, 32
        %v2214 = vpop.permute.xlu0 %2213
        %2215 = vrot.lane.b32.xlu0 %v2206, 32
        %v2216 = vpop.permute.xlu0 %2215
        %2217 = vrot.lane.b32.xlu0 %v2207, 32
        %v2218 = vpop.permute.xlu0 %2217
        %2219 = vrot.lane.b32.xlu0 %v2208, 32
        %v2220 = vpop.permute.xlu0 %2219
        %v2225 = vadd.f32 %v2185, %v2214
        %v2226 = vadd.f32 %v2186, %v2216
        %v2227 = vadd.f32 %v2187, %v2218
        %v2228 = vadd.f32 %v2188, %v2220
        %v2229 = vtanh.pop %v2225
        %v2230 = vtanh.pop %v2226
        %v2231 = vtanh.pop %v2227
        %v2232 = vtanh.pop %v2228
        %2237 = vrot.lane.b32.xlu0 %v2229, 64
        %v2238 = vpop.permute.xlu0 %2237
        %2239 = vrot.lane.b32.xlu0 %v2230, 64
        %v2240 = vpop.permute.xlu0 %2239
        %2241 = vrot.lane.b32.xlu0 %v2231, 64
        %v2242 = vpop.permute.xlu0 %2241
        %2243 = vrot.lane.b32.xlu0 %v2232, 64
        %v2244 = vpop.permute.xlu0 %2243
        %v2249 = vmul.f32 %v2162, %v2238
        %v2250 = vmul.f32 %v2164, %v2240
        %v2251 = vmul.f32 %v2166, %v2242
        %v2252 = vmul.f32 %v2168, %v2244
        %2257 = vrot.lane.b32.xlu0 %v2249, 32
        %v2258 = vpop.permute.xlu0 %2257
        %2259 = vrot.lane.b32.xlu0 %v2250, 32
        %v2260 = vpop.permute.xlu0 %2259
        %2261 = vrot.lane.b32.xlu0 %v2251, 32
        %v2262 = vpop.permute.xlu0 %2261
        %2263 = vrot.lane.b32.xlu0 %v2252, 32
        %v2264 = vpop.permute.xlu0 %2263
        %vm2269 = vcmask 253952
        %2270 = vst.msk [vmem:[#allocation4] sm:$0x1] %vm2269, %v2258
        %2271 = vst.msk [vmem:[#allocation4 + $0x8] sm:$0x1] %vm2269, %v2260
        %2272 = vst.msk [vmem:[#allocation4 + $0x10] sm:$0x1] %vm2269, %v2262
        %2273 = vst.msk [vmem:[#allocation4 + $0x18] sm:$0x1] %vm2269, %v2264
        %v2274 = vpack.c.bf16 %v2249, %v2249
        %v2275 = vpack.c.bf16 %v2250, %v2250
        %v2276 = vpack.c.bf16 %v2251, %v2251
        %v2277 = vpack.c.bf16 %v2252, %v2252
        %v2282 = vunpack.c.l.b16 %v2274
        %v2283 = vunpack.c.l.b16 %v2275
        %v2284 = vunpack.c.l.b16 %v2276
        %v2285 = vunpack.c.l.b16 %v2277
        %v2286 = vrot.slane %v2283, 7
        %v2287 = vsel %vm771, %v2286, %v2282
        %v2288 = vrot.slane %v2284, 6
        %v2289 = vsel %vm774, %v2288, %v2287
        %v2290 = vrot.slane %v2285, 5
        %v2291 = vsel %vm777, %v2290, %v2289
        %v2292 = vpack.c.b16 %v2291, %v2291
        %2293 = vrot.lane.b32.xlu0 %v2292, 32
        %v2294 = vpop.permute.xlu0 %2293
        %v2296 = vsel %vm439, %v2294, 0
        %2298 = vmatprep.subr.bf16.mxu0 0
        %2299 = vmatpush1.bf16.msra.mxu0 %v2086
        %2300 = vmatprep.subr.bf16.mxu0 0
        %2301 = vmatpush1.bf16.msra.mxu0 %v2087
        %2302 = vmatprep.subr.bf16.mxu0 0
        %2303 = vmatpush1.bf16.msra.mxu0 0
        %2304 = vmatprep.subr.bf16.mxu0 0
        %2305 = vmatpush1.bf16.msra.mxu0 0
        %2306 = vmatprep.subr.bf16.mxu0 0
        %2307 = vmatpush1.bf16.msra.mxu0 0
        %2308 = vmatprep.subr.bf16.mxu0 0
        %2309 = vmatpush1.bf16.msra.mxu0 0
        %2310 = vmatprep.subr.bf16.mxu0 0
        %2311 = vmatpush1.bf16.msra.mxu0 0
        %2312 = vmatprep.subr.bf16.mxu0 0
        %2313 = vmatpush1.bf16.msra.mxu0 0
        %2314 = vmatprep.subr.bf16.mxu0 0
        %2315 = vmatpush1.bf16.msra.mxu0 0
        %2316 = vmatprep.subr.bf16.mxu0 0
        %2317 = vmatpush1.bf16.msra.mxu0 0
        %2318 = vmatprep.subr.bf16.mxu0 0
        %2319 = vmatpush1.bf16.msra.mxu0 0
        %2320 = vmatprep.subr.bf16.mxu0 0
        %2321 = vmatpush1.bf16.msra.mxu0 0
        %2322 = vmatprep.subr.bf16.mxu0 0
        %2323 = vmatpush1.bf16.msra.mxu0 0
        %2324 = vmatprep.subr.bf16.mxu0 0
        %2325 = vmatpush1.bf16.msra.mxu0 0
        %2326 = vmatprep.subr.bf16.mxu0 0
        %2327 = vmatpush1.bf16.msra.mxu0 0
        %2328 = vmatprep.subr.bf16.mxu0 0
        %2329 = vmatpush1.bf16.msra.mxu0 0
        %2330 = vmatprep.mubr.bf16.mxu0 0
        %2331 = vmatmul.mubr.bf16.gmra.mrb[0].mxu0 %v2296
        %v2332 = vpop.f32.mrb[0].mxu0
        %v2333 = vadd.f32 0.0, %v2332
        %v2334 = vpop.f32.mrb[0].mxu0
        %v2335 = vpop.f32.mrb[0].mxu0
        %v2336 = vpop.f32.mrb[0].mxu0
        %2337 = vdwg.mxu0
        %v2339 = vrot.slane %v2333, 7
        %v2340 = vrot.slane %v2333, 1
        %v2341 = vrot.slane %v2333, 2
        %v2346 = vadd.f32 %v573, %v2339
        %v2347 = vadd.f32 %v576, %v2333
        %v2348 = vadd.f32 %v581, %v2340
        %v2349 = vadd.f32 %v584, %v2341
        %v2350 = vxor.u32 %v2346, 2147483648
        %v2351 = vxor.u32 %v2347, 2147483648
        %v2352 = vxor.u32 %v2348, 2147483648
        %v2353 = vxor.u32 %v2349, 2147483648
        %v2354 = vmul.f32 %v2350, 1.442695
        %v2355 = vpow.pop %v2354
        %v2356 = vmul.f32 %v2351, 1.442695
        %v2357 = vpow.pop %v2356
        %v2358 = vmul.f32 %v2352, 1.442695
        %v2359 = vpow.pop %v2358
        %v2360 = vmul.f32 %v2353, 1.442695
        %v2361 = vpow.pop %v2360
        %v2362 = vadd.f32 %v2355, 1.0
        %v2363 = vadd.f32 %v2357, 1.0
        %v2364 = vadd.f32 %v2359, 1.0
        %v2365 = vadd.f32 %v2361, 1.0
        %v2366 = vrcp.pop %v2362
        %v2367 = vmul.f32 1.0, %v2366
        %v2368 = vrcp.pop %v2363
        %v2369 = vmul.f32 1.0, %v2368
        %v2370 = vrcp.pop %v2364
        %v2371 = vmul.f32 1.0, %v2370
        %v2372 = vrcp.pop %v2365
        %v2373 = vmul.f32 1.0, %v2372
        %v2374 = vtanh.pop %v2346
        %v2375 = vtanh.pop %v2347
        %v2376 = vtanh.pop %v2348
        %v2377 = vtanh.pop %v2349
        %v2382 = vrot.slane %v2225, 7
        %v2383 = vrot.slane %v2226, 7
        %v2384 = vrot.slane %v2227, 7
        %v2385 = vrot.slane %v2228, 7
        %v2390 = vmul.f32 %v2367, %v2382
        %v2391 = vmul.f32 %v2369, %v2383
        %v2392 = vmul.f32 %v2371, %v2384
        %v2393 = vmul.f32 %v2373, %v2385
        %2398 = vrot.lane.b32.xlu0 %v2374, 64
        %v2399 = vpop.permute.xlu0 %2398
        %2400 = vrot.lane.b32.xlu0 %v2375, 64
        %v2401 = vpop.permute.xlu0 %2400
        %2402 = vrot.lane.b32.xlu0 %v2376, 64
        %v2403 = vpop.permute.xlu0 %2402
        %2404 = vrot.lane.b32.xlu0 %v2377, 64
        %v2405 = vpop.permute.xlu0 %2404
        %v2410 = vmul.f32 %v2367, %v2399
        %v2411 = vmul.f32 %v2369, %v2401
        %v2412 = vmul.f32 %v2371, %v2403
        %v2413 = vmul.f32 %v2373, %v2405
        %2418 = vrot.lane.b32.xlu0 %v2410, 32
        %v2419 = vpop.permute.xlu0 %2418
        %2420 = vrot.lane.b32.xlu0 %v2411, 32
        %v2421 = vpop.permute.xlu0 %2420
        %2422 = vrot.lane.b32.xlu0 %v2412, 32
        %v2423 = vpop.permute.xlu0 %2422
        %2424 = vrot.lane.b32.xlu0 %v2413, 32
        %v2425 = vpop.permute.xlu0 %2424
        %v2430 = vadd.f32 %v2390, %v2419
        %v2431 = vadd.f32 %v2391, %v2421
        %v2432 = vadd.f32 %v2392, %v2423
        %v2433 = vadd.f32 %v2393, %v2425
        %v2434 = vtanh.pop %v2430
        %v2435 = vtanh.pop %v2431
        %v2436 = vtanh.pop %v2432
        %v2437 = vtanh.pop %v2433
        %2442 = vrot.lane.b32.xlu0 %v2434, 64
        %v2443 = vpop.permute.xlu0 %2442
        %2444 = vrot.lane.b32.xlu0 %v2435, 64
        %v2445 = vpop.permute.xlu0 %2444
        %2446 = vrot.lane.b32.xlu0 %v2436, 64
        %v2447 = vpop.permute.xlu0 %2446
        %2448 = vrot.lane.b32.xlu0 %v2437, 64
        %v2449 = vpop.permute.xlu0 %2448
        %v2454 = vmul.f32 %v2367, %v2443
        %v2455 = vmul.f32 %v2369, %v2445
        %v2456 = vmul.f32 %v2371, %v2447
        %v2457 = vmul.f32 %v2373, %v2449
        %2462 = vrot.lane.b32.xlu0 %v2454, 32
        %v2463 = vpop.permute.xlu0 %2462
        %2464 = vrot.lane.b32.xlu0 %v2455, 32
        %v2465 = vpop.permute.xlu0 %2464
        %2466 = vrot.lane.b32.xlu0 %v2456, 32
        %v2467 = vpop.permute.xlu0 %2466
        %2468 = vrot.lane.b32.xlu0 %v2457, 32
        %v2469 = vpop.permute.xlu0 %2468
        %vm2474 = vcmask 254977
        %2475 = vst.msk [vmem:[#allocation4] sm:$0x2] %vm2474, %v2463
        %2476 = vst.msk [vmem:[#allocation4 + $0x8] sm:$0x2] %vm2474, %v2465
        %2477 = vst.msk [vmem:[#allocation4 + $0x10] sm:$0x2] %vm2474, %v2467
        %2478 = vst.msk [vmem:[#allocation4 + $0x18] sm:$0x2] %vm2474, %v2469
        %v2479 = vpack.c.bf16 %v2454, %v2454
        %v2480 = vpack.c.bf16 %v2455, %v2455
        %v2481 = vpack.c.bf16 %v2456, %v2456
        %v2482 = vpack.c.bf16 %v2457, %v2457
        %v2487 = vunpack.c.l.b16 %v2479
        %v2488 = vunpack.c.l.b16 %v2480
        %v2489 = vunpack.c.l.b16 %v2481
        %v2490 = vunpack.c.l.b16 %v2482
        %v2491 = vrot.slane %v2487, 1
        %v2492 = vsel %vm771, %v2488, %v2491
        %v2493 = vrot.slane %v2489, 7
        %v2494 = vsel %vm774, %v2493, %v2492
        %v2495 = vrot.slane %v2490, 6
        %v2496 = vsel %vm777, %v2495, %v2494
        %v2497 = vpack.c.b16 %v2496, %v2496
        %2498 = vrot.lane.b32.xlu0 %v2497, 32
        %v2499 = vpop.permute.xlu0 %2498
        %v2501 = vsel %vm439, %v2499, 0
        %2503 = vmatprep.subr.bf16.mxu0 0
        %2504 = vmatpush1.bf16.msra.mxu0 %v2086
        %2505 = vmatprep.subr.bf16.mxu0 0
        %2506 = vmatpush1.bf16.msra.mxu0 %v2087
        %2507 = vmatprep.subr.bf16.mxu0 0
        %2508 = vmatpush1.bf16.msra.mxu0 0
        %2509 = vmatprep.subr.bf16.mxu0 0
        %2510 = vmatpush1.bf16.msra.mxu0 0
        %2511 = vmatprep.subr.bf16.mxu0 0
        %2512 = vmatpush1.bf16.msra.mxu0 0
        %2513 = vmatprep.subr.bf16.mxu0 0
        %2514 = vmatpush1.bf16.msra.mxu0 0
        %2515 = vmatprep.subr.bf16.mxu0 0
        %2516 = vmatpush1.bf16.msra.mxu0 0
        %2517 = vmatprep.subr.bf16.mxu0 0
        %2518 = vmatpush1.bf16.msra.mxu0 0
        %2519 = vmatprep.subr.bf16.mxu0 0
        %2520 = vmatpush1.bf16.msra.mxu0 0
        %2521 = vmatprep.subr.bf16.mxu0 0
        %2522 = vmatpush1.bf16.msra.mxu0 0
        %2523 = vmatprep.subr.bf16.mxu0 0
        %2524 = vmatpush1.bf16.msra.mxu0 0
        %2525 = vmatprep.subr.bf16.mxu0 0
        %2526 = vmatpush1.bf16.msra.mxu0 0
        %2527 = vmatprep.subr.bf16.mxu0 0
        %2528 = vmatpush1.bf16.msra.mxu0 0
        %2529 = vmatprep.subr.bf16.mxu0 0
        %2530 = vmatpush1.bf16.msra.mxu0 0
        %2531 = vmatprep.subr.bf16.mxu0 0
        %2532 = vmatpush1.bf16.msra.mxu0 0
        %2533 = vmatprep.subr.bf16.mxu0 0
        %2534 = vmatpush1.bf16.msra.mxu0 0
        %2535 = vmatprep.mubr.bf16.mxu0 0
        %2536 = vmatmul.mubr.bf16.gmra.mrb[0].mxu0 %v2501
        %v2537 = vpop.f32.mrb[0].mxu0
        %v2538 = vadd.f32 0.0, %v2537
        %v2539 = vpop.f32.mrb[0].mxu0
        %v2540 = vpop.f32.mrb[0].mxu0
        %v2541 = vpop.f32.mrb[0].mxu0
        %2542 = vdwg.mxu0
        %v2544 = vrot.slane %v2538, 6
        %v2545 = vrot.slane %v2538, 7
        %v2546 = vrot.slane %v2538, 1
        %v2551 = vadd.f32 %v573, %v2544
        %v2552 = vadd.f32 %v576, %v2545
        %v2553 = vadd.f32 %v581, %v2538
        %v2554 = vadd.f32 %v584, %v2546
        %v2555 = vxor.u32 %v2551, 2147483648
        %v2556 = vxor.u32 %v2552, 2147483648
        %v2557 = vxor.u32 %v2553, 2147483648
        %v2558 = vxor.u32 %v2554, 2147483648
        %v2559 = vmul.f32 %v2555, 1.442695
        %v2560 = vpow.pop %v2559
        %v2561 = vmul.f32 %v2556, 1.442695
        %v2562 = vpow.pop %v2561
        %v2563 = vmul.f32 %v2557, 1.442695
        %v2564 = vpow.pop %v2563
        %v2565 = vmul.f32 %v2558, 1.442695
        %v2566 = vpow.pop %v2565
        %v2567 = vadd.f32 %v2560, 1.0
        %v2568 = vadd.f32 %v2562, 1.0
        %v2569 = vadd.f32 %v2564, 1.0
        %v2570 = vadd.f32 %v2566, 1.0
        %v2571 = vrcp.pop %v2567
        %v2572 = vmul.f32 1.0, %v2571
        %v2573 = vrcp.pop %v2568
        %v2574 = vmul.f32 1.0, %v2573
        %v2575 = vrcp.pop %v2569
        %v2576 = vmul.f32 1.0, %v2575
        %v2577 = vrcp.pop %v2570
        %v2578 = vmul.f32 1.0, %v2577
        %v2579 = vtanh.pop %v2551
        %v2580 = vtanh.pop %v2552
        %v2581 = vtanh.pop %v2553
        %v2582 = vtanh.pop %v2554
        %v2587 = vrot.slane %v2430, 7
        %v2588 = vrot.slane %v2431, 7
        %v2589 = vrot.slane %v2432, 7
        %v2590 = vrot.slane %v2433, 7
        %v2595 = vmul.f32 %v2572, %v2587
        %v2596 = vmul.f32 %v2574, %v2588
        %v2597 = vmul.f32 %v2576, %v2589
        %v2598 = vmul.f32 %v2578, %v2590
        %2603 = vrot.lane.b32.xlu0 %v2579, 64
        %v2604 = vpop.permute.xlu0 %2603
        %2605 = vrot.lane.b32.xlu0 %v2580, 64
        %v2606 = vpop.permute.xlu0 %2605
        %2607 = vrot.lane.b32.xlu0 %v2581, 64
        %v2608 = vpop.permute.xlu0 %2607
        %2609 = vrot.lane.b32.xlu0 %v2582, 64
        %v2610 = vpop.permute.xlu0 %2609
        %v2615 = vmul.f32 %v2572, %v2604
        %v2616 = vmul.f32 %v2574, %v2606
        %v2617 = vmul.f32 %v2576, %v2608
        %v2618 = vmul.f32 %v2578, %v2610
        %2623 = vrot.lane.b32.xlu0 %v2615, 32
        %v2624 = vpop.permute.xlu0 %2623
        %2625 = vrot.lane.b32.xlu0 %v2616, 32
        %v2626 = vpop.permute.xlu0 %2625
        %2627 = vrot.lane.b32.xlu0 %v2617, 32
        %v2628 = vpop.permute.xlu0 %2627
        %2629 = vrot.lane.b32.xlu0 %v2618, 32
        %v2630 = vpop.permute.xlu0 %2629
        %v2635 = vadd.f32 %v2595, %v2624
        %v2636 = vadd.f32 %v2596, %v2626
        %v2637 = vadd.f32 %v2597, %v2628
        %v2638 = vadd.f32 %v2598, %v2630
        %v2639 = vtanh.pop %v2635
        %v2640 = vtanh.pop %v2636
        %v2641 = vtanh.pop %v2637
        %v2642 = vtanh.pop %v2638
        %2647 = vrot.lane.b32.xlu0 %v2639, 64
        %v2648 = vpop.permute.xlu0 %2647
        %2649 = vrot.lane.b32.xlu0 %v2640, 64
        %v2650 = vpop.permute.xlu0 %2649
        %2651 = vrot.lane.b32.xlu0 %v2641, 64
        %v2652 = vpop.permute.xlu0 %2651
        %2653 = vrot.lane.b32.xlu0 %v2642, 64
        %v2654 = vpop.permute.xlu0 %2653
        %v2659 = vmul.f32 %v2572, %v2648
        %v2660 = vmul.f32 %v2574, %v2650
        %v2661 = vmul.f32 %v2576, %v2652
        %v2662 = vmul.f32 %v2578, %v2654
        %2667 = vrot.lane.b32.xlu0 %v2659, 32
        %v2668 = vpop.permute.xlu0 %2667
        %2669 = vrot.lane.b32.xlu0 %v2660, 32
        %v2670 = vpop.permute.xlu0 %2669
        %2671 = vrot.lane.b32.xlu0 %v2661, 32
        %v2672 = vpop.permute.xlu0 %2671
        %2673 = vrot.lane.b32.xlu0 %v2662, 32
        %v2674 = vpop.permute.xlu0 %2673
        %vm2679 = vcmask 256002
        %2680 = vst.msk [vmem:[#allocation4] sm:$0x4] %vm2679, %v2668
        %2681 = vst.msk [vmem:[#allocation4 + $0x8] sm:$0x4] %vm2679, %v2670
        %2682 = vst.msk [vmem:[#allocation4 + $0x10] sm:$0x4] %vm2679, %v2672
        %2683 = vst.msk [vmem:[#allocation4 + $0x18] sm:$0x4] %vm2679, %v2674
        %v2684 = vpack.c.bf16 %v2659, %v2659
        %v2685 = vpack.c.bf16 %v2660, %v2660
        %v2686 = vpack.c.bf16 %v2661, %v2661
        %v2687 = vpack.c.bf16 %v2662, %v2662
        %v2692 = vunpack.c.l.b16 %v2684
        %v2693 = vunpack.c.l.b16 %v2685
        %v2694 = vunpack.c.l.b16 %v2686
        %v2695 = vunpack.c.l.b16 %v2687
        %v2696 = vrot.slane %v2692, 2
        %v2697 = vrot.slane %v2693, 1
        %v2698 = vsel %vm771, %v2697, %v2696
        %v2699 = vsel %vm774, %v2694, %v2698
        %v2700 = vrot.slane %v2695, 7
        %v2701 = vsel %vm777, %v2700, %v2699
        %v2702 = vpack.c.b16 %v2701, %v2701
        %2703 = vrot.lane.b32.xlu0 %v2702, 32
        %v2704 = vpop.permute.xlu0 %2703
        %v2706 = vsel %vm439, %v2704, 0
        %2708 = vmatprep.subr.bf16.mxu0 0
        %2709 = vmatpush1.bf16.msra.mxu0 %v2086
        %2710 = vmatprep.subr.bf16.mxu0 0
        %2711 = vmatpush1.bf16.msra.mxu0 %v2087
        %2712 = vmatprep.subr.bf16.mxu0 0
        %2713 = vmatpush1.bf16.msra.mxu0 0
        %2714 = vmatprep.subr.bf16.mxu0 0
        %2715 = vmatpush1.bf16.msra.mxu0 0
        %2716 = vmatprep.subr.bf16.mxu0 0
        %2717 = vmatpush1.bf16.msra.mxu0 0
        %2718 = vmatprep.subr.bf16.mxu0 0
        %2719 = vmatpush1.bf16.msra.mxu0 0
        %2720 = vmatprep.subr.bf16.mxu0 0
        %2721 = vmatpush1.bf16.msra.mxu0 0
        %2722 = vmatprep.subr.bf16.mxu0 0
        %2723 = vmatpush1.bf16.msra.mxu0 0
        %2724 = vmatprep.subr.bf16.mxu0 0
        %2725 = vmatpush1.bf16.msra.mxu0 0
        %2726 = vmatprep.subr.bf16.mxu0 0
        %2727 = vmatpush1.bf16.msra.mxu0 0
        %2728 = vmatprep.subr.bf16.mxu0 0
        %2729 = vmatpush1.bf16.msra.mxu0 0
        %2730 = vmatprep.subr.bf16.mxu0 0
        %2731 = vmatpush1.bf16.msra.mxu0 0
        %2732 = vmatprep.subr.bf16.mxu0 0
        %2733 = vmatpush1.bf16.msra.mxu0 0
        %2734 = vmatprep.subr.bf16.mxu0 0
        %2735 = vmatpush1.bf16.msra.mxu0 0
        %2736 = vmatprep.subr.bf16.mxu0 0
        %2737 = vmatpush1.bf16.msra.mxu0 0
        %2738 = vmatprep.subr.bf16.mxu0 0
        %2739 = vmatpush1.bf16.msra.mxu0 0
        %2740 = vmatprep.mubr.bf16.mxu0 0
        %2741 = vmatmul.mubr.bf16.gmra.mrb[0].mxu0 %v2706
        %v2742 = vpop.f32.mrb[0].mxu0
        %v2743 = vadd.f32 0.0, %v2742
        %v2744 = vpop.f32.mrb[0].mxu0
        %v2745 = vpop.f32.mrb[0].mxu0
        %v2746 = vpop.f32.mrb[0].mxu0
        %2747 = vdwg.mxu0
        %v2749 = vrot.slane %v2743, 5
        %v2750 = vrot.slane %v2743, 6
        %v2751 = vrot.slane %v2743, 7
        %v2756 = vadd.f32 %v573, %v2749
        %v2757 = vadd.f32 %v576, %v2750
        %v2758 = vadd.f32 %v581, %v2751
        %v2759 = vadd.f32 %v584, %v2743
        %v2760 = vxor.u32 %v2756, 2147483648
        %v2761 = vxor.u32 %v2757, 2147483648
        %v2762 = vxor.u32 %v2758, 2147483648
        %v2763 = vxor.u32 %v2759, 2147483648
        %v2764 = vmul.f32 %v2760, 1.442695
        %v2765 = vpow.pop %v2764
        %v2766 = vmul.f32 %v2761, 1.442695
        %v2767 = vpow.pop %v2766
        %v2768 = vmul.f32 %v2762, 1.442695
        %v2769 = vpow.pop %v2768
        %v2770 = vmul.f32 %v2763, 1.442695
        %v2771 = vpow.pop %v2770
        %v2772 = vadd.f32 %v2765, 1.0
        %v2773 = vadd.f32 %v2767, 1.0
        %v2774 = vadd.f32 %v2769, 1.0
        %v2775 = vadd.f32 %v2771, 1.0
        %v2776 = vrcp.pop %v2772
        %v2777 = vmul.f32 1.0, %v2776
        %v2778 = vrcp.pop %v2773
        %v2779 = vmul.f32 1.0, %v2778
        %v2780 = vrcp.pop %v2774
        %v2781 = vmul.f32 1.0, %v2780
        %v2782 = vrcp.pop %v2775
        %v2783 = vmul.f32 1.0, %v2782
        %v2784 = vtanh.pop %v2756
        %v2785 = vtanh.pop %v2757
        %v2786 = vtanh.pop %v2758
        %v2787 = vtanh.pop %v2759
        %v2792 = vrot.slane %v2635, 7
        %v2793 = vrot.slane %v2636, 7
        %v2794 = vrot.slane %v2637, 7
        %v2795 = vrot.slane %v2638, 7
        %v2800 = vmul.f32 %v2777, %v2792
        %v2801 = vmul.f32 %v2779, %v2793
        %v2802 = vmul.f32 %v2781, %v2794
        %v2803 = vmul.f32 %v2783, %v2795
        %2808 = vrot.lane.b32.xlu0 %v2784, 64
        %v2809 = vpop.permute.xlu0 %2808
        %2810 = vrot.lane.b32.xlu0 %v2785, 64
        %v2811 = vpop.permute.xlu0 %2810
        %2812 = vrot.lane.b32.xlu0 %v2786, 64
        %v2813 = vpop.permute.xlu0 %2812
        %2814 = vrot.lane.b32.xlu0 %v2787, 64
        %v2815 = vpop.permute.xlu0 %2814
        %v2820 = vmul.f32 %v2777, %v2809
        %v2821 = vmul.f32 %v2779, %v2811
        %v2822 = vmul.f32 %v2781, %v2813
        %v2823 = vmul.f32 %v2783, %v2815
        %2828 = vrot.lane.b32.xlu0 %v2820, 32
        %v2829 = vpop.permute.xlu0 %2828
        %2830 = vrot.lane.b32.xlu0 %v2821, 32
        %v2831 = vpop.permute.xlu0 %2830
        %2832 = vrot.lane.b32.xlu0 %v2822, 32
        %v2833 = vpop.permute.xlu0 %2832
        %2834 = vrot.lane.b32.xlu0 %v2823, 32
        %v2835 = vpop.permute.xlu0 %2834
        %v2840 = vadd.f32 %v2800, %v2829
        %v2841 = vadd.f32 %v2801, %v2831
        %v2842 = vadd.f32 %v2802, %v2833
        %v2843 = vadd.f32 %v2803, %v2835
        %v2844 = vtanh.pop %v2840
        %v2845 = vtanh.pop %v2841
        %v2846 = vtanh.pop %v2842
        %v2847 = vtanh.pop %v2843
        %2852 = vrot.lane.b32.xlu0 %v2844, 64
        %v2853 = vpop.permute.xlu0 %2852
        %2854 = vrot.lane.b32.xlu0 %v2845, 64
        %v2855 = vpop.permute.xlu0 %2854
        %2856 = vrot.lane.b32.xlu0 %v2846, 64
        %v2857 = vpop.permute.xlu0 %2856
        %2858 = vrot.lane.b32.xlu0 %v2847, 64
        %v2859 = vpop.permute.xlu0 %2858
        %v2864 = vmul.f32 %v2777, %v2853
        %v2865 = vmul.f32 %v2779, %v2855
        %v2866 = vmul.f32 %v2781, %v2857
        %v2867 = vmul.f32 %v2783, %v2859
        %2872 = vrot.lane.b32.xlu0 %v2864, 32
        %v2873 = vpop.permute.xlu0 %2872
        %2874 = vrot.lane.b32.xlu0 %v2865, 32
        %v2875 = vpop.permute.xlu0 %2874
        %2876 = vrot.lane.b32.xlu0 %v2866, 32
        %v2877 = vpop.permute.xlu0 %2876
        %2878 = vrot.lane.b32.xlu0 %v2867, 32
        %v2879 = vpop.permute.xlu0 %2878
        %vm2884 = vcmask 257027
        %2885 = vst.msk [vmem:[#allocation4] sm:$0x8] %vm2884, %v2873
        %2886 = vst.msk [vmem:[#allocation4 + $0x8] sm:$0x8] %vm2884, %v2875
        %2887 = vst.msk [vmem:[#allocation4 + $0x10] sm:$0x8] %vm2884, %v2877
        %2888 = vst.msk [vmem:[#allocation4 + $0x18] sm:$0x8] %vm2884, %v2879
        %v2889 = vpack.c.bf16 %v2864, %v2864
        %v2890 = vpack.c.bf16 %v2865, %v2865
        %v2891 = vpack.c.bf16 %v2866, %v2866
        %v2892 = vpack.c.bf16 %v2867, %v2867
        %v2897 = vunpack.c.l.b16 %v2889
        %v2898 = vunpack.c.l.b16 %v2890
        %v2899 = vunpack.c.l.b16 %v2891
        %v2900 = vunpack.c.l.b16 %v2892
        %v2901 = vrot.slane %v2897, 3
        %v2902 = vrot.slane %v2898, 2
        %v2903 = vsel %vm771, %v2902, %v2901
        %v2904 = vrot.slane %v2899, 1
        %v2905 = vsel %vm774, %v2904, %v2903
        %v2906 = vsel %vm777, %v2900, %v2905
        %v2907 = vpack.c.b16 %v2906, %v2906
        %2908 = vrot.lane.b32.xlu0 %v2907, 32
        %v2909 = vpop.permute.xlu0 %2908
        %v2911 = vsel %vm439, %v2909, 0
        %2913 = vmatprep.subr.bf16.mxu0 0
        %2914 = vmatpush1.bf16.msra.mxu0 %v2086
        %2915 = vmatprep.subr.bf16.mxu0 0
        %2916 = vmatpush1.bf16.msra.mxu0 %v2087
        %2917 = vmatprep.subr.bf16.mxu0 0
        %2918 = vmatpush1.bf16.msra.mxu0 0
        %2919 = vmatprep.subr.bf16.mxu0 0
        %2920 = vmatpush1.bf16.msra.mxu0 0
        %2921 = vmatprep.subr.bf16.mxu0 0
        %2922 = vmatpush1.bf16.msra.mxu0 0
        %2923 = vmatprep.subr.bf16.mxu0 0
        %2924 = vmatpush1.bf16.msra.mxu0 0
        %2925 = vmatprep.subr.bf16.mxu0 0
        %2926 = vmatpush1.bf16.msra.mxu0 0
        %2927 = vmatprep.subr.bf16.mxu0 0
        %2928 = vmatpush1.bf16.msra.mxu0 0
        %2929 = vmatprep.subr.bf16.mxu0 0
        %2930 = vmatpush1.bf16.msra.mxu0 0
        %2931 = vmatprep.subr.bf16.mxu0 0
        %2932 = vmatpush1.bf16.msra.mxu0 0
        %2933 = vmatprep.subr.bf16.mxu0 0
        %2934 = vmatpush1.bf16.msra.mxu0 0
        %2935 = vmatprep.subr.bf16.mxu0 0
        %2936 = vmatpush1.bf16.msra.mxu0 0
        %2937 = vmatprep.subr.bf16.mxu0 0
        %2938 = vmatpush1.bf16.msra.mxu0 0
        %2939 = vmatprep.subr.bf16.mxu0 0
        %2940 = vmatpush1.bf16.msra.mxu0 0
        %2941 = vmatprep.subr.bf16.mxu0 0
        %2942 = vmatpush1.bf16.msra.mxu0 0
        %2943 = vmatprep.subr.bf16.mxu0 0
        %2944 = vmatpush1.bf16.msra.mxu0 0
        %2945 = vmatprep.mubr.bf16.mxu0 0
        %2946 = vmatmul.mubr.bf16.gmra.mrb[0].mxu0 %v2911
        %v2947 = vpop.f32.mrb[0].mxu0
        %v2948 = vadd.f32 0.0, %v2947
        %v2949 = vpop.f32.mrb[0].mxu0
        %v2950 = vpop.f32.mrb[0].mxu0
        %v2951 = vpop.f32.mrb[0].mxu0
        %2952 = vdwg.mxu0
        %v2954 = vrot.slane %v2948, 4
        %v2955 = vrot.slane %v2948, 5
        %v2956 = vrot.slane %v2948, 6
        %v2957 = vrot.slane %v2948, 7
        %v2962 = vadd.f32 %v573, %v2954
        %v2963 = vadd.f32 %v576, %v2955
        %v2964 = vadd.f32 %v581, %v2956
        %v2965 = vadd.f32 %v584, %v2957
        %v2966 = vxor.u32 %v2962, 2147483648
        %v2967 = vxor.u32 %v2963, 2147483648
        %v2968 = vxor.u32 %v2964, 2147483648
        %v2969 = vxor.u32 %v2965, 2147483648
        %v2970 = vmul.f32 %v2966, 1.442695
        %v2971 = vpow.pop %v2970
        %v2972 = vmul.f32 %v2967, 1.442695
        %v2973 = vpow.pop %v2972
        %v2974 = vmul.f32 %v2968, 1.442695
        %v2975 = vpow.pop %v2974
        %v2976 = vmul.f32 %v2969, 1.442695
        %v2977 = vpow.pop %v2976
        %v2978 = vadd.f32 %v2971, 1.0
        %v2979 = vadd.f32 %v2973, 1.0
        %v2980 = vadd.f32 %v2975, 1.0
        %v2981 = vadd.f32 %v2977, 1.0
        %v2982 = vrcp.pop %v2978
        %v2983 = vmul.f32 1.0, %v2982
        %v2984 = vrcp.pop %v2979
        %v2985 = vmul.f32 1.0, %v2984
        %v2986 = vrcp.pop %v2980
        %v2987 = vmul.f32 1.0, %v2986
        %v2988 = vrcp.pop %v2981
        %v2989 = vmul.f32 1.0, %v2988
        %v2990 = vtanh.pop %v2962
        %v2991 = vtanh.pop %v2963
        %v2992 = vtanh.pop %v2964
        %v2993 = vtanh.pop %v2965
        %v2998 = vrot.slane %v2840, 7
        %v2999 = vrot.slane %v2841, 7
        %v3000 = vrot.slane %v2842, 7
        %v3001 = vrot.slane %v2843, 7
        %v3006 = vmul.f32 %v2983, %v2998
        %v3007 = vmul.f32 %v2985, %v2999
        %v3008 = vmul.f32 %v2987, %v3000
        %v3009 = vmul.f32 %v2989, %v3001
        %3014 = vrot.lane.b32.xlu0 %v2990, 64
        %v3015 = vpop.permute.xlu0 %3014
        %3016 = vrot.lane.b32.xlu0 %v2991, 64
        %v3017 = vpop.permute.xlu0 %3016
        %3018 = vrot.lane.b32.xlu0 %v2992, 64
        %v3019 = vpop.permute.xlu0 %3018
        %3020 = vrot.lane.b32.xlu0 %v2993, 64
        %v3021 = vpop.permute.xlu0 %3020
        %v3026 = vmul.f32 %v2983, %v3015
        %v3027 = vmul.f32 %v2985, %v3017
        %v3028 = vmul.f32 %v2987, %v3019
        %v3029 = vmul.f32 %v2989, %v3021
        %3034 = vrot.lane.b32.xlu0 %v3026, 32
        %v3035 = vpop.permute.xlu0 %3034
        %3036 = vrot.lane.b32.xlu0 %v3027, 32
        %v3037 = vpop.permute.xlu0 %3036
        %3038 = vrot.lane.b32.xlu0 %v3028, 32
        %v3039 = vpop.permute.xlu0 %3038
        %3040 = vrot.lane.b32.xlu0 %v3029, 32
        %v3041 = vpop.permute.xlu0 %3040
        %v3046 = vadd.f32 %v3006, %v3035
        %v3047 = vadd.f32 %v3007, %v3037
        %v3048 = vadd.f32 %v3008, %v3039
        %v3049 = vadd.f32 %v3009, %v3041
        %v3050 = vtanh.pop %v3046
        %v3051 = vtanh.pop %v3047
        %v3052 = vtanh.pop %v3048
        %v3053 = vtanh.pop %v3049
        %3058 = vrot.lane.b32.xlu0 %v3050, 64
        %v3059 = vpop.permute.xlu0 %3058
        %3060 = vrot.lane.b32.xlu0 %v3051, 64
        %v3061 = vpop.permute.xlu0 %3060
        %3062 = vrot.lane.b32.xlu0 %v3052, 64
        %v3063 = vpop.permute.xlu0 %3062
        %3064 = vrot.lane.b32.xlu0 %v3053, 64
        %v3065 = vpop.permute.xlu0 %3064
        %v3070 = vmul.f32 %v2983, %v3059
        %v3071 = vmul.f32 %v2985, %v3061
        %v3072 = vmul.f32 %v2987, %v3063
        %v3073 = vmul.f32 %v2989, %v3065
        %3078 = vrot.lane.b32.xlu0 %v3070, 32
        %v3079 = vpop.permute.xlu0 %3078
        %3080 = vrot.lane.b32.xlu0 %v3071, 32
        %v3081 = vpop.permute.xlu0 %3080
        %3082 = vrot.lane.b32.xlu0 %v3072, 32
        %v3083 = vpop.permute.xlu0 %3082
        %3084 = vrot.lane.b32.xlu0 %v3073, 32
        %v3085 = vpop.permute.xlu0 %3084
        %vm3090 = vcmask 258052
        %3091 = vst.msk [vmem:[#allocation4] sm:$0x10] %vm3090, %v3079
        %3092 = vst.msk [vmem:[#allocation4 + $0x8] sm:$0x10] %vm3090, %v3081
        %3093 = vst.msk [vmem:[#allocation4 + $0x10] sm:$0x10] %vm3090, %v3083
        %3094 = vst.msk [vmem:[#allocation4 + $0x18] sm:$0x10] %vm3090, %v3085
        %v3095 = vpack.c.bf16 %v3070, %v3070
        %v3096 = vpack.c.bf16 %v3071, %v3071
        %v3097 = vpack.c.bf16 %v3072, %v3072
        %v3098 = vpack.c.bf16 %v3073, %v3073
        %v3103 = vunpack.c.l.b16 %v3095
        %v3104 = vunpack.c.l.b16 %v3096
        %v3105 = vunpack.c.l.b16 %v3097
        %v3106 = vunpack.c.l.b16 %v3098
        %v3107 = vrot.slane %v3103, 4
        %v3108 = vrot.slane %v3104, 3
        %v3109 = vsel %vm771, %v3108, %v3107
        %v3110 = vrot.slane %v3105, 2
        %v3111 = vsel %vm774, %v3110, %v3109
        %v3112 = vrot.slane %v3106, 1
        %v3113 = vsel %vm777, %v3112, %v3111
        %v3114 = vpack.c.b16 %v3113, %v3113
        %3115 = vrot.lane.b32.xlu0 %v3114, 32
        %v3116 = vpop.permute.xlu0 %3115
        %v3118 = vsel %vm439, %v3116, 0
        %3120 = vmatprep.subr.bf16.mxu0 0
        %3121 = vmatpush1.bf16.msra.mxu0 %v2086
        %3122 = vmatprep.subr.bf16.mxu0 0
        %3123 = vmatpush1.bf16.msra.mxu0 %v2087
        %3124 = vmatprep.subr.bf16.mxu0 0
        %3125 = vmatpush1.bf16.msra.mxu0 0
        %3126 = vmatprep.subr.bf16.mxu0 0
        %3127 = vmatpush1.bf16.msra.mxu0 0
        %3128 = vmatprep.subr.bf16.mxu0 0
        %3129 = vmatpush1.bf16.msra.mxu0 0
        %3130 = vmatprep.subr.bf16.mxu0 0
        %3131 = vmatpush1.bf16.msra.mxu0 0
        %3132 = vmatprep.subr.bf16.mxu0 0
        %3133 = vmatpush1.bf16.msra.mxu0 0
        %3134 = vmatprep.subr.bf16.mxu0 0
        %3135 = vmatpush1.bf16.msra.mxu0 0
        %3136 = vmatprep.subr.bf16.mxu0 0
        %3137 = vmatpush1.bf16.msra.mxu0 0
        %3138 = vmatprep.subr.bf16.mxu0 0
        %3139 = vmatpush1.bf16.msra.mxu0 0
        %3140 = vmatprep.subr.bf16.mxu0 0
        %3141 = vmatpush1.bf16.msra.mxu0 0
        %3142 = vmatprep.subr.bf16.mxu0 0
        %3143 = vmatpush1.bf16.msra.mxu0 0
        %3144 = vmatprep.subr.bf16.mxu0 0
        %3145 = vmatpush1.bf16.msra.mxu0 0
        %3146 = vmatprep.subr.bf16.mxu0 0
        %3147 = vmatpush1.bf16.msra.mxu0 0
        %3148 = vmatprep.subr.bf16.mxu0 0
        %3149 = vmatpush1.bf16.msra.mxu0 0
        %3150 = vmatprep.subr.bf16.mxu0 0
        %3151 = vmatpush1.bf16.msra.mxu0 0
        %3152 = vmatprep.mubr.bf16.mxu0 0
        %3153 = vmatmul.mubr.bf16.gmra.mrb[0].mxu0 %v3118
        %v3154 = vpop.f32.mrb[0].mxu0
        %v3155 = vadd.f32 0.0, %v3154
        %v3156 = vpop.f32.mrb[0].mxu0
        %v3157 = vpop.f32.mrb[0].mxu0
        %v3158 = vpop.f32.mrb[0].mxu0
        %3159 = vdwg.mxu0
        %v3161 = vrot.slane %v3155, 3
        %v3162 = vrot.slane %v3155, 4
        %v3163 = vrot.slane %v3155, 5
        %v3164 = vrot.slane %v3155, 6
        %v3169 = vadd.f32 %v573, %v3161
        %v3170 = vadd.f32 %v576, %v3162
        %v3171 = vadd.f32 %v581, %v3163
        %v3172 = vadd.f32 %v584, %v3164
        %v3173 = vxor.u32 %v3169, 2147483648
        %v3174 = vxor.u32 %v3170, 2147483648
        %v3175 = vxor.u32 %v3171, 2147483648
        %v3176 = vxor.u32 %v3172, 2147483648
        %v3177 = vmul.f32 %v3173, 1.442695
        %v3178 = vpow.pop %v3177
        %v3179 = vmul.f32 %v3174, 1.442695
        %v3180 = vpow.pop %v3179
        %v3181 = vmul.f32 %v3175, 1.442695
        %v3182 = vpow.pop %v3181
        %v3183 = vmul.f32 %v3176, 1.442695
        %v3184 = vpow.pop %v3183
        %v3185 = vadd.f32 %v3178, 1.0
        %v3186 = vadd.f32 %v3180, 1.0
        %v3187 = vadd.f32 %v3182, 1.0
        %v3188 = vadd.f32 %v3184, 1.0
        %v3189 = vrcp.pop %v3185
        %v3190 = vmul.f32 1.0, %v3189
        %v3191 = vrcp.pop %v3186
        %v3192 = vmul.f32 1.0, %v3191
        %v3193 = vrcp.pop %v3187
        %v3194 = vmul.f32 1.0, %v3193
        %v3195 = vrcp.pop %v3188
        %v3196 = vmul.f32 1.0, %v3195
        %v3197 = vtanh.pop %v3169
        %v3198 = vtanh.pop %v3170
        %v3199 = vtanh.pop %v3171
        %v3200 = vtanh.pop %v3172
        %v3205 = vrot.slane %v3046, 7
        %v3206 = vrot.slane %v3047, 7
        %v3207 = vrot.slane %v3048, 7
        %v3208 = vrot.slane %v3049, 7
        %v3213 = vmul.f32 %v3190, %v3205
        %v3214 = vmul.f32 %v3192, %v3206
        %v3215 = vmul.f32 %v3194, %v3207
        %v3216 = vmul.f32 %v3196, %v3208
        %3221 = vrot.lane.b32.xlu0 %v3197, 64
        %v3222 = vpop.permute.xlu0 %3221
        %3223 = vrot.lane.b32.xlu0 %v3198, 64
        %v3224 = vpop.permute.xlu0 %3223
        %3225 = vrot.lane.b32.xlu0 %v3199, 64
        %v3226 = vpop.permute.xlu0 %3225
        %3227 = vrot.lane.b32.xlu0 %v3200, 64
        %v3228 = vpop.permute.xlu0 %3227
        %v3233 = vmul.f32 %v3190, %v3222
        %v3234 = vmul.f32 %v3192, %v3224
        %v3235 = vmul.f32 %v3194, %v3226
        %v3236 = vmul.f32 %v3196, %v3228
        %3241 = vrot.lane.b32.xlu0 %v3233, 32
        %v3242 = vpop.permute.xlu0 %3241
        %3243 = vrot.lane.b32.xlu0 %v3234, 32
        %v3244 = vpop.permute.xlu0 %3243
        %3245 = vrot.lane.b32.xlu0 %v3235, 32
        %v3246 = vpop.permute.xlu0 %3245
        %3247 = vrot.lane.b32.xlu0 %v3236, 32
        %v3248 = vpop.permute.xlu0 %3247
        %v3253 = vadd.f32 %v3213, %v3242
        %v3254 = vadd.f32 %v3214, %v3244
        %v3255 = vadd.f32 %v3215, %v3246
        %v3256 = vadd.f32 %v3216, %v3248
        %v3257 = vtanh.pop %v3253
        %v3258 = vtanh.pop %v3254
        %v3259 = vtanh.pop %v3255
        %v3260 = vtanh.pop %v3256
        %3265 = vrot.lane.b32.xlu0 %v3257, 64
        %v3266 = vpop.permute.xlu0 %3265
        %3267 = vrot.lane.b32.xlu0 %v3258, 64
        %v3268 = vpop.permute.xlu0 %3267
        %3269 = vrot.lane.b32.xlu0 %v3259, 64
        %v3270 = vpop.permute.xlu0 %3269
        %3271 = vrot.lane.b32.xlu0 %v3260, 64
        %v3272 = vpop.permute.xlu0 %3271
        %v3277 = vmul.f32 %v3190, %v3266
        %v3278 = vmul.f32 %v3192, %v3268
        %v3279 = vmul.f32 %v3194, %v3270
        %v3280 = vmul.f32 %v3196, %v3272
        %3285 = vrot.lane.b32.xlu0 %v3277, 32
        %v3286 = vpop.permute.xlu0 %3285
        %3287 = vrot.lane.b32.xlu0 %v3278, 32
        %v3288 = vpop.permute.xlu0 %3287
        %3289 = vrot.lane.b32.xlu0 %v3279, 32
        %v3290 = vpop.permute.xlu0 %3289
        %3291 = vrot.lane.b32.xlu0 %v3280, 32
        %v3292 = vpop.permute.xlu0 %3291
        %vm3297 = vcmask 259077
        %3298 = vst.msk [vmem:[#allocation4] sm:$0x20] %vm3297, %v3286
        %3299 = vst.msk [vmem:[#allocation4 + $0x8] sm:$0x20] %vm3297, %v3288
        %3300 = vst.msk [vmem:[#allocation4 + $0x10] sm:$0x20] %vm3297, %v3290
        %3301 = vst.msk [vmem:[#allocation4 + $0x18] sm:$0x20] %vm3297, %v3292
        %v3302 = vpack.c.bf16 %v3277, %v3277
        %v3303 = vpack.c.bf16 %v3278, %v3278
        %v3304 = vpack.c.bf16 %v3279, %v3279
        %v3305 = vpack.c.bf16 %v3280, %v3280
        %v3310 = vunpack.c.l.b16 %v3302
        %v3311 = vunpack.c.l.b16 %v3303
        %v3312 = vunpack.c.l.b16 %v3304
        %v3313 = vunpack.c.l.b16 %v3305
        %v3314 = vrot.slane %v3310, 5
        %v3315 = vrot.slane %v3311, 4
        %v3316 = vsel %vm771, %v3315, %v3314
        %v3317 = vrot.slane %v3312, 3
        %v3318 = vsel %vm774, %v3317, %v3316
        %v3319 = vrot.slane %v3313, 2
        %v3320 = vsel %vm777, %v3319, %v3318
        %v3321 = vpack.c.b16 %v3320, %v3320
        %3322 = vrot.lane.b32.xlu0 %v3321, 32
        %v3323 = vpop.permute.xlu0 %3322
        %v3325 = vsel %vm439, %v3323, 0
        %3327 = vmatprep.subr.bf16.mxu0 0
        %3328 = vmatpush1.bf16.msra.mxu0 %v2086
        %3329 = vmatprep.subr.bf16.mxu0 0
        %3330 = vmatpush1.bf16.msra.mxu0 %v2087
        %3331 = vmatprep.subr.bf16.mxu0 0
        %3332 = vmatpush1.bf16.msra.mxu0 0
        %3333 = vmatprep.subr.bf16.mxu0 0
        %3334 = vmatpush1.bf16.msra.mxu0 0
        %3335 = vmatprep.subr.bf16.mxu0 0
        %3336 = vmatpush1.bf16.msra.mxu0 0
        %3337 = vmatprep.subr.bf16.mxu0 0
        %3338 = vmatpush1.bf16.msra.mxu0 0
        %3339 = vmatprep.subr.bf16.mxu0 0
        %3340 = vmatpush1.bf16.msra.mxu0 0
        %3341 = vmatprep.subr.bf16.mxu0 0
        %3342 = vmatpush1.bf16.msra.mxu0 0
        %3343 = vmatprep.subr.bf16.mxu0 0
        %3344 = vmatpush1.bf16.msra.mxu0 0
        %3345 = vmatprep.subr.bf16.mxu0 0
        %3346 = vmatpush1.bf16.msra.mxu0 0
        %3347 = vmatprep.subr.bf16.mxu0 0
        %3348 = vmatpush1.bf16.msra.mxu0 0
        %3349 = vmatprep.subr.bf16.mxu0 0
        %3350 = vmatpush1.bf16.msra.mxu0 0
        %3351 = vmatprep.subr.bf16.mxu0 0
        %3352 = vmatpush1.bf16.msra.mxu0 0
        %3353 = vmatprep.subr.bf16.mxu0 0
        %3354 = vmatpush1.bf16.msra.mxu0 0
        %3355 = vmatprep.subr.bf16.mxu0 0
        %3356 = vmatpush1.bf16.msra.mxu0 0
        %3357 = vmatprep.subr.bf16.mxu0 0
        %3358 = vmatpush1.bf16.msra.mxu0 0
        %3359 = vmatprep.mubr.bf16.mxu0 0
        %3360 = vmatmul.mubr.bf16.gmra.mrb[0].mxu0 %v3325
        %v3361 = vpop.f32.mrb[0].mxu0
        %v3362 = vadd.f32 0.0, %v3361
        %v3363 = vpop.f32.mrb[0].mxu0
        %v3364 = vpop.f32.mrb[0].mxu0
        %v3365 = vpop.f32.mrb[0].mxu0
        %3366 = vdwg.mxu0
        %v3368 = vrot.slane %v3362, 2
        %v3369 = vrot.slane %v3362, 3
        %v3370 = vrot.slane %v3362, 4
        %v3371 = vrot.slane %v3362, 5
        %v3376 = vadd.f32 %v573, %v3368
        %v3377 = vadd.f32 %v576, %v3369
        %v3378 = vadd.f32 %v581, %v3370
        %v3379 = vadd.f32 %v584, %v3371
        %v3380 = vxor.u32 %v3376, 2147483648
        %v3381 = vxor.u32 %v3377, 2147483648
        %v3382 = vxor.u32 %v3378, 2147483648
        %v3383 = vxor.u32 %v3379, 2147483648
        %v3384 = vmul.f32 %v3380, 1.442695
        %v3385 = vpow.pop %v3384
        %v3386 = vmul.f32 %v3381, 1.442695
        %v3387 = vpow.pop %v3386
        %v3388 = vmul.f32 %v3382, 1.442695
        %v3389 = vpow.pop %v3388
        %v3390 = vmul.f32 %v3383, 1.442695
        %v3391 = vpow.pop %v3390
        %v3392 = vadd.f32 %v3385, 1.0
        %v3393 = vadd.f32 %v3387, 1.0
        %v3394 = vadd.f32 %v3389, 1.0
        %v3395 = vadd.f32 %v3391, 1.0
        %v3396 = vrcp.pop %v3392
        %v3397 = vmul.f32 1.0, %v3396
        %v3398 = vrcp.pop %v3393
        %v3399 = vmul.f32 1.0, %v3398
        %v3400 = vrcp.pop %v3394
        %v3401 = vmul.f32 1.0, %v3400
        %v3402 = vrcp.pop %v3395
        %v3403 = vmul.f32 1.0, %v3402
        %v3404 = vtanh.pop %v3376
        %v3405 = vtanh.pop %v3377
        %v3406 = vtanh.pop %v3378
        %v3407 = vtanh.pop %v3379
        %v3412 = vrot.slane %v3253, 7
        %v3413 = vrot.slane %v3254, 7
        %v3414 = vrot.slane %v3255, 7
        %v3415 = vrot.slane %v3256, 7
        %v3420 = vmul.f32 %v3397, %v3412
        %v3421 = vmul.f32 %v3399, %v3413
        %v3422 = vmul.f32 %v3401, %v3414
        %v3423 = vmul.f32 %v3403, %v3415
        %3428 = vrot.lane.b32.xlu0 %v3404, 64
        %v3429 = vpop.permute.xlu0 %3428
        %3430 = vrot.lane.b32.xlu0 %v3405, 64
        %v3431 = vpop.permute.xlu0 %3430
        %3432 = vrot.lane.b32.xlu0 %v3406, 64
        %v3433 = vpop.permute.xlu0 %3432
        %3434 = vrot.lane.b32.xlu0 %v3407, 64
        %v3435 = vpop.permute.xlu0 %3434
        %v3440 = vmul.f32 %v3397, %v3429
        %v3441 = vmul.f32 %v3399, %v3431
        %v3442 = vmul.f32 %v3401, %v3433
        %v3443 = vmul.f32 %v3403, %v3435
        %3448 = vrot.lane.b32.xlu0 %v3440, 32
        %v3449 = vpop.permute.xlu0 %3448
        %3450 = vrot.lane.b32.xlu0 %v3441, 32
        %v3451 = vpop.permute.xlu0 %3450
        %3452 = vrot.lane.b32.xlu0 %v3442, 32
        %v3453 = vpop.permute.xlu0 %3452
        %3454 = vrot.lane.b32.xlu0 %v3443, 32
        %v3455 = vpop.permute.xlu0 %3454
        %v3460 = vadd.f32 %v3420, %v3449
        %v3461 = vadd.f32 %v3421, %v3451
        %v3462 = vadd.f32 %v3422, %v3453
        %v3463 = vadd.f32 %v3423, %v3455
        %v3464 = vtanh.pop %v3460
        %v3465 = vtanh.pop %v3461
        %v3466 = vtanh.pop %v3462
        %v3467 = vtanh.pop %v3463
        %3472 = vrot.lane.b32.xlu0 %v3464, 64
        %v3473 = vpop.permute.xlu0 %3472
        %3474 = vrot.lane.b32.xlu0 %v3465, 64
        %v3475 = vpop.permute.xlu0 %3474
        %3476 = vrot.lane.b32.xlu0 %v3466, 64
        %v3477 = vpop.permute.xlu0 %3476
        %3478 = vrot.lane.b32.xlu0 %v3467, 64
        %v3479 = vpop.permute.xlu0 %3478
        %v3484 = vmul.f32 %v3397, %v3473
        %v3485 = vmul.f32 %v3399, %v3475
        %v3486 = vmul.f32 %v3401, %v3477
        %v3487 = vmul.f32 %v3403, %v3479
        %3492 = vrot.lane.b32.xlu0 %v3484, 32
        %v3493 = vpop.permute.xlu0 %3492
        %3494 = vrot.lane.b32.xlu0 %v3485, 32
        %v3495 = vpop.permute.xlu0 %3494
        %3496 = vrot.lane.b32.xlu0 %v3486, 32
        %v3497 = vpop.permute.xlu0 %3496
        %3498 = vrot.lane.b32.xlu0 %v3487, 32
        %v3499 = vpop.permute.xlu0 %3498
        %vm3504 = vcmask 260102
        %3505 = vst.msk [vmem:[#allocation4] sm:$0x40] %vm3504, %v3493
        %3506 = vst.msk [vmem:[#allocation4 + $0x8] sm:$0x40] %vm3504, %v3495
        %3507 = vst.msk [vmem:[#allocation4 + $0x10] sm:$0x40] %vm3504, %v3497
        %3508 = vst.msk [vmem:[#allocation4 + $0x18] sm:$0x40] %vm3504, %v3499
        %v3509 = vpack.c.bf16 %v3484, %v3484
        %v3510 = vpack.c.bf16 %v3485, %v3485
        %v3511 = vpack.c.bf16 %v3486, %v3486
        %v3512 = vpack.c.bf16 %v3487, %v3487
        %v3517 = vunpack.c.l.b16 %v3509
        %v3518 = vunpack.c.l.b16 %v3510
        %v3519 = vunpack.c.l.b16 %v3511
        %v3520 = vunpack.c.l.b16 %v3512
        %v3521 = vrot.slane %v3517, 6
        %v3522 = vrot.slane %v3518, 5
        %v3523 = vsel %vm771, %v3522, %v3521
        %v3524 = vrot.slane %v3519, 4
        %v3525 = vsel %vm774, %v3524, %v3523
        %v3526 = vrot.slane %v3520, 3
        %v3527 = vsel %vm777, %v3526, %v3525
        %v3528 = vpack.c.b16 %v3527, %v3527
        %3529 = vrot.lane.b32.xlu0 %v3528, 32
        %v3530 = vpop.permute.xlu0 %3529
        %v3532 = vsel %vm439, %v3530, 0
        %3534 = vmatprep.subr.bf16.mxu0 0
        %3535 = vmatpush1.bf16.msra.mxu0 %v2086
        %3536 = vmatprep.subr.bf16.mxu0 0
        %3537 = vmatpush1.bf16.msra.mxu0 %v2087
        %3538 = vmatprep.subr.bf16.mxu0 0
        %3539 = vmatpush1.bf16.msra.mxu0 0
        %3540 = vmatprep.subr.bf16.mxu0 0
        %3541 = vmatpush1.bf16.msra.mxu0 0
        %3542 = vmatprep.subr.bf16.mxu0 0
        %3543 = vmatpush1.bf16.msra.mxu0 0
        %3544 = vmatprep.subr.bf16.mxu0 0
        %3545 = vmatpush1.bf16.msra.mxu0 0
        %3546 = vmatprep.subr.bf16.mxu0 0
        %3547 = vmatpush1.bf16.msra.mxu0 0
        %3548 = vmatprep.subr.bf16.mxu0 0
        %3549 = vmatpush1.bf16.msra.mxu0 0
        %3550 = vmatprep.subr.bf16.mxu0 0
        %3551 = vmatpush1.bf16.msra.mxu0 0
        %3552 = vmatprep.subr.bf16.mxu0 0
        %3553 = vmatpush1.bf16.msra.mxu0 0
        %3554 = vmatprep.subr.bf16.mxu0 0
        %3555 = vmatpush1.bf16.msra.mxu0 0
        %3556 = vmatprep.subr.bf16.mxu0 0
        %3557 = vmatpush1.bf16.msra.mxu0 0
        %3558 = vmatprep.subr.bf16.mxu0 0
        %3559 = vmatpush1.bf16.msra.mxu0 0
        %3560 = vmatprep.subr.bf16.mxu0 0
        %3561 = vmatpush1.bf16.msra.mxu0 0
        %3562 = vmatprep.subr.bf16.mxu0 0
        %3563 = vmatpush1.bf16.msra.mxu0 0
        %3564 = vmatprep.subr.bf16.mxu0 0
        %3565 = vmatpush1.bf16.msra.mxu0 0
        %3566 = vmatprep.mubr.bf16.mxu0 0
        %3567 = vmatmul.mubr.bf16.gmra.mrb[0].mxu0 %v3532
        %v3568 = vpop.f32.mrb[0].mxu0
        %v3569 = vadd.f32 0.0, %v3568
        %v3570 = vpop.f32.mrb[0].mxu0
        %v3571 = vpop.f32.mrb[0].mxu0
        %v3572 = vpop.f32.mrb[0].mxu0
        %3573 = vdwg.mxu0
        %v3575 = vrot.slane %v3569, 1
        %v3576 = vrot.slane %v3569, 2
        %v3577 = vrot.slane %v3569, 3
        %v3578 = vrot.slane %v3569, 4
        %v3583 = vadd.f32 %v573, %v3575
        %v3584 = vadd.f32 %v576, %v3576
        %v3585 = vadd.f32 %v581, %v3577
        %v3586 = vadd.f32 %v584, %v3578
        %v3587 = vxor.u32 %v3583, 2147483648
        %v3588 = vxor.u32 %v3584, 2147483648
        %v3589 = vxor.u32 %v3585, 2147483648
        %v3590 = vxor.u32 %v3586, 2147483648
        %v3591 = vmul.f32 %v3587, 1.442695
        %v3592 = vpow.pop %v3591
        %v3593 = vmul.f32 %v3588, 1.442695
        %v3594 = vpow.pop %v3593
        %v3595 = vmul.f32 %v3589, 1.442695
        %v3596 = vpow.pop %v3595
        %v3597 = vmul.f32 %v3590, 1.442695
        %v3598 = vpow.pop %v3597
        %v3599 = vadd.f32 %v3592, 1.0
        %v3600 = vadd.f32 %v3594, 1.0
        %v3601 = vadd.f32 %v3596, 1.0
        %v3602 = vadd.f32 %v3598, 1.0
        %v3603 = vrcp.pop %v3599
        %v3604 = vmul.f32 1.0, %v3603
        %v3605 = vrcp.pop %v3600
        %v3606 = vmul.f32 1.0, %v3605
        %v3607 = vrcp.pop %v3601
        %v3608 = vmul.f32 1.0, %v3607
        %v3609 = vrcp.pop %v3602
        %v3610 = vmul.f32 1.0, %v3609
        %v3611 = vtanh.pop %v3583
        %v3612 = vtanh.pop %v3584
        %v3613 = vtanh.pop %v3585
        %v3614 = vtanh.pop %v3586
        %v3619 = vrot.slane %v3460, 7
        %v3620 = vrot.slane %v3461, 7
        %v3621 = vrot.slane %v3462, 7
        %v3622 = vrot.slane %v3463, 7
        %v3627 = vmul.f32 %v3604, %v3619
        %v3628 = vmul.f32 %v3606, %v3620
        %v3629 = vmul.f32 %v3608, %v3621
        %v3630 = vmul.f32 %v3610, %v3622
        %3635 = vrot.lane.b32.xlu0 %v3611, 64
        %v3636 = vpop.permute.xlu0 %3635
        %3637 = vrot.lane.b32.xlu0 %v3612, 64
        %v3638 = vpop.permute.xlu0 %3637
        %3639 = vrot.lane.b32.xlu0 %v3613, 64
        %v3640 = vpop.permute.xlu0 %3639
        %3641 = vrot.lane.b32.xlu0 %v3614, 64
        %v3642 = vpop.permute.xlu0 %3641
        %v3647 = vmul.f32 %v3604, %v3636
        %v3648 = vmul.f32 %v3606, %v3638
        %v3649 = vmul.f32 %v3608, %v3640
        %v3650 = vmul.f32 %v3610, %v3642
        %3655 = vrot.lane.b32.xlu0 %v3647, 32
        %v3656 = vpop.permute.xlu0 %3655
        %3657 = vrot.lane.b32.xlu0 %v3648, 32
        %v3658 = vpop.permute.xlu0 %3657
        %3659 = vrot.lane.b32.xlu0 %v3649, 32
        %v3660 = vpop.permute.xlu0 %3659
        %3661 = vrot.lane.b32.xlu0 %v3650, 32
        %v3662 = vpop.permute.xlu0 %3661
        %v3667 = vadd.f32 %v3627, %v3656
        %v3668 = vadd.f32 %v3628, %v3658
        %v3669 = vadd.f32 %v3629, %v3660
        %v3670 = vadd.f32 %v3630, %v3662
        %v3671 = vtanh.pop %v3667
        %v3672 = vtanh.pop %v3668
        %v3673 = vtanh.pop %v3669
        %v3674 = vtanh.pop %v3670
        %3679 = vrot.lane.b32.xlu0 %v3671, 64
        %v3680 = vpop.permute.xlu0 %3679
        %3681 = vrot.lane.b32.xlu0 %v3672, 64
        %v3682 = vpop.permute.xlu0 %3681
        %3683 = vrot.lane.b32.xlu0 %v3673, 64
        %v3684 = vpop.permute.xlu0 %3683
        %3685 = vrot.lane.b32.xlu0 %v3674, 64
        %v3686 = vpop.permute.xlu0 %3685
        %v3691 = vmul.f32 %v3604, %v3680
        %v3692 = vmul.f32 %v3606, %v3682
        %v3693 = vmul.f32 %v3608, %v3684
        %v3694 = vmul.f32 %v3610, %v3686
        %3699 = vrot.lane.b32.xlu0 %v3691, 32
        %v3700 = vpop.permute.xlu0 %3699
        %3701 = vrot.lane.b32.xlu0 %v3692, 32
        %v3702 = vpop.permute.xlu0 %3701
        %3703 = vrot.lane.b32.xlu0 %v3693, 32
        %v3704 = vpop.permute.xlu0 %3703
        %3705 = vrot.lane.b32.xlu0 %v3694, 32
        %v3706 = vpop.permute.xlu0 %3705
        %vm3711 = vcmask 261127
        %3712 = vst.msk [vmem:[#allocation4] sm:$0x80] %vm3711, %v3700
        %3713 = vst.msk [vmem:[#allocation4 + $0x8] sm:$0x80] %vm3711, %v3702
        %3714 = vst.msk [vmem:[#allocation4 + $0x10] sm:$0x80] %vm3711, %v3704
        %3715 = vst.msk [vmem:[#allocation4 + $0x18] sm:$0x80] %vm3711, %v3706
        %s3716 = smul.u32 4, 4
        %s3717 = smul.u32 %s3716, 1
        %s3718 = sshll.u32 %s3717, 4
        %3719 = dma.done [#allocation3], %s3718
        %v3720 = vld [vmem:[#allocation4] sm:$0xff]
        %v3721 = vld [vmem:[#allocation4 + $0x8] sm:$0xff]
        %v3722 = vld [vmem:[#allocation4 + $0x10] sm:$0xff]
        %v3723 = vld [vmem:[#allocation4 + $0x18] sm:$0xff]
        %v3724 = vpack.c.bf16 %v3721, %v3720
        %v3725 = vpack.c.bf16 %v3723, %v3722
        %v3726 = vld [vmem:[#allocation2] sm:$0xff]
        %v3727 = vld [vmem:[#allocation2 + $0x8] sm:$0xff]
        %v3728 = vld [vmem:[%s9] sm:$0x1]
        %v3730 = vlaneseq
        %v3731 = vshrl.u32 %v3730, 7
        %v3732 = vsub.s32 0, %v3731
        %v3733 = vrot.slane %v3728, %v3732
        %v3736 = vsel %vm439, %v3724, 0
        %v3739 = vsel %vm439, %v3725, 0
        %3741 = vmatprep.subr.bf16.mxu0 0
        %3742 = vmatpush1.bf16.msra.mxu0 %v3726
        %3743 = vmatprep.subr.bf16.mxu0 0
        %3744 = vmatpush1.bf16.msra.mxu0 %v3727
        %3745 = vmatprep.subr.bf16.mxu0 0
        %3746 = vmatpush1.bf16.msra.mxu0 0
        %3747 = vmatprep.subr.bf16.mxu0 0
        %3748 = vmatpush1.bf16.msra.mxu0 0
        %3749 = vmatprep.subr.bf16.mxu0 0
        %3750 = vmatpush1.bf16.msra.mxu0 0
        %3751 = vmatprep.subr.bf16.mxu0 0
        %3752 = vmatpush1.bf16.msra.mxu0 0
        %3753 = vmatprep.subr.bf16.mxu0 0
        %3754 = vmatpush1.bf16.msra.mxu0 0
        %3755 = vmatprep.subr.bf16.mxu0 0
        %3756 = vmatpush1.bf16.msra.mxu0 0
        %3757 = vmatprep.subr.bf16.mxu0 0
        %3758 = vmatpush1.bf16.msra.mxu0 0
        %3759 = vmatprep.subr.bf16.mxu0 0
        %3760 = vmatpush1.bf16.msra.mxu0 0
        %3761 = vmatprep.subr.bf16.mxu0 0
        %3762 = vmatpush1.bf16.msra.mxu0 0
        %3763 = vmatprep.subr.bf16.mxu0 0
        %3764 = vmatpush1.bf16.msra.mxu0 0
        %3765 = vmatprep.subr.bf16.mxu0 0
        %3766 = vmatpush1.bf16.msra.mxu0 0
        %3767 = vmatprep.subr.bf16.mxu0 0
        %3768 = vmatpush1.bf16.msra.mxu0 0
        %3769 = vmatprep.subr.bf16.mxu0 0
        %3770 = vmatpush1.bf16.msra.mxu0 0
        %3771 = vmatprep.subr.bf16.mxu0 0
        %3772 = vmatpush1.bf16.msra.mxu0 0
        %3773 = vmatprep.mubr.bf16.mxu0 0
        %3774 = vmatmul.mubr.bf16.gmra.mrb[0].mxu0 %v3736
        %v3775 = vpop.f32.mrb[0].mxu0
        %v3776 = vadd.f32 %v3733, %v3775
        %v3777 = vpop.f32.mrb[0].mxu0
        %v3778 = vpop.f32.mrb[0].mxu0
        %v3779 = vadd.f32 %v3733, %v3778
        %v3780 = vpop.f32.mrb[0].mxu0
        %3781 = vmatprep.mubr.bf16.mxu0 0
        %3782 = vmatmul.mubr.bf16.gmra.mrb[0].mxu0 %v3739
        %v3783 = vpop.f32.mrb[0].mxu0
        %v3784 = vadd.f32 %v3733, %v3783
        %v3785 = vpop.f32.mrb[0].mxu0
        %v3786 = vpop.f32.mrb[0].mxu0
        %v3787 = vadd.f32 %v3733, %v3786
        %v3788 = vpop.f32.mrb[0].mxu0
        %3789 = vdwg.mxu0
        %3790 = vst [vmem:[%s343] sm:$0xff] %v3776
        %3791 = vst [vmem:[%s343 + $0x8] sm:$0xff] %v3779
        %3792 = vst [vmem:[%s343 + $0x10] sm:$0xff] %v3784
        %3793 = vst [vmem:[%s343 + $0x18] sm:$0xff] %v3787
        %s3794 = sand.u32 %s231, 1
        %s3795 = scalar_lea.sflag [#allocation6], %s3794
        %s3796 = sand.u32 %s231, 1
        %s3797 = smul.addr %s3796, 32
        %s3798 = scalar_lea.vmem [#allocation5], %s3797
        // Predicated region
        $region91: #{tpu_custom_call.1} parent=55 // pred_check
          %p3799 = pneg %p241
        $region92: #{tpu_custom_call.1} parent=55 // pred_check_branch
          %3801 = sbr.rel (%p3799) target = $region94
        $region93: #{tpu_custom_call.1} parent=55 // pred_region
          %s3802 = smul.u32 4, %s24
          %s3804 = ssub.s32 512, 512
          %3805 = vsyncadd %s3795, %s3804
          %s3806 = smul.addr %s3802, 128
          %s3807 = scalar_lea.hbm %s10, %s3806
          %s3808 = sshll.u32 %s3798, 4
          %s3809 = int_to_ptr.vmem [resolvable:$true] %s3808
          %3814 = dma.vmem_to_hbm [thread:$0]  %s3809, 512, %s3807, %s3795, 128, 128, 8
        $region94: #{tpu_custom_call.1} parent=55 // pred_fallthru
          _
      $region56: #{tpu_custom_call.1} parent=5 // pred_fallthru
        _
      %p3815 = scmp.le.s32.totalorder 2, %s19
      // Predicated region
      $region95: #{tpu_custom_call.1} parent=5 // pred_check
        %p3816 = pneg %p3815
      $region96: #{tpu_custom_call.1} parent=5 // pred_check_branch
        %3818 = sbr.rel (%p3816) target = $region98
      $region97: #{tpu_custom_call.1} parent=5 // pred_region
        %s3819 = ssub.s32 %s19, 2
        // Predicated region
        $region99: #{tpu_custom_call.1} parent=97 // pred_check
          %p3820 = pneg %p247
        $region100: #{tpu_custom_call.1} parent=97 // pred_check_branch
          %3822 = sbr.rel (%p3820) target = $region102
        $region101: #{tpu_custom_call.1} parent=97 // pred_region
          %s3823 = sand.u32 %s232, 1
          %s3824 = scalar_lea.sflag [#allocation6], %s3823
          %s3825 = sand.u32 %s232, 1
          %s3826 = smul.addr %s3825, 32
          %s3827 = scalar_lea.vmem [#allocation5], %s3826
          %3828 = dma.done %s3824, 512
        $region102: #{tpu_custom_call.1} parent=97 // pred_fallthru
          _
      $region98: #{tpu_custom_call.1} parent=5 // pred_fallthru
        _
    $region6: #{tpu_custom_call.1} parent=1 // loop_footer
      %s23 = sadd.s32 1, %s19
    $region7: #{tpu_custom_call.1} parent=1 // loop_footer_branch
      %18 = sbr.rel target = $region3
    $region8: #{tpu_custom_call.1} parent=1 // loop_exit
      _
    %3829 = vsyncpa [#allocation6], 1
    %s3830 = scalar_lea.sflag [#allocation6], 1
    %3831 = vsyncpa %s3830, 1
  %3832 = vsyncmov [#allocation3]
  %s3833 = vpop.sfrf %3832
  %p3834 = scmp.eq.s32.totalorder %s3833, 0
  %p3835 = pneg %p3834
  %3837 = shalt.err (%p3835)

</llo_original>
